<compile_context>
chip_gen: v7x
topology: tpu7x:2x2x1
jax: 0.10.0
libtpu: 0.0.40
codegen_flags: <defaults>
</compile_context>

<pallas_src>
import jax
import jax.numpy as jnp
from jax import lax
from jax.experimental import pallas as pl
from jax.experimental.pallas import tpu as pltpu

_JACOBI_SWEEPS = 5        # cyclic Jacobi: quadratic convergence, 5 sweeps >= f32 eps for 3x3
_SLAB = 8                 # sublanes per inner-loop iteration (one (8,128) vreg tile)
_MAX_BLOCK_SUB = 64       # sublanes per grid step (amortizes per-step overhead)

# Upper-triangle packing of a row-major 3x3: entries (i,j) with i <= j.
_IDX6 = ((0, 0), (0, 1), (0, 2), (1, 1), (1, 2), (2, 2))
_UP_FLAT = (0, 1, 2, 4, 5, 8)
_LO_FLAT = (0, 3, 6, 4, 7, 8)


def _key(i, j):
    return (i, j) if i <= j else (j, i)


# ----------------------------- in-kernel math -----------------------------

def _rotate(A, V, p, q):
    """One Jacobi rotation (p,q) on a batched symmetric 3x3 held as a dict of
    (8,128) f32 tiles (upper triangle), accumulating eigenvectors in V."""
    r = 3 - p - q
    app, aqq, apq = A[(p, p)], A[(q, q)], A[_key(p, q)]
    apr, aqr = A[_key(p, r)], A[_key(q, r)]

    delta = aqq - app
    b = 2.0 * apq
    sign_d = jnp.where(delta >= 0.0, 1.0, -1.0)
    # t = sign(delta) * 2*apq / (|delta| + sqrt(delta^2 + 4*apq^2))
    # The +1e-30 makes the 0/0 case (identity padding) give exactly t = 0.
    denom = jnp.abs(delta) + jnp.sqrt(delta * delta + b * b) + 1e-30
    rcp = pl.reciprocal(denom, approx=True)      # EUP slot
    rcp = rcp * (2.0 - denom * rcp)              # one Newton step -> full f32 accuracy
    t = (b * sign_d) * rcp
    c = lax.rsqrt(1.0 + t * t)                   # EUP slot
    s = t * c

    A[(p, p)] = app - t * apq
    A[(q, q)] = aqq + t * apq
    A[_key(p, q)] = jnp.zeros_like(apq)
    A[_key(p, r)] = c * apr - s * aqr
    A[_key(q, r)] = s * apr + c * aqr

    for i in range(3):
        vip, viq = V[i][p], V[i][q]
        V[i][p] = c * vip - s * viq
        V[i][q] = s * vip + c * viq
    return A, V


def _logm_from_eig(A, V):
    """Reconstruct logm = V diag(log lam) V^T as an upper-triangle dict."""
    lam = (A[(0, 0)], A[(1, 1)], A[(2, 2)])
    # Relative floor: f32 Jacobi can't resolve eigenvalues below ~1e-7*||A||;
    # flooring there avoids log(<=0) blowups for near-singular SPD inputs.
    tr = lam[0] + lam[1] + lam[2]
    floor = 1e-7 * jnp.abs(tr) + 1e-37
    loglam = [jnp.log(jnp.maximum(l, floor)) for l in lam]
    W = [[V[i][k] * loglam[k] for k in range(3)] for i in range(3)]
    return {(i, j): W[i][0] * V[j][0] + W[i][1] * V[j][1] + W[i][2] * V[j][2]
            for (i, j) in _IDX6}


def _logm_pair(A1, A2):
    """Interleave the Jacobi sweeps of the two independent matrices so the LLO
    scheduler can fill the 4 VALU + 1 EUP slots and hide sqrt/rsqrt/recip latency."""
    shape = A1[(0, 0)].shape
    one = jnp.ones(shape, jnp.float32)
    zero = jnp.zeros(shape, jnp.float32)
    V1 = [[one if i == j else zero for j in range(3)] for i in range(3)]
    V2 = [[one if i == j else zero for j in range(3)] for i in range(3)]
    for _ in range(_JACOBI_SWEEPS):
        for (p, q) in ((0, 1), (0, 2), (1, 2)):
            A1, V1 = _rotate(A1, V1, p, q)
            A2, V2 = _rotate(A2, V2, p, q)
    return _logm_from_eig(A1, V1), _logm_from_eig(A2, V2)


def _le_sqdist_kernel(d1_ref, d2_ref, o_ref):
    """d1_ref/d2_ref: (6, BS, 128) upper-triangle-packed tiles; o_ref: (BS, 128)."""
    n_slabs = d1_ref.shape[1] // _SLAB

    @pl.loop(0, n_slabs)
    def _(slab):
        off = pl.multiple_of(slab * _SLAB, _SLAB)
        sl = pl.ds(off, _SLAB)

        def load6(ref):
            return {ij: ref[k, sl, :] for k, ij in enumerate(_IDX6)}

        L1, L2 = _logm_pair(load6(d1_ref), load6(d2_ref))

        sq = jnp.zeros((_SLAB, 128), jnp.float32)
        for (i, j) in _IDX6:
            d = L1[(i, j)] - L2[(i, j)]
            if i == j:
                sq = sq + d * d
            else:
                sq = sq + 2.0 * (d * d)
        o_ref[sl, :] = sq


# ------------------------------- wrapper ----------------------------------

def _round_up(x, m):
    return ((x + m - 1) // m) * m


def le_mse(D1, D2):
    """mean_i || logm(D1_i) - logm(D2_i) ||_F^2  for batches of 3x3 SPD matrices."""
    D1 = jnp.asarray(D1)
    D2 = jnp.asarray(D2)
    assert D1.shape == D2.shape and D1.shape[-2:] == (3, 3)
    N = 1
    for s in D1.shape[:-2]:
        N *= s

    # Lane-dense packing: pair index -> (sublane, lane); sublanes grouped into blocks.
    S0 = _round_up(max(-(-N // 128), 1), _SLAB)
    # Block as large as possible (amortize per-grid-step overhead) while keeping
    # grid >= 2 so ("parallel",) shards across both v7x TensorCores.
    bs = min(_MAX_BLOCK_SUB, max(_SLAB, _round_up(-(-S0 // 2), _SLAB)))
    S = _round_up(S0, bs)
    if S // bs < 2:
        S = 2 * bs
    grid = (S // bs,)
    n_pad = S * 128
    # VMEM: 2 inputs x 2 buffers x 6*bs*128*4 B <= ~0.8 MiB at bs=64 — well under
    # the 32 MiB default scoped limit on every generation including v7x.

    eye6 = jnp.array([1.0, 0.0, 0.0, 1.0, 0.0, 1.0], jnp.float32)
    up_idx = jnp.array(_UP_FLAT)
    lo_idx = jnp.array(_LO_FLAT)

    def prep(D):
        flat9 = D.reshape(N, 9).astype(jnp.float32)
        # Symmetrize + keep only the 6 unique entries (cuts DMA/VMEM by a third
        # and removes the in-kernel symmetrization adds).
        flat = 0.5 * (flat9[:, up_idx] + flat9[:, lo_idx])
        if n_pad > N:
            pad = jnp.broadcast_to(eye6[None, :], (n_pad - N, 6))
            flat = jnp.concatenate([flat, pad], axis=0)
        # (n_pad, 6) -> (6, S, 128): entry-major, batch packed sublane x lane.
        return flat.T.reshape(6, S, 128)

    in_spec = pl.BlockSpec((6, bs, 128), lambda i: (0, i, 0))
    out_spec = pl.BlockSpec((bs, 128), lambda i: (i, 0))

    sq = pl.pallas_call(
        _le_sqdist_kernel,
        grid=grid,
        in_specs=[in_spec, in_spec],
        out_specs=out_spec,
        out_shape=jax.ShapeDtypeStruct((S, 128), jnp.float32),
        compiler_params=pltpu.CompilerParams(dimension_semantics=("parallel",)),
    )(prep(D1), prep(D2))

    # Padding pairs are (I, I) -> exactly 0, so a plain sum / true N is exact.
    return jnp.sum(sq) / jnp.float32(N)


# --------------------------- pure-JAX reference ----------------------------

def le_mse_ref(D1, D2):
    def logm(a):
        w, v = jnp.linalg.eigh(a)
        return jnp.einsum("...ik,...k,...jk->...ij", v, jnp.log(w), v)
    diff = logm(D1) - logm(D2)
    return jnp.mean(jnp.sum(diff * diff, axis=(-2, -1)))


# --------------------------------- main ------------------------------------

if __name__ == "__main__":
    key = jax.random.PRNGKey(0)
    k1, k2 = jax.random.split(key)
    N = 512  # batch of SPD 3x3 matrix pairs

    def make_spd(k):
        m = jax.random.normal(k, (N, 3, 3), jnp.float32)
        return jnp.einsum("nij,nkj->nik", m, m) / 3.0 + 0.5 * jnp.eye(3, dtype=jnp.float32)

    D1 = make_spd(k1)
    D2 = make_spd(k2)

    loss = jax.jit(le_mse)(D1, D2)
    jax.block_until_ready(loss)

    ref = jax.jit(le_mse_ref)(D1, D2)
    jax.block_until_ready(ref)

    rel = abs(float(loss) - float(ref)) / max(abs(float(ref)), 1e-6)
    assert loss.shape == ()
    assert bool(jnp.isfinite(loss)), "non-finite loss"
    assert rel < 1e-2, f"mismatch vs eigh reference: {float(loss)} vs {float(ref)} (rel {rel})"

    # TODO(synk): the original module's .detach().cpu().numpy() round-trip and the
    # requires_grad=True re-wrap are host-side artifacts (no gradient actually flows
    # to D1/D2 in the original); no custom VJP is provided for this kernel.
    print("KERNEL_OK")
</pallas_src>

<mosaic_0001>
module attributes {stable_mosaic.version = 11 : i64} {
  func.func @_le_sqdist_kernel(%arg0: i32, %arg1: memref<6x8x128xf32, #tpu.memory_space<vmem>>, %arg2: memref<6x8x128xf32, #tpu.memory_space<vmem>>, %arg3: memref<8x128xf32, #tpu.memory_space<vmem>>) attributes {dimension_semantics = [#tpu.dimension_semantics<parallel>], iteration_bounds = array<i64: 2>, scalar_prefetch = 0 : i64, scratch_operands = 0 : i64, tpu.core_type = #tpu.core_type<tc>, window_params = [{transform_indices = @transform_0, window_bounds = array<i64: 6, 8, 128>}, {transform_indices = @transform_1, window_bounds = array<i64: 6, 8, 128>}, {transform_indices = @transform_2, window_bounds = array<i64: 8, 128>}]} {
    %c0_i32 = arith.constant 0 : i32
    %c1_i32 = arith.constant 1 : i32
    %0 = arith.muli %c0_i32, %c1_i32 : i32
    %c0_i32_0 = arith.constant 0 : i32
    %1 = arith.addi %c0_i32_0, %0 : i32
    %c8_i32 = arith.constant 8 : i32
    %2 = arith.muli %1, %c8_i32 : i32
    %3 = tpu.assume_multiple %2, 8 : i32
    %c0 = arith.constant 0 : index
    %4 = arith.index_cast %3 : i32 to index
    %c0_1 = arith.constant 0 : index
    %5 = vector.load %arg1[%c0, %4, %c0_1] : memref<6x8x128xf32, #tpu.memory_space<vmem>>, vector<1x8x128xf32>
    %6 = vector.shape_cast %5 : vector<1x8x128xf32> to vector<8x128xf32>
    %c1 = arith.constant 1 : index
    %7 = arith.index_cast %3 : i32 to index
    %c0_2 = arith.constant 0 : index
    %8 = vector.load %arg1[%c1, %7, %c0_2] : memref<6x8x128xf32, #tpu.memory_space<vmem>>, vector<1x8x128xf32>
    %9 = vector.shape_cast %8 : vector<1x8x128xf32> to vector<8x128xf32>
    %c2 = arith.constant 2 : index
    %10 = arith.index_cast %3 : i32 to index
    %c0_3 = arith.constant 0 : index
    %11 = vector.load %arg1[%c2, %10, %c0_3] : memref<6x8x128xf32, #tpu.memory_space<vmem>>, vector<1x8x128xf32>
    %12 = vector.shape_cast %11 : vector<1x8x128xf32> to vector<8x128xf32>
    %c3 = arith.constant 3 : index
    %13 = arith.index_cast %3 : i32 to index
    %c0_4 = arith.constant 0 : index
    %14 = vector.load %arg1[%c3, %13, %c0_4] : memref<6x8x128xf32, #tpu.memory_space<vmem>>, vector<1x8x128xf32>
    %15 = vector.shape_cast %14 : vector<1x8x128xf32> to vector<8x128xf32>
    %c4 = arith.constant 4 : index
    %16 = arith.index_cast %3 : i32 to index
    %c0_5 = arith.constant 0 : index
    %17 = vector.load %arg1[%c4, %16, %c0_5] : memref<6x8x128xf32, #tpu.memory_space<vmem>>, vector<1x8x128xf32>
    %18 = vector.shape_cast %17 : vector<1x8x128xf32> to vector<8x128xf32>
    %c5 = arith.constant 5 : index
    %19 = arith.index_cast %3 : i32 to index
    %c0_6 = arith.constant 0 : index
    %20 = vector.load %arg1[%c5, %19, %c0_6] : memref<6x8x128xf32, #tpu.memory_space<vmem>>, vector<1x8x128xf32>
    %21 = vector.shape_cast %20 : vector<1x8x128xf32> to vector<8x128xf32>
    %c0_7 = arith.constant 0 : index
    %22 = arith.index_cast %3 : i32 to index
    %c0_8 = arith.constant 0 : index
    %23 = vector.load %arg2[%c0_7, %22, %c0_8] : memref<6x8x128xf32, #tpu.memory_space<vmem>>, vector<1x8x128xf32>
    %24 = vector.shape_cast %23 : vector<1x8x128xf32> to vector<8x128xf32>
    %c1_9 = arith.constant 1 : index
    %25 = arith.index_cast %3 : i32 to index
    %c0_10 = arith.constant 0 : index
    %26 = vector.load %arg2[%c1_9, %25, %c0_10] : memref<6x8x128xf32, #tpu.memory_space<vmem>>, vector<1x8x128xf32>
    %27 = vector.shape_cast %26 : vector<1x8x128xf32> to vector<8x128xf32>
    %c2_11 = arith.constant 2 : index
    %28 = arith.index_cast %3 : i32 to index
    %c0_12 = arith.constant 0 : index
    %29 = vector.load %arg2[%c2_11, %28, %c0_12] : memref<6x8x128xf32, #tpu.memory_space<vmem>>, vector<1x8x128xf32>
    %30 = vector.shape_cast %29 : vector<1x8x128xf32> to vector<8x128xf32>
    %c3_13 = arith.constant 3 : index
    %31 = arith.index_cast %3 : i32 to index
    %c0_14 = arith.constant 0 : index
    %32 = vector.load %arg2[%c3_13, %31, %c0_14] : memref<6x8x128xf32, #tpu.memory_space<vmem>>, vector<1x8x128xf32>
    %33 = vector.shape_cast %32 : vector<1x8x128xf32> to vector<8x128xf32>
    %c4_15 = arith.constant 4 : index
    %34 = arith.index_cast %3 : i32 to index
    %c0_16 = arith.constant 0 : index
    %35 = vector.load %arg2[%c4_15, %34, %c0_16] : memref<6x8x128xf32, #tpu.memory_space<vmem>>, vector<1x8x128xf32>
    %36 = vector.shape_cast %35 : vector<1x8x128xf32> to vector<8x128xf32>
    %c5_17 = arith.constant 5 : index
    %37 = arith.index_cast %3 : i32 to index
    %c0_18 = arith.constant 0 : index
    %38 = vector.load %arg2[%c5_17, %37, %c0_18] : memref<6x8x128xf32, #tpu.memory_space<vmem>>, vector<1x8x128xf32>
    %39 = vector.shape_cast %38 : vector<1x8x128xf32> to vector<8x128xf32>
    %cst = arith.constant 1.000000e+00 : f32
    %40 = vector.broadcast %cst : f32 to vector<8x128xf32>
    %cst_19 = arith.constant 0.000000e+00 : f32
    %41 = vector.broadcast %cst_19 : f32 to vector<8x128xf32>
    %42 = arith.subf %15, %6 : vector<8x128xf32>
    %cst_20 = arith.constant 2.000000e+00 : f32
    %43 = vector.broadcast %cst_20 : f32 to vector<8x128xf32>
    %44 = arith.mulf %43, %9 : vector<8x128xf32>
    %cst_21 = arith.constant 0.000000e+00 : f32
    %45 = vector.broadcast %cst_21 : f32 to vector<8x128xf32>
    %46 = arith.cmpf oge, %42, %45 : vector<8x128xf32>
    %cst_22 = arith.constant 1.000000e+00 : f32
    %cst_23 = arith.constant -1.000000e+00 : f32
    %47 = vector.broadcast %cst_22 : f32 to vector<8x128xf32>
    %48 = vector.broadcast %cst_23 : f32 to vector<8x128xf32>
    %49 = arith.select %46, %47, %48 : vector<8x128xi1>, vector<8x128xf32>
    %50 = math.absf %42 : vector<8x128xf32>
    %51 = arith.mulf %42, %42 : vector<8x128xf32>
    %52 = arith.mulf %44, %44 : vector<8x128xf32>
    %53 = arith.addf %51, %52 : vector<8x128xf32>
    %54 = math.sqrt %53 : vector<8x128xf32>
    %55 = arith.addf %50, %54 : vector<8x128xf32>
    %cst_24 = arith.constant 1.000000e-30 : f32
    %56 = vector.broadcast %cst_24 : f32 to vector<8x128xf32>
    %57 = arith.addf %55, %56 : vector<8x128xf32>
    %58 = tpu.reciprocal %57 {approx = true} : vector<8x128xf32> -> vector<8x128xf32>
    %59 = arith.mulf %57, %58 : vector<8x128xf32>
    %cst_25 = arith.constant 2.000000e+00 : f32
    %60 = vector.broadcast %cst_25 : f32 to vector<8x128xf32>
    %61 = arith.subf %60, %59 : vector<8x128xf32>
    %62 = arith.mulf %58, %61 : vector<8x128xf32>
    %63 = arith.mulf %44, %49 : vector<8x128xf32>
    %64 = arith.mulf %63, %62 : vector<8x128xf32>
    %65 = arith.mulf %64, %64 : vector<8x128xf32>
    %cst_26 = arith.constant 1.000000e+00 : f32
    %66 = vector.broadcast %cst_26 : f32 to vector<8x128xf32>
    %67 = arith.addf %66, %65 : vector<8x128xf32>
    %68 = math.rsqrt %67 : vector<8x128xf32>
    %69 = arith.mulf %64, %68 : vector<8x128xf32>
    %70 = arith.mulf %64, %9 : vector<8x128xf32>
    %71 = arith.subf %6, %70 : vector<8x128xf32>
    %72 = arith.mulf %64, %9 : vector<8x128xf32>
    %73 = arith.addf %15, %72 : vector<8x128xf32>
    %cst_27 = arith.constant 0.000000e+00 : f32
    %74 = vector.broadcast %cst_27 : f32 to vector<8x128xf32>
    %75 = arith.mulf %68, %12 : vector<8x128xf32>
    %76 = arith.mulf %69, %18 : vector<8x128xf32>
    %77 = arith.subf %75, %76 : vector<8x128xf32>
    %78 = arith.mulf %69, %12 : vector<8x128xf32>
    %79 = arith.mulf %68, %18 : vector<8x128xf32>
    %80 = arith.addf %78, %79 : vector<8x128xf32>
    %81 = arith.mulf %68, %40 : vector<8x128xf32>
    %82 = arith.mulf %69, %41 : vector<8x128xf32>
    %83 = arith.subf %81, %82 : vector<8x128xf32>
    %84 = arith.mulf %69, %40 : vector<8x128xf32>
    %85 = arith.mulf %68, %41 : vector<8x128xf32>
    %86 = arith.addf %84, %85 : vector<8x128xf32>
    %87 = arith.mulf %68, %41 : vector<8x128xf32>
    %88 = arith.mulf %69, %40 : vector<8x128xf32>
    %89 = arith.subf %87, %88 : vector<8x128xf32>
    %90 = arith.mulf %69, %41 : vector<8x128xf32>
    %91 = arith.mulf %68, %40 : vector<8x128xf32>
    %92 = arith.addf %90, %91 : vector<8x128xf32>
    %93 = arith.mulf %68, %41 : vector<8x128xf32>
    %94 = arith.mulf %69, %41 : vector<8x128xf32>
    %95 = arith.subf %93, %94 : vector<8x128xf32>
    %96 = arith.mulf %69, %41 : vector<8x128xf32>
    %97 = arith.mulf %68, %41 : vector<8x128xf32>
    %98 = arith.addf %96, %97 : vector<8x128xf32>
    %99 = arith.subf %33, %24 : vector<8x128xf32>
    %cst_28 = arith.constant 2.000000e+00 : f32
    %100 = vector.broadcast %cst_28 : f32 to vector<8x128xf32>
    %101 = arith.mulf %100, %27 : vector<8x128xf32>
    %cst_29 = arith.constant 0.000000e+00 : f32
    %102 = vector.broadcast %cst_29 : f32 to vector<8x128xf32>
    %103 = arith.cmpf oge, %99, %102 : vector<8x128xf32>
    %cst_30 = arith.constant 1.000000e+00 : f32
    %cst_31 = arith.constant -1.000000e+00 : f32
    %104 = vector.broadcast %cst_30 : f32 to vector<8x128xf32>
    %105 = vector.broadcast %cst_31 : f32 to vector<8x128xf32>
    %106 = arith.select %103, %104, %105 : vector<8x128xi1>, vector<8x128xf32>
    %107 = math.absf %99 : vector<8x128xf32>
    %108 = arith.mulf %99, %99 : vector<8x128xf32>
    %109 = arith.mulf %101, %101 : vector<8x128xf32>
    %110 = arith.addf %108, %109 : vector<8x128xf32>
    %111 = math.sqrt %110 : vector<8x128xf32>
    %112 = arith.addf %107, %111 : vector<8x128xf32>
    %cst_32 = arith.constant 1.000000e-30 : f32
    %113 = vector.broadcast %cst_32 : f32 to vector<8x128xf32>
    %114 = arith.addf %112, %113 : vector<8x128xf32>
    %115 = tpu.reciprocal %114 {approx = true} : vector<8x128xf32> -> vector<8x128xf32>
    %116 = arith.mulf %114, %115 : vector<8x128xf32>
    %cst_33 = arith.constant 2.000000e+00 : f32
    %117 = vector.broadcast %cst_33 : f32 to vector<8x128xf32>
    %118 = arith.subf %117, %116 : vector<8x128xf32>
    %119 = arith.mulf %115, %118 : vector<8x128xf32>
    %120 = arith.mulf %101, %106 : vector<8x128xf32>
    %121 = arith.mulf %120, %119 : vector<8x128xf32>
    %122 = arith.mulf %121, %121 : vector<8x128xf32>
    %cst_34 = arith.constant 1.000000e+00 : f32
    %123 = vector.broadcast %cst_34 : f32 to vector<8x128xf32>
    %124 = arith.addf %123, %122 : vector<8x128xf32>
    %125 = math.rsqrt %124 : vector<8x128xf32>
    %126 = arith.mulf %121, %125 : vector<8x128xf32>
    %127 = arith.mulf %121, %27 : vector<8x128xf32>
    %128 = arith.subf %24, %127 : vector<8x128xf32>
    %129 = arith.mulf %121, %27 : vector<8x128xf32>
    %130 = arith.addf %33, %129 : vector<8x128xf32>
    %cst_35 = arith.constant 0.000000e+00 : f32
    %131 = vector.broadcast %cst_35 : f32 to vector<8x128xf32>
    %132 = arith.mulf %125, %30 : vector<8x128xf32>
    %133 = arith.mulf %126, %36 : vector<8x128xf32>
    %134 = arith.subf %132, %133 : vector<8x128xf32>
    %135 = arith.mulf %126, %30 : vector<8x128xf32>
    %136 = arith.mulf %125, %36 : vector<8x128xf32>
    %137 = arith.addf %135, %136 : vector<8x128xf32>
    %138 = arith.mulf %125, %40 : vector<8x128xf32>
    %139 = arith.mulf %126, %41 : vector<8x128xf32>
    %140 = arith.subf %138, %139 : vector<8x128xf32>
    %141 = arith.mulf %126, %40 : vector<8x128xf32>
    %142 = arith.mulf %125, %41 : vector<8x128xf32>
    %143 = arith.addf %141, %142 : vector<8x128xf32>
    %144 = arith.mulf %125, %41 : vector<8x128xf32>
    %145 = arith.mulf %126, %40 : vector<8x128xf32>
    %146 = arith.subf %144, %145 : vector<8x128xf32>
    %147 = arith.mulf %126, %41 : vector<8x128xf32>
    %148 = arith.mulf %125, %40 : vector<8x128xf32>
    %149 = arith.addf %147, %148 : vector<8x128xf32>
    %150 = arith.mulf %125, %41 : vector<8x128xf32>
    %151 = arith.mulf %126, %41 : vector<8x128xf32>
    %152 = arith.subf %150, %151 : vector<8x128xf32>
    %153 = arith.mulf %126, %41 : vector<8x128xf32>
    %154 = arith.mulf %125, %41 : vector<8x128xf32>
    %155 = arith.addf %153, %154 : vector<8x128xf32>
    %156 = arith.subf %21, %71 : vector<8x128xf32>
    %cst_36 = arith.constant 2.000000e+00 : f32
    %157 = vector.broadcast %cst_36 : f32 to vector<8x128xf32>
    %158 = arith.mulf %157, %77 : vector<8x128xf32>
    %cst_37 = arith.constant 0.000000e+00 : f32
    %159 = vector.broadcast %cst_37 : f32 to vector<8x128xf32>
    %160 = arith.cmpf oge, %156, %159 : vector<8x128xf32>
    %cst_38 = arith.constant 1.000000e+00 : f32
    %cst_39 = arith.constant -1.000000e+00 : f32
    %161 = vector.broadcast %cst_38 : f32 to vector<8x128xf32>
    %162 = vector.broadcast %cst_39 : f32 to vector<8x128xf32>
    %163 = arith.select %160, %161, %162 : vector<8x128xi1>, vector<8x128xf32>
    %164 = math.absf %156 : vector<8x128xf32>
    %165 = arith.mulf %156, %156 : vector<8x128xf32>
    %166 = arith.mulf %158, %158 : vector<8x128xf32>
    %167 = arith.addf %165, %166 : vector<8x128xf32>
    %168 = math.sqrt %167 : vector<8x128xf32>
    %169 = arith.addf %164, %168 : vector<8x128xf32>
    %cst_40 = arith.constant 1.000000e-30 : f32
    %170 = vector.broadcast %cst_40 : f32 to vector<8x128xf32>
    %171 = arith.addf %169, %170 : vector<8x128xf32>
    %172 = tpu.reciprocal %171 {approx = true} : vector<8x128xf32> -> vector<8x128xf32>
    %173 = arith.mulf %171, %172 : vector<8x128xf32>
    %cst_41 = arith.constant 2.000000e+00 : f32
    %174 = vector.broadcast %cst_41 : f32 to vector<8x128xf32>
    %175 = arith.subf %174, %173 : vector<8x128xf32>
    %176 = arith.mulf %172, %175 : vector<8x128xf32>
    %177 = arith.mulf %158, %163 : vector<8x128xf32>
    %178 = arith.mulf %177, %176 : vector<8x128xf32>
    %179 = arith.mulf %178, %178 : vector<8x128xf32>
    %cst_42 = arith.constant 1.000000e+00 : f32
    %180 = vector.broadcast %cst_42 : f32 to vector<8x128xf32>
    %181 = arith.addf %180, %179 : vector<8x128xf32>
    %182 = math.rsqrt %181 : vector<8x128xf32>
    %183 = arith.mulf %178, %182 : vector<8x128xf32>
    %184 = arith.mulf %178, %77 : vector<8x128xf32>
    %185 = arith.subf %71, %184 : vector<8x128xf32>
    %186 = arith.mulf %178, %77 : vector<8x128xf32>
    %187 = arith.addf %21, %186 : vector<8x128xf32>
    %cst_43 = arith.constant 0.000000e+00 : f32
    %188 = vector.broadcast %cst_43 : f32 to vector<8x128xf32>
    %189 = arith.mulf %182, %74 : vector<8x128xf32>
    %190 = arith.mulf %183, %80 : vector<8x128xf32>
    %191 = arith.subf %189, %190 : vector<8x128xf32>
    %192 = arith.mulf %183, %74 : vector<8x128xf32>
    %193 = arith.mulf %182, %80 : vector<8x128xf32>
    %194 = arith.addf %192, %193 : vector<8x128xf32>
    %195 = arith.mulf %182, %83 : vector<8x128xf32>
    %196 = arith.mulf %183, %41 : vector<8x128xf32>
    %197 = arith.subf %195, %196 : vector<8x128xf32>
    %198 = arith.mulf %183, %83 : vector<8x128xf32>
    %199 = arith.mulf %182, %41 : vector<8x128xf32>
    %200 = arith.addf %198, %199 : vector<8x128xf32>
    %201 = arith.mulf %182, %89 : vector<8x128xf32>
    %202 = arith.mulf %183, %41 : vector<8x128xf32>
    %203 = arith.subf %201, %202 : vector<8x128xf32>
    %204 = arith.mulf %183, %89 : vector<8x128xf32>
    %205 = arith.mulf %182, %41 : vector<8x128xf32>
    %206 = arith.addf %204, %205 : vector<8x128xf32>
    %207 = arith.mulf %182, %95 : vector<8x128xf32>
    %208 = arith.mulf %183, %40 : vector<8x128xf32>
    %209 = arith.subf %207, %208 : vector<8x128xf32>
    %210 = arith.mulf %183, %95 : vector<8x128xf32>
    %211 = arith.mulf %182, %40 : vector<8x128xf32>
    %212 = arith.addf %210, %211 : vector<8x128xf32>
    %213 = arith.subf %39, %128 : vector<8x128xf32>
    %cst_44 = arith.constant 2.000000e+00 : f32
    %214 = vector.broadcast %cst_44 : f32 to vector<8x128xf32>
    %215 = arith.mulf %214, %134 : vector<8x128xf32>
    %cst_45 = arith.constant 0.000000e+00 : f32
    %216 = vector.broadcast %cst_45 : f32 to vector<8x128xf32>
    %217 = arith.cmpf oge, %213, %216 : vector<8x128xf32>
    %cst_46 = arith.constant 1.000000e+00 : f32
    %cst_47 = arith.constant -1.000000e+00 : f32
    %218 = vector.broadcast %cst_46 : f32 to vector<8x128xf32>
    %219 = vector.broadcast %cst_47 : f32 to vector<8x128xf32>
    %220 = arith.select %217, %218, %219 : vector<8x128xi1>, vector<8x128xf32>
    %221 = math.absf %213 : vector<8x128xf32>
    %222 = arith.mulf %213, %213 : vector<8x128xf32>
    %223 = arith.mulf %215, %215 : vector<8x128xf32>
    %224 = arith.addf %222, %223 : vector<8x128xf32>
    %225 = math.sqrt %224 : vector<8x128xf32>
    %226 = arith.addf %221, %225 : vector<8x128xf32>
    %cst_48 = arith.constant 1.000000e-30 : f32
    %227 = vector.broadcast %cst_48 : f32 to vector<8x128xf32>
    %228 = arith.addf %226, %227 : vector<8x128xf32>
    %229 = tpu.reciprocal %228 {approx = true} : vector<8x128xf32> -> vector<8x128xf32>
    %230 = arith.mulf %228, %229 : vector<8x128xf32>
    %cst_49 = arith.constant 2.000000e+00 : f32
    %231 = vector.broadcast %cst_49 : f32 to vector<8x128xf32>
    %232 = arith.subf %231, %230 : vector<8x128xf32>
    %233 = arith.mulf %229, %232 : vector<8x128xf32>
    %234 = arith.mulf %215, %220 : vector<8x128xf32>
    %235 = arith.mulf %234, %233 : vector<8x128xf32>
    %236 = arith.mulf %235, %235 : vector<8x128xf32>
    %cst_50 = arith.constant 1.000000e+00 : f32
    %237 = vector.broadcast %cst_50 : f32 to vector<8x128xf32>
    %238 = arith.addf %237, %236 : vector<8x128xf32>
    %239 = math.rsqrt %238 : vector<8x128xf32>
    %240 = arith.mulf %235, %239 : vector<8x128xf32>
    %241 = arith.mulf %235, %134 : vector<8x128xf32>
    %242 = arith.subf %128, %241 : vector<8x128xf32>
    %243 = arith.mulf %235, %134 : vector<8x128xf32>
    %244 = arith.addf %39, %243 : vector<8x128xf32>
    %cst_51 = arith.constant 0.000000e+00 : f32
    %245 = vector.broadcast %cst_51 : f32 to vector<8x128xf32>
    %246 = arith.mulf %239, %131 : vector<8x128xf32>
    %247 = arith.mulf %240, %137 : vector<8x128xf32>
    %248 = arith.subf %246, %247 : vector<8x128xf32>
    %249 = arith.mulf %240, %131 : vector<8x128xf32>
    %250 = arith.mulf %239, %137 : vector<8x128xf32>
    %251 = arith.addf %249, %250 : vector<8x128xf32>
    %252 = arith.mulf %239, %140 : vector<8x128xf32>
    %253 = arith.mulf %240, %41 : vector<8x128xf32>
    %254 = arith.subf %252, %253 : vector<8x128xf32>
    %255 = arith.mulf %240, %140 : vector<8x128xf32>
    %256 = arith.mulf %239, %41 : vector<8x128xf32>
    %257 = arith.addf %255, %256 : vector<8x128xf32>
    %258 = arith.mulf %239, %146 : vector<8x128xf32>
    %259 = arith.mulf %240, %41 : vector<8x128xf32>
    %260 = arith.subf %258, %259 : vector<8x128xf32>
    %261 = arith.mulf %240, %146 : vector<8x128xf32>
    %262 = arith.mulf %239, %41 : vector<8x128xf32>
    %263 = arith.addf %261, %262 : vector<8x128xf32>
    %264 = arith.mulf %239, %152 : vector<8x128xf32>
    %265 = arith.mulf %240, %40 : vector<8x128xf32>
    %266 = arith.subf %264, %265 : vector<8x128xf32>
    %267 = arith.mulf %240, %152 : vector<8x128xf32>
    %268 = arith.mulf %239, %40 : vector<8x128xf32>
    %269 = arith.addf %267, %268 : vector<8x128xf32>
    %270 = arith.subf %187, %73 : vector<8x128xf32>
    %cst_52 = arith.constant 2.000000e+00 : f32
    %271 = vector.broadcast %cst_52 : f32 to vector<8x128xf32>
    %272 = arith.mulf %271, %194 : vector<8x128xf32>
    %cst_53 = arith.constant 0.000000e+00 : f32
    %273 = vector.broadcast %cst_53 : f32 to vector<8x128xf32>
    %274 = arith.cmpf oge, %270, %273 : vector<8x128xf32>
    %cst_54 = arith.constant 1.000000e+00 : f32
    %cst_55 = arith.constant -1.000000e+00 : f32
    %275 = vector.broadcast %cst_54 : f32 to vector<8x128xf32>
    %276 = vector.broadcast %cst_55 : f32 to vector<8x128xf32>
    %277 = arith.select %274, %275, %276 : vector<8x128xi1>, vector<8x128xf32>
    %278 = math.absf %270 : vector<8x128xf32>
    %279 = arith.mulf %270, %270 : vector<8x128xf32>
    %280 = arith.mulf %272, %272 : vector<8x128xf32>
    %281 = arith.addf %279, %280 : vector<8x128xf32>
    %282 = math.sqrt %281 : vector<8x128xf32>
    %283 = arith.addf %278, %282 : vector<8x128xf32>
    %cst_56 = arith.constant 1.000000e-30 : f32
    %284 = vector.broadcast %cst_56 : f32 to vector<8x128xf32>
    %285 = arith.addf %283, %284 : vector<8x128xf32>
    %286 = tpu.reciprocal %285 {approx = true} : vector<8x128xf32> -> vector<8x128xf32>
    %287 = arith.mulf %285, %286 : vector<8x128xf32>
    %cst_57 = arith.constant 2.000000e+00 : f32
    %288 = vector.broadcast %cst_57 : f32 to vector<8x128xf32>
    %289 = arith.subf %288, %287 : vector<8x128xf32>
    %290 = arith.mulf %286, %289 : vector<8x128xf32>
    %291 = arith.mulf %272, %277 : vector<8x128xf32>
    %292 = arith.mulf %291, %290 : vector<8x128xf32>
    %293 = arith.mulf %292, %292 : vector<8x128xf32>
    %cst_58 = arith.constant 1.000000e+00 : f32
    %294 = vector.broadcast %cst_58 : f32 to vector<8x128xf32>
    %295 = arith.addf %294, %293 : vector<8x128xf32>
    %296 = math.rsqrt %295 : vector<8x128xf32>
    %297 = arith.mulf %292, %296 : vector<8x128xf32>
    %298 = arith.mulf %292, %194 : vector<8x128xf32>
    %299 = arith.subf %73, %298 : vector<8x128xf32>
    %300 = arith.mulf %292, %194 : vector<8x128xf32>
    %301 = arith.addf %187, %300 : vector<8x128xf32>
    %cst_59 = arith.constant 0.000000e+00 : f32
    %302 = vector.broadcast %cst_59 : f32 to vector<8x128xf32>
    %303 = arith.mulf %296, %191 : vector<8x128xf32>
    %304 = arith.mulf %297, %188 : vector<8x128xf32>
    %305 = arith.subf %303, %304 : vector<8x128xf32>
    %306 = arith.mulf %297, %191 : vector<8x128xf32>
    %307 = arith.mulf %296, %188 : vector<8x128xf32>
    %308 = arith.addf %306, %307 : vector<8x128xf32>
    %309 = arith.mulf %296, %86 : vector<8x128xf32>
    %310 = arith.mulf %297, %200 : vector<8x128xf32>
    %311 = arith.subf %309, %310 : vector<8x128xf32>
    %312 = arith.mulf %297, %86 : vector<8x128xf32>
    %313 = arith.mulf %296, %200 : vector<8x128xf32>
    %314 = arith.addf %312, %313 : vector<8x128xf32>
    %315 = arith.mulf %296, %92 : vector<8x128xf32>
    %316 = arith.mulf %297, %206 : vector<8x128xf32>
    %317 = arith.subf %315, %316 : vector<8x128xf32>
    %318 = arith.mulf %297, %92 : vector<8x128xf32>
    %319 = arith.mulf %296, %206 : vector<8x128xf32>
    %320 = arith.addf %318, %319 : vector<8x128xf32>
    %321 = arith.mulf %296, %98 : vector<8x128xf32>
    %322 = arith.mulf %297, %212 : vector<8x128xf32>
    %323 = arith.subf %321, %322 : vector<8x128xf32>
    %324 = arith.mulf %297, %98 : vector<8x128xf32>
    %325 = arith.mulf %296, %212 : vector<8x128xf32>
    %326 = arith.addf %324, %325 : vector<8x128xf32>
    %327 = arith.subf %244, %130 : vector<8x128xf32>
    %cst_60 = arith.constant 2.000000e+00 : f32
    %328 = vector.broadcast %cst_60 : f32 to vector<8x128xf32>
    %329 = arith.mulf %328, %251 : vector<8x128xf32>
    %cst_61 = arith.constant 0.000000e+00 : f32
    %330 = vector.broadcast %cst_61 : f32 to vector<8x128xf32>
    %331 = arith.cmpf oge, %327, %330 : vector<8x128xf32>
    %cst_62 = arith.constant 1.000000e+00 : f32
    %cst_63 = arith.constant -1.000000e+00 : f32
    %332 = vector.broadcast %cst_62 : f32 to vector<8x128xf32>
    %333 = vector.broadcast %cst_63 : f32 to vector<8x128xf32>
    %334 = arith.select %331, %332, %333 : vector<8x128xi1>, vector<8x128xf32>
    %335 = math.absf %327 : vector<8x128xf32>
    %336 = arith.mulf %327, %327 : vector<8x128xf32>
    %337 = arith.mulf %329, %329 : vector<8x128xf32>
    %338 = arith.addf %336, %337 : vector<8x128xf32>
    %339 = math.sqrt %338 : vector<8x128xf32>
    %340 = arith.addf %335, %339 : vector<8x128xf32>
    %cst_64 = arith.constant 1.000000e-30 : f32
    %341 = vector.broadcast %cst_64 : f32 to vector<8x128xf32>
    %342 = arith.addf %340, %341 : vector<8x128xf32>
    %343 = tpu.reciprocal %342 {approx = true} : vector<8x128xf32> -> vector<8x128xf32>
    %344 = arith.mulf %342, %343 : vector<8x128xf32>
    %cst_65 = arith.constant 2.000000e+00 : f32
    %345 = vector.broadcast %cst_65 : f32 to vector<8x128xf32>
    %346 = arith.subf %345, %344 : vector<8x128xf32>
    %347 = arith.mulf %343, %346 : vector<8x128xf32>
    %348 = arith.mulf %329, %334 : vector<8x128xf32>
    %349 = arith.mulf %348, %347 : vector<8x128xf32>
    %350 = arith.mulf %349, %349 : vector<8x128xf32>
    %cst_66 = arith.constant 1.000000e+00 : f32
    %351 = vector.broadcast %cst_66 : f32 to vector<8x128xf32>
    %352 = arith.addf %351, %350 : vector<8x128xf32>
    %353 = math.rsqrt %352 : vector<8x128xf32>
    %354 = arith.mulf %349, %353 : vector<8x128xf32>
    %355 = arith.mulf %349, %251 : vector<8x128xf32>
    %356 = arith.subf %130, %355 : vector<8x128xf32>
    %357 = arith.mulf %349, %251 : vector<8x128xf32>
    %358 = arith.addf %244, %357 : vector<8x128xf32>
    %cst_67 = arith.constant 0.000000e+00 : f32
    %359 = vector.broadcast %cst_67 : f32 to vector<8x128xf32>
    %360 = arith.mulf %353, %248 : vector<8x128xf32>
    %361 = arith.mulf %354, %245 : vector<8x128xf32>
    %362 = arith.subf %360, %361 : vector<8x128xf32>
    %363 = arith.mulf %354, %248 : vector<8x128xf32>
    %364 = arith.mulf %353, %245 : vector<8x128xf32>
    %365 = arith.addf %363, %364 : vector<8x128xf32>
    %366 = arith.mulf %353, %143 : vector<8x128xf32>
    %367 = arith.mulf %354, %257 : vector<8x128xf32>
    %368 = arith.subf %366, %367 : vector<8x128xf32>
    %369 = arith.mulf %354, %143 : vector<8x128xf32>
    %370 = arith.mulf %353, %257 : vector<8x128xf32>
    %371 = arith.addf %369, %370 : vector<8x128xf32>
    %372 = arith.mulf %353, %149 : vector<8x128xf32>
    %373 = arith.mulf %354, %263 : vector<8x128xf32>
    %374 = arith.subf %372, %373 : vector<8x128xf32>
    %375 = arith.mulf %354, %149 : vector<8x128xf32>
    %376 = arith.mulf %353, %263 : vector<8x128xf32>
    %377 = arith.addf %375, %376 : vector<8x128xf32>
    %378 = arith.mulf %353, %155 : vector<8x128xf32>
    %379 = arith.mulf %354, %269 : vector<8x128xf32>
    %380 = arith.subf %378, %379 : vector<8x128xf32>
    %381 = arith.mulf %354, %155 : vector<8x128xf32>
    %382 = arith.mulf %353, %269 : vector<8x128xf32>
    %383 = arith.addf %381, %382 : vector<8x128xf32>
    %384 = arith.subf %299, %185 : vector<8x128xf32>
    %cst_68 = arith.constant 2.000000e+00 : f32
    %385 = vector.broadcast %cst_68 : f32 to vector<8x128xf32>
    %386 = arith.mulf %385, %305 : vector<8x128xf32>
    %cst_69 = arith.constant 0.000000e+00 : f32
    %387 = vector.broadcast %cst_69 : f32 to vector<8x128xf32>
    %388 = arith.cmpf oge, %384, %387 : vector<8x128xf32>
    %cst_70 = arith.constant 1.000000e+00 : f32
    %cst_71 = arith.constant -1.000000e+00 : f32
    %389 = vector.broadcast %cst_70 : f32 to vector<8x128xf32>
    %390 = vector.broadcast %cst_71 : f32 to vector<8x128xf32>
    %391 = arith.select %388, %389, %390 : vector<8x128xi1>, vector<8x128xf32>
    %392 = math.absf %384 : vector<8x128xf32>
    %393 = arith.mulf %384, %384 : vector<8x128xf32>
    %394 = arith.mulf %386, %386 : vector<8x128xf32>
    %395 = arith.addf %393, %394 : vector<8x128xf32>
    %396 = math.sqrt %395 : vector<8x128xf32>
    %397 = arith.addf %392, %396 : vector<8x128xf32>
    %cst_72 = arith.constant 1.000000e-30 : f32
    %398 = vector.broadcast %cst_72 : f32 to vector<8x128xf32>
    %399 = arith.addf %397, %398 : vector<8x128xf32>
    %400 = tpu.reciprocal %399 {approx = true} : vector<8x128xf32> -> vector<8x128xf32>
    %401 = arith.mulf %399, %400 : vector<8x128xf32>
    %cst_73 = arith.constant 2.000000e+00 : f32
    %402 = vector.broadcast %cst_73 : f32 to vector<8x128xf32>
    %403 = arith.subf %402, %401 : vector<8x128xf32>
    %404 = arith.mulf %400, %403 : vector<8x128xf32>
    %405 = arith.mulf %386, %391 : vector<8x128xf32>
    %406 = arith.mulf %405, %404 : vector<8x128xf32>
    %407 = arith.mulf %406, %406 : vector<8x128xf32>
    %cst_74 = arith.constant 1.000000e+00 : f32
    %408 = vector.broadcast %cst_74 : f32 to vector<8x128xf32>
    %409 = arith.addf %408, %407 : vector<8x128xf32>
    %410 = math.rsqrt %409 : vector<8x128xf32>
    %411 = arith.mulf %406, %410 : vector<8x128xf32>
    %412 = arith.mulf %406, %305 : vector<8x128xf32>
    %413 = arith.subf %185, %412 : vector<8x128xf32>
    %414 = arith.mulf %406, %305 : vector<8x128xf32>
    %415 = arith.addf %299, %414 : vector<8x128xf32>
    %cst_75 = arith.constant 0.000000e+00 : f32
    %416 = vector.broadcast %cst_75 : f32 to vector<8x128xf32>
    %417 = arith.mulf %410, %308 : vector<8x128xf32>
    %418 = arith.mulf %411, %302 : vector<8x128xf32>
    %419 = arith.subf %417, %418 : vector<8x128xf32>
    %420 = arith.mulf %411, %308 : vector<8x128xf32>
    %421 = arith.mulf %410, %302 : vector<8x128xf32>
    %422 = arith.addf %420, %421 : vector<8x128xf32>
    %423 = arith.mulf %410, %197 : vector<8x128xf32>
    %424 = arith.mulf %411, %311 : vector<8x128xf32>
    %425 = arith.subf %423, %424 : vector<8x128xf32>
    %426 = arith.mulf %411, %197 : vector<8x128xf32>
    %427 = arith.mulf %410, %311 : vector<8x128xf32>
    %428 = arith.addf %426, %427 : vector<8x128xf32>
    %429 = arith.mulf %410, %203 : vector<8x128xf32>
    %430 = arith.mulf %411, %317 : vector<8x128xf32>
    %431 = arith.subf %429, %430 : vector<8x128xf32>
    %432 = arith.mulf %411, %203 : vector<8x128xf32>
    %433 = arith.mulf %410, %317 : vector<8x128xf32>
    %434 = arith.addf %432, %433 : vector<8x128xf32>
    %435 = arith.mulf %410, %209 : vector<8x128xf32>
    %436 = arith.mulf %411, %323 : vector<8x128xf32>
    %437 = arith.subf %435, %436 : vector<8x128xf32>
    %438 = arith.mulf %411, %209 : vector<8x128xf32>
    %439 = arith.mulf %410, %323 : vector<8x128xf32>
    %440 = arith.addf %438, %439 : vector<8x128xf32>
    %441 = arith.subf %356, %242 : vector<8x128xf32>
    %cst_76 = arith.constant 2.000000e+00 : f32
    %442 = vector.broadcast %cst_76 : f32 to vector<8x128xf32>
    %443 = arith.mulf %442, %362 : vector<8x128xf32>
    %cst_77 = arith.constant 0.000000e+00 : f32
    %444 = vector.broadcast %cst_77 : f32 to vector<8x128xf32>
    %445 = arith.cmpf oge, %441, %444 : vector<8x128xf32>
    %cst_78 = arith.constant 1.000000e+00 : f32
    %cst_79 = arith.constant -1.000000e+00 : f32
    %446 = vector.broadcast %cst_78 : f32 to vector<8x128xf32>
    %447 = vector.broadcast %cst_79 : f32 to vector<8x128xf32>
    %448 = arith.select %445, %446, %447 : vector<8x128xi1>, vector<8x128xf32>
    %449 = math.absf %441 : vector<8x128xf32>
    %450 = arith.mulf %441, %441 : vector<8x128xf32>
    %451 = arith.mulf %443, %443 : vector<8x128xf32>
    %452 = arith.addf %450, %451 : vector<8x128xf32>
    %453 = math.sqrt %452 : vector<8x128xf32>
    %454 = arith.addf %449, %453 : vector<8x128xf32>
    %cst_80 = arith.constant 1.000000e-30 : f32
    %455 = vector.broadcast %cst_80 : f32 to vector<8x128xf32>
    %456 = arith.addf %454, %455 : vector<8x128xf32>
    %457 = tpu.reciprocal %456 {approx = true} : vector<8x128xf32> -> vector<8x128xf32>
    %458 = arith.mulf %456, %457 : vector<8x128xf32>
    %cst_81 = arith.constant 2.000000e+00 : f32
    %459 = vector.broadcast %cst_81 : f32 to vector<8x128xf32>
    %460 = arith.subf %459, %458 : vector<8x128xf32>
    %461 = arith.mulf %457, %460 : vector<8x128xf32>
    %462 = arith.mulf %443, %448 : vector<8x128xf32>
    %463 = arith.mulf %462, %461 : vector<8x128xf32>
    %464 = arith.mulf %463, %463 : vector<8x128xf32>
    %cst_82 = arith.constant 1.000000e+00 : f32
    %465 = vector.broadcast %cst_82 : f32 to vector<8x128xf32>
    %466 = arith.addf %465, %464 : vector<8x128xf32>
    %467 = math.rsqrt %466 : vector<8x128xf32>
    %468 = arith.mulf %463, %467 : vector<8x128xf32>
    %469 = arith.mulf %463, %362 : vector<8x128xf32>
    %470 = arith.subf %242, %469 : vector<8x128xf32>
    %471 = arith.mulf %463, %362 : vector<8x128xf32>
    %472 = arith.addf %356, %471 : vector<8x128xf32>
    %cst_83 = arith.constant 0.000000e+00 : f32
    %473 = vector.broadcast %cst_83 : f32 to vector<8x128xf32>
    %474 = arith.mulf %467, %365 : vector<8x128xf32>
    %475 = arith.mulf %468, %359 : vector<8x128xf32>
    %476 = arith.subf %474, %475 : vector<8x128xf32>
    %477 = arith.mulf %468, %365 : vector<8x128xf32>
    %478 = arith.mulf %467, %359 : vector<8x128xf32>
    %479 = arith.addf %477, %478 : vector<8x128xf32>
    %480 = arith.mulf %467, %254 : vector<8x128xf32>
    %481 = arith.mulf %468, %368 : vector<8x128xf32>
    %482 = arith.subf %480, %481 : vector<8x128xf32>
    %483 = arith.mulf %468, %254 : vector<8x128xf32>
    %484 = arith.mulf %467, %368 : vector<8x128xf32>
    %485 = arith.addf %483, %484 : vector<8x128xf32>
    %486 = arith.mulf %467, %260 : vector<8x128xf32>
    %487 = arith.mulf %468, %374 : vector<8x128xf32>
    %488 = arith.subf %486, %487 : vector<8x128xf32>
    %489 = arith.mulf %468, %260 : vector<8x128xf32>
    %490 = arith.mulf %467, %374 : vector<8x128xf32>
    %491 = arith.addf %489, %490 : vector<8x128xf32>
    %492 = arith.mulf %467, %266 : vector<8x128xf32>
    %493 = arith.mulf %468, %380 : vector<8x128xf32>
    %494 = arith.subf %492, %493 : vector<8x128xf32>
    %495 = arith.mulf %468, %266 : vector<8x128xf32>
    %496 = arith.mulf %467, %380 : vector<8x128xf32>
    %497 = arith.addf %495, %496 : vector<8x128xf32>
    %498 = arith.subf %301, %413 : vector<8x128xf32>
    %cst_84 = arith.constant 2.000000e+00 : f32
    %499 = vector.broadcast %cst_84 : f32 to vector<8x128xf32>
    %500 = arith.mulf %499, %419 : vector<8x128xf32>
    %cst_85 = arith.constant 0.000000e+00 : f32
    %501 = vector.broadcast %cst_85 : f32 to vector<8x128xf32>
    %502 = arith.cmpf oge, %498, %501 : vector<8x128xf32>
    %cst_86 = arith.constant 1.000000e+00 : f32
    %cst_87 = arith.constant -1.000000e+00 : f32
    %503 = vector.broadcast %cst_86 : f32 to vector<8x128xf32>
    %504 = vector.broadcast %cst_87 : f32 to vector<8x128xf32>
    %505 = arith.select %502, %503, %504 : vector<8x128xi1>, vector<8x128xf32>
    %506 = math.absf %498 : vector<8x128xf32>
    %507 = arith.mulf %498, %498 : vector<8x128xf32>
    %508 = arith.mulf %500, %500 : vector<8x128xf32>
    %509 = arith.addf %507, %508 : vector<8x128xf32>
    %510 = math.sqrt %509 : vector<8x128xf32>
    %511 = arith.addf %506, %510 : vector<8x128xf32>
    %cst_88 = arith.constant 1.000000e-30 : f32
    %512 = vector.broadcast %cst_88 : f32 to vector<8x128xf32>
    %513 = arith.addf %511, %512 : vector<8x128xf32>
    %514 = tpu.reciprocal %513 {approx = true} : vector<8x128xf32> -> vector<8x128xf32>
    %515 = arith.mulf %513, %514 : vector<8x128xf32>
    %cst_89 = arith.constant 2.000000e+00 : f32
    %516 = vector.broadcast %cst_89 : f32 to vector<8x128xf32>
    %517 = arith.subf %516, %515 : vector<8x128xf32>
    %518 = arith.mulf %514, %517 : vector<8x128xf32>
    %519 = arith.mulf %500, %505 : vector<8x128xf32>
    %520 = arith.mulf %519, %518 : vector<8x128xf32>
    %521 = arith.mulf %520, %520 : vector<8x128xf32>
    %cst_90 = arith.constant 1.000000e+00 : f32
    %522 = vector.broadcast %cst_90 : f32 to vector<8x128xf32>
    %523 = arith.addf %522, %521 : vector<8x128xf32>
    %524 = math.rsqrt %523 : vector<8x128xf32>
    %525 = arith.mulf %520, %524 : vector<8x128xf32>
    %526 = arith.mulf %520, %419 : vector<8x128xf32>
    %527 = arith.subf %413, %526 : vector<8x128xf32>
    %528 = arith.mulf %520, %419 : vector<8x128xf32>
    %529 = arith.addf %301, %528 : vector<8x128xf32>
    %cst_91 = arith.constant 0.000000e+00 : f32
    %530 = vector.broadcast %cst_91 : f32 to vector<8x128xf32>
    %531 = arith.mulf %524, %416 : vector<8x128xf32>
    %532 = arith.mulf %525, %422 : vector<8x128xf32>
    %533 = arith.subf %531, %532 : vector<8x128xf32>
    %534 = arith.mulf %525, %416 : vector<8x128xf32>
    %535 = arith.mulf %524, %422 : vector<8x128xf32>
    %536 = arith.addf %534, %535 : vector<8x128xf32>
    %537 = arith.mulf %524, %425 : vector<8x128xf32>
    %538 = arith.mulf %525, %314 : vector<8x128xf32>
    %539 = arith.subf %537, %538 : vector<8x128xf32>
    %540 = arith.mulf %525, %425 : vector<8x128xf32>
    %541 = arith.mulf %524, %314 : vector<8x128xf32>
    %542 = arith.addf %540, %541 : vector<8x128xf32>
    %543 = arith.mulf %524, %431 : vector<8x128xf32>
    %544 = arith.mulf %525, %320 : vector<8x128xf32>
    %545 = arith.subf %543, %544 : vector<8x128xf32>
    %546 = arith.mulf %525, %431 : vector<8x128xf32>
    %547 = arith.mulf %524, %320 : vector<8x128xf32>
    %548 = arith.addf %546, %547 : vector<8x128xf32>
    %549 = arith.mulf %524, %437 : vector<8x128xf32>
    %550 = arith.mulf %525, %326 : vector<8x128xf32>
    %551 = arith.subf %549, %550 : vector<8x128xf32>
    %552 = arith.mulf %525, %437 : vector<8x128xf32>
    %553 = arith.mulf %524, %326 : vector<8x128xf32>
    %554 = arith.addf %552, %553 : vector<8x128xf32>
    %555 = arith.subf %358, %470 : vector<8x128xf32>
    %cst_92 = arith.constant 2.000000e+00 : f32
    %556 = vector.broadcast %cst_92 : f32 to vector<8x128xf32>
    %557 = arith.mulf %556, %476 : vector<8x128xf32>
    %cst_93 = arith.constant 0.000000e+00 : f32
    %558 = vector.broadcast %cst_93 : f32 to vector<8x128xf32>
    %559 = arith.cmpf oge, %555, %558 : vector<8x128xf32>
    %cst_94 = arith.constant 1.000000e+00 : f32
    %cst_95 = arith.constant -1.000000e+00 : f32
    %560 = vector.broadcast %cst_94 : f32 to vector<8x128xf32>
    %561 = vector.broadcast %cst_95 : f32 to vector<8x128xf32>
    %562 = arith.select %559, %560, %561 : vector<8x128xi1>, vector<8x128xf32>
    %563 = math.absf %555 : vector<8x128xf32>
    %564 = arith.mulf %555, %555 : vector<8x128xf32>
    %565 = arith.mulf %557, %557 : vector<8x128xf32>
    %566 = arith.addf %564, %565 : vector<8x128xf32>
    %567 = math.sqrt %566 : vector<8x128xf32>
    %568 = arith.addf %563, %567 : vector<8x128xf32>
    %cst_96 = arith.constant 1.000000e-30 : f32
    %569 = vector.broadcast %cst_96 : f32 to vector<8x128xf32>
    %570 = arith.addf %568, %569 : vector<8x128xf32>
    %571 = tpu.reciprocal %570 {approx = true} : vector<8x128xf32> -> vector<8x128xf32>
    %572 = arith.mulf %570, %571 : vector<8x128xf32>
    %cst_97 = arith.constant 2.000000e+00 : f32
    %573 = vector.broadcast %cst_97 : f32 to vector<8x128xf32>
    %574 = arith.subf %573, %572 : vector<8x128xf32>
    %575 = arith.mulf %571, %574 : vector<8x128xf32>
    %576 = arith.mulf %557, %562 : vector<8x128xf32>
    %577 = arith.mulf %576, %575 : vector<8x128xf32>
    %578 = arith.mulf %577, %577 : vector<8x128xf32>
    %cst_98 = arith.constant 1.000000e+00 : f32
    %579 = vector.broadcast %cst_98 : f32 to vector<8x128xf32>
    %580 = arith.addf %579, %578 : vector<8x128xf32>
    %581 = math.rsqrt %580 : vector<8x128xf32>
    %582 = arith.mulf %577, %581 : vector<8x128xf32>
    %583 = arith.mulf %577, %476 : vector<8x128xf32>
    %584 = arith.subf %470, %583 : vector<8x128xf32>
    %585 = arith.mulf %577, %476 : vector<8x128xf32>
    %586 = arith.addf %358, %585 : vector<8x128xf32>
    %cst_99 = arith.constant 0.000000e+00 : f32
    %587 = vector.broadcast %cst_99 : f32 to vector<8x128xf32>
    %588 = arith.mulf %581, %473 : vector<8x128xf32>
    %589 = arith.mulf %582, %479 : vector<8x128xf32>
    %590 = arith.subf %588, %589 : vector<8x128xf32>
    %591 = arith.mulf %582, %473 : vector<8x128xf32>
    %592 = arith.mulf %581, %479 : vector<8x128xf32>
    %593 = arith.addf %591, %592 : vector<8x128xf32>
    %594 = arith.mulf %581, %482 : vector<8x128xf32>
    %595 = arith.mulf %582, %371 : vector<8x128xf32>
    %596 = arith.subf %594, %595 : vector<8x128xf32>
    %597 = arith.mulf %582, %482 : vector<8x128xf32>
    %598 = arith.mulf %581, %371 : vector<8x128xf32>
    %599 = arith.addf %597, %598 : vector<8x128xf32>
    %600 = arith.mulf %581, %488 : vector<8x128xf32>
    %601 = arith.mulf %582, %377 : vector<8x128xf32>
    %602 = arith.subf %600, %601 : vector<8x128xf32>
    %603 = arith.mulf %582, %488 : vector<8x128xf32>
    %604 = arith.mulf %581, %377 : vector<8x128xf32>
    %605 = arith.addf %603, %604 : vector<8x128xf32>
    %606 = arith.mulf %581, %494 : vector<8x128xf32>
    %607 = arith.mulf %582, %383 : vector<8x128xf32>
    %608 = arith.subf %606, %607 : vector<8x128xf32>
    %609 = arith.mulf %582, %494 : vector<8x128xf32>
    %610 = arith.mulf %581, %383 : vector<8x128xf32>
    %611 = arith.addf %609, %610 : vector<8x128xf32>
    %612 = arith.subf %529, %415 : vector<8x128xf32>
    %cst_100 = arith.constant 2.000000e+00 : f32
    %613 = vector.broadcast %cst_100 : f32 to vector<8x128xf32>
    %614 = arith.mulf %613, %536 : vector<8x128xf32>
    %cst_101 = arith.constant 0.000000e+00 : f32
    %615 = vector.broadcast %cst_101 : f32 to vector<8x128xf32>
    %616 = arith.cmpf oge, %612, %615 : vector<8x128xf32>
    %cst_102 = arith.constant 1.000000e+00 : f32
    %cst_103 = arith.constant -1.000000e+00 : f32
    %617 = vector.broadcast %cst_102 : f32 to vector<8x128xf32>
    %618 = vector.broadcast %cst_103 : f32 to vector<8x128xf32>
    %619 = arith.select %616, %617, %618 : vector<8x128xi1>, vector<8x128xf32>
    %620 = math.absf %612 : vector<8x128xf32>
    %621 = arith.mulf %612, %612 : vector<8x128xf32>
    %622 = arith.mulf %614, %614 : vector<8x128xf32>
    %623 = arith.addf %621, %622 : vector<8x128xf32>
    %624 = math.sqrt %623 : vector<8x128xf32>
    %625 = arith.addf %620, %624 : vector<8x128xf32>
    %cst_104 = arith.constant 1.000000e-30 : f32
    %626 = vector.broadcast %cst_104 : f32 to vector<8x128xf32>
    %627 = arith.addf %625, %626 : vector<8x128xf32>
    %628 = tpu.reciprocal %627 {approx = true} : vector<8x128xf32> -> vector<8x128xf32>
    %629 = arith.mulf %627, %628 : vector<8x128xf32>
    %cst_105 = arith.constant 2.000000e+00 : f32
    %630 = vector.broadcast %cst_105 : f32 to vector<8x128xf32>
    %631 = arith.subf %630, %629 : vector<8x128xf32>
    %632 = arith.mulf %628, %631 : vector<8x128xf32>
    %633 = arith.mulf %614, %619 : vector<8x128xf32>
    %634 = arith.mulf %633, %632 : vector<8x128xf32>
    %635 = arith.mulf %634, %634 : vector<8x128xf32>
    %cst_106 = arith.constant 1.000000e+00 : f32
    %636 = vector.broadcast %cst_106 : f32 to vector<8x128xf32>
    %637 = arith.addf %636, %635 : vector<8x128xf32>
    %638 = math.rsqrt %637 : vector<8x128xf32>
    %639 = arith.mulf %634, %638 : vector<8x128xf32>
    %640 = arith.mulf %634, %536 : vector<8x128xf32>
    %641 = arith.subf %415, %640 : vector<8x128xf32>
    %642 = arith.mulf %634, %536 : vector<8x128xf32>
    %643 = arith.addf %529, %642 : vector<8x128xf32>
    %cst_107 = arith.constant 0.000000e+00 : f32
    %644 = vector.broadcast %cst_107 : f32 to vector<8x128xf32>
    %645 = arith.mulf %638, %533 : vector<8x128xf32>
    %646 = arith.mulf %639, %530 : vector<8x128xf32>
    %647 = arith.subf %645, %646 : vector<8x128xf32>
    %648 = arith.mulf %639, %533 : vector<8x128xf32>
    %649 = arith.mulf %638, %530 : vector<8x128xf32>
    %650 = arith.addf %648, %649 : vector<8x128xf32>
    %651 = arith.mulf %638, %428 : vector<8x128xf32>
    %652 = arith.mulf %639, %542 : vector<8x128xf32>
    %653 = arith.subf %651, %652 : vector<8x128xf32>
    %654 = arith.mulf %639, %428 : vector<8x128xf32>
    %655 = arith.mulf %638, %542 : vector<8x128xf32>
    %656 = arith.addf %654, %655 : vector<8x128xf32>
    %657 = arith.mulf %638, %434 : vector<8x128xf32>
    %658 = arith.mulf %639, %548 : vector<8x128xf32>
    %659 = arith.subf %657, %658 : vector<8x128xf32>
    %660 = arith.mulf %639, %434 : vector<8x128xf32>
    %661 = arith.mulf %638, %548 : vector<8x128xf32>
    %662 = arith.addf %660, %661 : vector<8x128xf32>
    %663 = arith.mulf %638, %440 : vector<8x128xf32>
    %664 = arith.mulf %639, %554 : vector<8x128xf32>
    %665 = arith.subf %663, %664 : vector<8x128xf32>
    %666 = arith.mulf %639, %440 : vector<8x128xf32>
    %667 = arith.mulf %638, %554 : vector<8x128xf32>
    %668 = arith.addf %666, %667 : vector<8x128xf32>
    %669 = arith.subf %586, %472 : vector<8x128xf32>
    %cst_108 = arith.constant 2.000000e+00 : f32
    %670 = vector.broadcast %cst_108 : f32 to vector<8x128xf32>
    %671 = arith.mulf %670, %593 : vector<8x128xf32>
    %cst_109 = arith.constant 0.000000e+00 : f32
    %672 = vector.broadcast %cst_109 : f32 to vector<8x128xf32>
    %673 = arith.cmpf oge, %669, %672 : vector<8x128xf32>
    %cst_110 = arith.constant 1.000000e+00 : f32
    %cst_111 = arith.constant -1.000000e+00 : f32
    %674 = vector.broadcast %cst_110 : f32 to vector<8x128xf32>
    %675 = vector.broadcast %cst_111 : f32 to vector<8x128xf32>
    %676 = arith.select %673, %674, %675 : vector<8x128xi1>, vector<8x128xf32>
    %677 = math.absf %669 : vector<8x128xf32>
    %678 = arith.mulf %669, %669 : vector<8x128xf32>
    %679 = arith.mulf %671, %671 : vector<8x128xf32>
    %680 = arith.addf %678, %679 : vector<8x128xf32>
    %681 = math.sqrt %680 : vector<8x128xf32>
    %682 = arith.addf %677, %681 : vector<8x128xf32>
    %cst_112 = arith.constant 1.000000e-30 : f32
    %683 = vector.broadcast %cst_112 : f32 to vector<8x128xf32>
    %684 = arith.addf %682, %683 : vector<8x128xf32>
    %685 = tpu.reciprocal %684 {approx = true} : vector<8x128xf32> -> vector<8x128xf32>
    %686 = arith.mulf %684, %685 : vector<8x128xf32>
    %cst_113 = arith.constant 2.000000e+00 : f32
    %687 = vector.broadcast %cst_113 : f32 to vector<8x128xf32>
    %688 = arith.subf %687, %686 : vector<8x128xf32>
    %689 = arith.mulf %685, %688 : vector<8x128xf32>
    %690 = arith.mulf %671, %676 : vector<8x128xf32>
    %691 = arith.mulf %690, %689 : vector<8x128xf32>
    %692 = arith.mulf %691, %691 : vector<8x128xf32>
    %cst_114 = arith.constant 1.000000e+00 : f32
    %693 = vector.broadcast %cst_114 : f32 to vector<8x128xf32>
    %694 = arith.addf %693, %692 : vector<8x128xf32>
    %695 = math.rsqrt %694 : vector<8x128xf32>
    %696 = arith.mulf %691, %695 : vector<8x128xf32>
    %697 = arith.mulf %691, %593 : vector<8x128xf32>
    %698 = arith.subf %472, %697 : vector<8x128xf32>
    %699 = arith.mulf %691, %593 : vector<8x128xf32>
    %700 = arith.addf %586, %699 : vector<8x128xf32>
    %cst_115 = arith.constant 0.000000e+00 : f32
    %701 = vector.broadcast %cst_115 : f32 to vector<8x128xf32>
    %702 = arith.mulf %695, %590 : vector<8x128xf32>
    %703 = arith.mulf %696, %587 : vector<8x128xf32>
    %704 = arith.subf %702, %703 : vector<8x128xf32>
    %705 = arith.mulf %696, %590 : vector<8x128xf32>
    %706 = arith.mulf %695, %587 : vector<8x128xf32>
    %707 = arith.addf %705, %706 : vector<8x128xf32>
    %708 = arith.mulf %695, %485 : vector<8x128xf32>
    %709 = arith.mulf %696, %599 : vector<8x128xf32>
    %710 = arith.subf %708, %709 : vector<8x128xf32>
    %711 = arith.mulf %696, %485 : vector<8x128xf32>
    %712 = arith.mulf %695, %599 : vector<8x128xf32>
    %713 = arith.addf %711, %712 : vector<8x128xf32>
    %714 = arith.mulf %695, %491 : vector<8x128xf32>
    %715 = arith.mulf %696, %605 : vector<8x128xf32>
    %716 = arith.subf %714, %715 : vector<8x128xf32>
    %717 = arith.mulf %696, %491 : vector<8x128xf32>
    %718 = arith.mulf %695, %605 : vector<8x128xf32>
    %719 = arith.addf %717, %718 : vector<8x128xf32>
    %720 = arith.mulf %695, %497 : vector<8x128xf32>
    %721 = arith.mulf %696, %611 : vector<8x128xf32>
    %722 = arith.subf %720, %721 : vector<8x128xf32>
    %723 = arith.mulf %696, %497 : vector<8x128xf32>
    %724 = arith.mulf %695, %611 : vector<8x128xf32>
    %725 = arith.addf %723, %724 : vector<8x128xf32>
    %726 = arith.subf %641, %527 : vector<8x128xf32>
    %cst_116 = arith.constant 2.000000e+00 : f32
    %727 = vector.broadcast %cst_116 : f32 to vector<8x128xf32>
    %728 = arith.mulf %727, %647 : vector<8x128xf32>
    %cst_117 = arith.constant 0.000000e+00 : f32
    %729 = vector.broadcast %cst_117 : f32 to vector<8x128xf32>
    %730 = arith.cmpf oge, %726, %729 : vector<8x128xf32>
    %cst_118 = arith.constant 1.000000e+00 : f32
    %cst_119 = arith.constant -1.000000e+00 : f32
    %731 = vector.broadcast %cst_118 : f32 to vector<8x128xf32>
    %732 = vector.broadcast %cst_119 : f32 to vector<8x128xf32>
    %733 = arith.select %730, %731, %732 : vector<8x128xi1>, vector<8x128xf32>
    %734 = math.absf %726 : vector<8x128xf32>
    %735 = arith.mulf %726, %726 : vector<8x128xf32>
    %736 = arith.mulf %728, %728 : vector<8x128xf32>
    %737 = arith.addf %735, %736 : vector<8x128xf32>
    %738 = math.sqrt %737 : vector<8x128xf32>
    %739 = arith.addf %734, %738 : vector<8x128xf32>
    %cst_120 = arith.constant 1.000000e-30 : f32
    %740 = vector.broadcast %cst_120 : f32 to vector<8x128xf32>
    %741 = arith.addf %739, %740 : vector<8x128xf32>
    %742 = tpu.reciprocal %741 {approx = true} : vector<8x128xf32> -> vector<8x128xf32>
    %743 = arith.mulf %741, %742 : vector<8x128xf32>
    %cst_121 = arith.constant 2.000000e+00 : f32
    %744 = vector.broadcast %cst_121 : f32 to vector<8x128xf32>
    %745 = arith.subf %744, %743 : vector<8x128xf32>
    %746 = arith.mulf %742, %745 : vector<8x128xf32>
    %747 = arith.mulf %728, %733 : vector<8x128xf32>
    %748 = arith.mulf %747, %746 : vector<8x128xf32>
    %749 = arith.mulf %748, %748 : vector<8x128xf32>
    %cst_122 = arith.constant 1.000000e+00 : f32
    %750 = vector.broadcast %cst_122 : f32 to vector<8x128xf32>
    %751 = arith.addf %750, %749 : vector<8x128xf32>
    %752 = math.rsqrt %751 : vector<8x128xf32>
    %753 = arith.mulf %748, %752 : vector<8x128xf32>
    %754 = arith.mulf %748, %647 : vector<8x128xf32>
    %755 = arith.subf %527, %754 : vector<8x128xf32>
    %756 = arith.mulf %748, %647 : vector<8x128xf32>
    %757 = arith.addf %641, %756 : vector<8x128xf32>
    %cst_123 = arith.constant 0.000000e+00 : f32
    %758 = vector.broadcast %cst_123 : f32 to vector<8x128xf32>
    %759 = arith.mulf %752, %650 : vector<8x128xf32>
    %760 = arith.mulf %753, %644 : vector<8x128xf32>
    %761 = arith.subf %759, %760 : vector<8x128xf32>
    %762 = arith.mulf %753, %650 : vector<8x128xf32>
    %763 = arith.mulf %752, %644 : vector<8x128xf32>
    %764 = arith.addf %762, %763 : vector<8x128xf32>
    %765 = arith.mulf %752, %539 : vector<8x128xf32>
    %766 = arith.mulf %753, %653 : vector<8x128xf32>
    %767 = arith.subf %765, %766 : vector<8x128xf32>
    %768 = arith.mulf %753, %539 : vector<8x128xf32>
    %769 = arith.mulf %752, %653 : vector<8x128xf32>
    %770 = arith.addf %768, %769 : vector<8x128xf32>
    %771 = arith.mulf %752, %545 : vector<8x128xf32>
    %772 = arith.mulf %753, %659 : vector<8x128xf32>
    %773 = arith.subf %771, %772 : vector<8x128xf32>
    %774 = arith.mulf %753, %545 : vector<8x128xf32>
    %775 = arith.mulf %752, %659 : vector<8x128xf32>
    %776 = arith.addf %774, %775 : vector<8x128xf32>
    %777 = arith.mulf %752, %551 : vector<8x128xf32>
    %778 = arith.mulf %753, %665 : vector<8x128xf32>
    %779 = arith.subf %777, %778 : vector<8x128xf32>
    %780 = arith.mulf %753, %551 : vector<8x128xf32>
    %781 = arith.mulf %752, %665 : vector<8x128xf32>
    %782 = arith.addf %780, %781 : vector<8x128xf32>
    %783 = arith.subf %698, %584 : vector<8x128xf32>
    %cst_124 = arith.constant 2.000000e+00 : f32
    %784 = vector.broadcast %cst_124 : f32 to vector<8x128xf32>
    %785 = arith.mulf %784, %704 : vector<8x128xf32>
    %cst_125 = arith.constant 0.000000e+00 : f32
    %786 = vector.broadcast %cst_125 : f32 to vector<8x128xf32>
    %787 = arith.cmpf oge, %783, %786 : vector<8x128xf32>
    %cst_126 = arith.constant 1.000000e+00 : f32
    %cst_127 = arith.constant -1.000000e+00 : f32
    %788 = vector.broadcast %cst_126 : f32 to vector<8x128xf32>
    %789 = vector.broadcast %cst_127 : f32 to vector<8x128xf32>
    %790 = arith.select %787, %788, %789 : vector<8x128xi1>, vector<8x128xf32>
    %791 = math.absf %783 : vector<8x128xf32>
    %792 = arith.mulf %783, %783 : vector<8x128xf32>
    %793 = arith.mulf %785, %785 : vector<8x128xf32>
    %794 = arith.addf %792, %793 : vector<8x128xf32>
    %795 = math.sqrt %794 : vector<8x128xf32>
    %796 = arith.addf %791, %795 : vector<8x128xf32>
    %cst_128 = arith.constant 1.000000e-30 : f32
    %797 = vector.broadcast %cst_128 : f32 to vector<8x128xf32>
    %798 = arith.addf %796, %797 : vector<8x128xf32>
    %799 = tpu.reciprocal %798 {approx = true} : vector<8x128xf32> -> vector<8x128xf32>
    %800 = arith.mulf %798, %799 : vector<8x128xf32>
    %cst_129 = arith.constant 2.000000e+00 : f32
    %801 = vector.broadcast %cst_129 : f32 to vector<8x128xf32>
    %802 = arith.subf %801, %800 : vector<8x128xf32>
    %803 = arith.mulf %799, %802 : vector<8x128xf32>
    %804 = arith.mulf %785, %790 : vector<8x128xf32>
    %805 = arith.mulf %804, %803 : vector<8x128xf32>
    %806 = arith.mulf %805, %805 : vector<8x128xf32>
    %cst_130 = arith.constant 1.000000e+00 : f32
    %807 = vector.broadcast %cst_130 : f32 to vector<8x128xf32>
    %808 = arith.addf %807, %806 : vector<8x128xf32>
    %809 = math.rsqrt %808 : vector<8x128xf32>
    %810 = arith.mulf %805, %809 : vector<8x128xf32>
    %811 = arith.mulf %805, %704 : vector<8x128xf32>
    %812 = arith.subf %584, %811 : vector<8x128xf32>
    %813 = arith.mulf %805, %704 : vector<8x128xf32>
    %814 = arith.addf %698, %813 : vector<8x128xf32>
    %cst_131 = arith.constant 0.000000e+00 : f32
    %815 = vector.broadcast %cst_131 : f32 to vector<8x128xf32>
    %816 = arith.mulf %809, %707 : vector<8x128xf32>
    %817 = arith.mulf %810, %701 : vector<8x128xf32>
    %818 = arith.subf %816, %817 : vector<8x128xf32>
    %819 = arith.mulf %810, %707 : vector<8x128xf32>
    %820 = arith.mulf %809, %701 : vector<8x128xf32>
    %821 = arith.addf %819, %820 : vector<8x128xf32>
    %822 = arith.mulf %809, %596 : vector<8x128xf32>
    %823 = arith.mulf %810, %710 : vector<8x128xf32>
    %824 = arith.subf %822, %823 : vector<8x128xf32>
    %825 = arith.mulf %810, %596 : vector<8x128xf32>
    %826 = arith.mulf %809, %710 : vector<8x128xf32>
    %827 = arith.addf %825, %826 : vector<8x128xf32>
    %828 = arith.mulf %809, %602 : vector<8x128xf32>
    %829 = arith.mulf %810, %716 : vector<8x128xf32>
    %830 = arith.subf %828, %829 : vector<8x128xf32>
    %831 = arith.mulf %810, %602 : vector<8x128xf32>
    %832 = arith.mulf %809, %716 : vector<8x128xf32>
    %833 = arith.addf %831, %832 : vector<8x128xf32>
    %834 = arith.mulf %809, %608 : vector<8x128xf32>
    %835 = arith.mulf %810, %722 : vector<8x128xf32>
    %836 = arith.subf %834, %835 : vector<8x128xf32>
    %837 = arith.mulf %810, %608 : vector<8x128xf32>
    %838 = arith.mulf %809, %722 : vector<8x128xf32>
    %839 = arith.addf %837, %838 : vector<8x128xf32>
    %840 = arith.subf %643, %755 : vector<8x128xf32>
    %cst_132 = arith.constant 2.000000e+00 : f32
    %841 = vector.broadcast %cst_132 : f32 to vector<8x128xf32>
    %842 = arith.mulf %841, %761 : vector<8x128xf32>
    %cst_133 = arith.constant 0.000000e+00 : f32
    %843 = vector.broadcast %cst_133 : f32 to vector<8x128xf32>
    %844 = arith.cmpf oge, %840, %843 : vector<8x128xf32>
    %cst_134 = arith.constant 1.000000e+00 : f32
    %cst_135 = arith.constant -1.000000e+00 : f32
    %845 = vector.broadcast %cst_134 : f32 to vector<8x128xf32>
    %846 = vector.broadcast %cst_135 : f32 to vector<8x128xf32>
    %847 = arith.select %844, %845, %846 : vector<8x128xi1>, vector<8x128xf32>
    %848 = math.absf %840 : vector<8x128xf32>
    %849 = arith.mulf %840, %840 : vector<8x128xf32>
    %850 = arith.mulf %842, %842 : vector<8x128xf32>
    %851 = arith.addf %849, %850 : vector<8x128xf32>
    %852 = math.sqrt %851 : vector<8x128xf32>
    %853 = arith.addf %848, %852 : vector<8x128xf32>
    %cst_136 = arith.constant 1.000000e-30 : f32
    %854 = vector.broadcast %cst_136 : f32 to vector<8x128xf32>
    %855 = arith.addf %853, %854 : vector<8x128xf32>
    %856 = tpu.reciprocal %855 {approx = true} : vector<8x128xf32> -> vector<8x128xf32>
    %857 = arith.mulf %855, %856 : vector<8x128xf32>
    %cst_137 = arith.constant 2.000000e+00 : f32
    %858 = vector.broadcast %cst_137 : f32 to vector<8x128xf32>
    %859 = arith.subf %858, %857 : vector<8x128xf32>
    %860 = arith.mulf %856, %859 : vector<8x128xf32>
    %861 = arith.mulf %842, %847 : vector<8x128xf32>
    %862 = arith.mulf %861, %860 : vector<8x128xf32>
    %863 = arith.mulf %862, %862 : vector<8x128xf32>
    %cst_138 = arith.constant 1.000000e+00 : f32
    %864 = vector.broadcast %cst_138 : f32 to vector<8x128xf32>
    %865 = arith.addf %864, %863 : vector<8x128xf32>
    %866 = math.rsqrt %865 : vector<8x128xf32>
    %867 = arith.mulf %862, %866 : vector<8x128xf32>
    %868 = arith.mulf %862, %761 : vector<8x128xf32>
    %869 = arith.subf %755, %868 : vector<8x128xf32>
    %870 = arith.mulf %862, %761 : vector<8x128xf32>
    %871 = arith.addf %643, %870 : vector<8x128xf32>
    %cst_139 = arith.constant 0.000000e+00 : f32
    %872 = vector.broadcast %cst_139 : f32 to vector<8x128xf32>
    %873 = arith.mulf %866, %758 : vector<8x128xf32>
    %874 = arith.mulf %867, %764 : vector<8x128xf32>
    %875 = arith.subf %873, %874 : vector<8x128xf32>
    %876 = arith.mulf %867, %758 : vector<8x128xf32>
    %877 = arith.mulf %866, %764 : vector<8x128xf32>
    %878 = arith.addf %876, %877 : vector<8x128xf32>
    %879 = arith.mulf %866, %767 : vector<8x128xf32>
    %880 = arith.mulf %867, %656 : vector<8x128xf32>
    %881 = arith.subf %879, %880 : vector<8x128xf32>
    %882 = arith.mulf %867, %767 : vector<8x128xf32>
    %883 = arith.mulf %866, %656 : vector<8x128xf32>
    %884 = arith.addf %882, %883 : vector<8x128xf32>
    %885 = arith.mulf %866, %773 : vector<8x128xf32>
    %886 = arith.mulf %867, %662 : vector<8x128xf32>
    %887 = arith.subf %885, %886 : vector<8x128xf32>
    %888 = arith.mulf %867, %773 : vector<8x128xf32>
    %889 = arith.mulf %866, %662 : vector<8x128xf32>
    %890 = arith.addf %888, %889 : vector<8x128xf32>
    %891 = arith.mulf %866, %779 : vector<8x128xf32>
    %892 = arith.mulf %867, %668 : vector<8x128xf32>
    %893 = arith.subf %891, %892 : vector<8x128xf32>
    %894 = arith.mulf %867, %779 : vector<8x128xf32>
    %895 = arith.mulf %866, %668 : vector<8x128xf32>
    %896 = arith.addf %894, %895 : vector<8x128xf32>
    %897 = arith.subf %700, %812 : vector<8x128xf32>
    %cst_140 = arith.constant 2.000000e+00 : f32
    %898 = vector.broadcast %cst_140 : f32 to vector<8x128xf32>
    %899 = arith.mulf %898, %818 : vector<8x128xf32>
    %cst_141 = arith.constant 0.000000e+00 : f32
    %900 = vector.broadcast %cst_141 : f32 to vector<8x128xf32>
    %901 = arith.cmpf oge, %897, %900 : vector<8x128xf32>
    %cst_142 = arith.constant 1.000000e+00 : f32
    %cst_143 = arith.constant -1.000000e+00 : f32
    %902 = vector.broadcast %cst_142 : f32 to vector<8x128xf32>
    %903 = vector.broadcast %cst_143 : f32 to vector<8x128xf32>
    %904 = arith.select %901, %902, %903 : vector<8x128xi1>, vector<8x128xf32>
    %905 = math.absf %897 : vector<8x128xf32>
    %906 = arith.mulf %897, %897 : vector<8x128xf32>
    %907 = arith.mulf %899, %899 : vector<8x128xf32>
    %908 = arith.addf %906, %907 : vector<8x128xf32>
    %909 = math.sqrt %908 : vector<8x128xf32>
    %910 = arith.addf %905, %909 : vector<8x128xf32>
    %cst_144 = arith.constant 1.000000e-30 : f32
    %911 = vector.broadcast %cst_144 : f32 to vector<8x128xf32>
    %912 = arith.addf %910, %911 : vector<8x128xf32>
    %913 = tpu.reciprocal %912 {approx = true} : vector<8x128xf32> -> vector<8x128xf32>
    %914 = arith.mulf %912, %913 : vector<8x128xf32>
    %cst_145 = arith.constant 2.000000e+00 : f32
    %915 = vector.broadcast %cst_145 : f32 to vector<8x128xf32>
    %916 = arith.subf %915, %914 : vector<8x128xf32>
    %917 = arith.mulf %913, %916 : vector<8x128xf32>
    %918 = arith.mulf %899, %904 : vector<8x128xf32>
    %919 = arith.mulf %918, %917 : vector<8x128xf32>
    %920 = arith.mulf %919, %919 : vector<8x128xf32>
    %cst_146 = arith.constant 1.000000e+00 : f32
    %921 = vector.broadcast %cst_146 : f32 to vector<8x128xf32>
    %922 = arith.addf %921, %920 : vector<8x128xf32>
    %923 = math.rsqrt %922 : vector<8x128xf32>
    %924 = arith.mulf %919, %923 : vector<8x128xf32>
    %925 = arith.mulf %919, %818 : vector<8x128xf32>
    %926 = arith.subf %812, %925 : vector<8x128xf32>
    %927 = arith.mulf %919, %818 : vector<8x128xf32>
    %928 = arith.addf %700, %927 : vector<8x128xf32>
    %cst_147 = arith.constant 0.000000e+00 : f32
    %929 = vector.broadcast %cst_147 : f32 to vector<8x128xf32>
    %930 = arith.mulf %923, %815 : vector<8x128xf32>
    %931 = arith.mulf %924, %821 : vector<8x128xf32>
    %932 = arith.subf %930, %931 : vector<8x128xf32>
    %933 = arith.mulf %924, %815 : vector<8x128xf32>
    %934 = arith.mulf %923, %821 : vector<8x128xf32>
    %935 = arith.addf %933, %934 : vector<8x128xf32>
    %936 = arith.mulf %923, %824 : vector<8x128xf32>
    %937 = arith.mulf %924, %713 : vector<8x128xf32>
    %938 = arith.subf %936, %937 : vector<8x128xf32>
    %939 = arith.mulf %924, %824 : vector<8x128xf32>
    %940 = arith.mulf %923, %713 : vector<8x128xf32>
    %941 = arith.addf %939, %940 : vector<8x128xf32>
    %942 = arith.mulf %923, %830 : vector<8x128xf32>
    %943 = arith.mulf %924, %719 : vector<8x128xf32>
    %944 = arith.subf %942, %943 : vector<8x128xf32>
    %945 = arith.mulf %924, %830 : vector<8x128xf32>
    %946 = arith.mulf %923, %719 : vector<8x128xf32>
    %947 = arith.addf %945, %946 : vector<8x128xf32>
    %948 = arith.mulf %923, %836 : vector<8x128xf32>
    %949 = arith.mulf %924, %725 : vector<8x128xf32>
    %950 = arith.subf %948, %949 : vector<8x128xf32>
    %951 = arith.mulf %924, %836 : vector<8x128xf32>
    %952 = arith.mulf %923, %725 : vector<8x128xf32>
    %953 = arith.addf %951, %952 : vector<8x128xf32>
    %954 = arith.subf %871, %757 : vector<8x128xf32>
    %cst_148 = arith.constant 2.000000e+00 : f32
    %955 = vector.broadcast %cst_148 : f32 to vector<8x128xf32>
    %956 = arith.mulf %955, %878 : vector<8x128xf32>
    %cst_149 = arith.constant 0.000000e+00 : f32
    %957 = vector.broadcast %cst_149 : f32 to vector<8x128xf32>
    %958 = arith.cmpf oge, %954, %957 : vector<8x128xf32>
    %cst_150 = arith.constant 1.000000e+00 : f32
    %cst_151 = arith.constant -1.000000e+00 : f32
    %959 = vector.broadcast %cst_150 : f32 to vector<8x128xf32>
    %960 = vector.broadcast %cst_151 : f32 to vector<8x128xf32>
    %961 = arith.select %958, %959, %960 : vector<8x128xi1>, vector<8x128xf32>
    %962 = math.absf %954 : vector<8x128xf32>
    %963 = arith.mulf %954, %954 : vector<8x128xf32>
    %964 = arith.mulf %956, %956 : vector<8x128xf32>
    %965 = arith.addf %963, %964 : vector<8x128xf32>
    %966 = math.sqrt %965 : vector<8x128xf32>
    %967 = arith.addf %962, %966 : vector<8x128xf32>
    %cst_152 = arith.constant 1.000000e-30 : f32
    %968 = vector.broadcast %cst_152 : f32 to vector<8x128xf32>
    %969 = arith.addf %967, %968 : vector<8x128xf32>
    %970 = tpu.reciprocal %969 {approx = true} : vector<8x128xf32> -> vector<8x128xf32>
    %971 = arith.mulf %969, %970 : vector<8x128xf32>
    %cst_153 = arith.constant 2.000000e+00 : f32
    %972 = vector.broadcast %cst_153 : f32 to vector<8x128xf32>
    %973 = arith.subf %972, %971 : vector<8x128xf32>
    %974 = arith.mulf %970, %973 : vector<8x128xf32>
    %975 = arith.mulf %956, %961 : vector<8x128xf32>
    %976 = arith.mulf %975, %974 : vector<8x128xf32>
    %977 = arith.mulf %976, %976 : vector<8x128xf32>
    %cst_154 = arith.constant 1.000000e+00 : f32
    %978 = vector.broadcast %cst_154 : f32 to vector<8x128xf32>
    %979 = arith.addf %978, %977 : vector<8x128xf32>
    %980 = math.rsqrt %979 : vector<8x128xf32>
    %981 = arith.mulf %976, %980 : vector<8x128xf32>
    %982 = arith.mulf %976, %878 : vector<8x128xf32>
    %983 = arith.subf %757, %982 : vector<8x128xf32>
    %984 = arith.mulf %976, %878 : vector<8x128xf32>
    %985 = arith.addf %871, %984 : vector<8x128xf32>
    %cst_155 = arith.constant 0.000000e+00 : f32
    %986 = vector.broadcast %cst_155 : f32 to vector<8x128xf32>
    %987 = arith.mulf %980, %875 : vector<8x128xf32>
    %988 = arith.mulf %981, %872 : vector<8x128xf32>
    %989 = arith.subf %987, %988 : vector<8x128xf32>
    %990 = arith.mulf %981, %875 : vector<8x128xf32>
    %991 = arith.mulf %980, %872 : vector<8x128xf32>
    %992 = arith.addf %990, %991 : vector<8x128xf32>
    %993 = arith.mulf %980, %770 : vector<8x128xf32>
    %994 = arith.mulf %981, %884 : vector<8x128xf32>
    %995 = arith.subf %993, %994 : vector<8x128xf32>
    %996 = arith.mulf %981, %770 : vector<8x128xf32>
    %997 = arith.mulf %980, %884 : vector<8x128xf32>
    %998 = arith.addf %996, %997 : vector<8x128xf32>
    %999 = arith.mulf %980, %776 : vector<8x128xf32>
    %1000 = arith.mulf %981, %890 : vector<8x128xf32>
    %1001 = arith.subf %999, %1000 : vector<8x128xf32>
    %1002 = arith.mulf %981, %776 : vector<8x128xf32>
    %1003 = arith.mulf %980, %890 : vector<8x128xf32>
    %1004 = arith.addf %1002, %1003 : vector<8x128xf32>
    %1005 = arith.mulf %980, %782 : vector<8x128xf32>
    %1006 = arith.mulf %981, %896 : vector<8x128xf32>
    %1007 = arith.subf %1005, %1006 : vector<8x128xf32>
    %1008 = arith.mulf %981, %782 : vector<8x128xf32>
    %1009 = arith.mulf %980, %896 : vector<8x128xf32>
    %1010 = arith.addf %1008, %1009 : vector<8x128xf32>
    %1011 = arith.subf %928, %814 : vector<8x128xf32>
    %cst_156 = arith.constant 2.000000e+00 : f32
    %1012 = vector.broadcast %cst_156 : f32 to vector<8x128xf32>
    %1013 = arith.mulf %1012, %935 : vector<8x128xf32>
    %cst_157 = arith.constant 0.000000e+00 : f32
    %1014 = vector.broadcast %cst_157 : f32 to vector<8x128xf32>
    %1015 = arith.cmpf oge, %1011, %1014 : vector<8x128xf32>
    %cst_158 = arith.constant 1.000000e+00 : f32
    %cst_159 = arith.constant -1.000000e+00 : f32
    %1016 = vector.broadcast %cst_158 : f32 to vector<8x128xf32>
    %1017 = vector.broadcast %cst_159 : f32 to vector<8x128xf32>
    %1018 = arith.select %1015, %1016, %1017 : vector<8x128xi1>, vector<8x128xf32>
    %1019 = math.absf %1011 : vector<8x128xf32>
    %1020 = arith.mulf %1011, %1011 : vector<8x128xf32>
    %1021 = arith.mulf %1013, %1013 : vector<8x128xf32>
    %1022 = arith.addf %1020, %1021 : vector<8x128xf32>
    %1023 = math.sqrt %1022 : vector<8x128xf32>
    %1024 = arith.addf %1019, %1023 : vector<8x128xf32>
    %cst_160 = arith.constant 1.000000e-30 : f32
    %1025 = vector.broadcast %cst_160 : f32 to vector<8x128xf32>
    %1026 = arith.addf %1024, %1025 : vector<8x128xf32>
    %1027 = tpu.reciprocal %1026 {approx = true} : vector<8x128xf32> -> vector<8x128xf32>
    %1028 = arith.mulf %1026, %1027 : vector<8x128xf32>
    %cst_161 = arith.constant 2.000000e+00 : f32
    %1029 = vector.broadcast %cst_161 : f32 to vector<8x128xf32>
    %1030 = arith.subf %1029, %1028 : vector<8x128xf32>
    %1031 = arith.mulf %1027, %1030 : vector<8x128xf32>
    %1032 = arith.mulf %1013, %1018 : vector<8x128xf32>
    %1033 = arith.mulf %1032, %1031 : vector<8x128xf32>
    %1034 = arith.mulf %1033, %1033 : vector<8x128xf32>
    %cst_162 = arith.constant 1.000000e+00 : f32
    %1035 = vector.broadcast %cst_162 : f32 to vector<8x128xf32>
    %1036 = arith.addf %1035, %1034 : vector<8x128xf32>
    %1037 = math.rsqrt %1036 : vector<8x128xf32>
    %1038 = arith.mulf %1033, %1037 : vector<8x128xf32>
    %1039 = arith.mulf %1033, %935 : vector<8x128xf32>
    %1040 = arith.subf %814, %1039 : vector<8x128xf32>
    %1041 = arith.mulf %1033, %935 : vector<8x128xf32>
    %1042 = arith.addf %928, %1041 : vector<8x128xf32>
    %cst_163 = arith.constant 0.000000e+00 : f32
    %1043 = vector.broadcast %cst_163 : f32 to vector<8x128xf32>
    %1044 = arith.mulf %1037, %932 : vector<8x128xf32>
    %1045 = arith.mulf %1038, %929 : vector<8x128xf32>
    %1046 = arith.subf %1044, %1045 : vector<8x128xf32>
    %1047 = arith.mulf %1038, %932 : vector<8x128xf32>
    %1048 = arith.mulf %1037, %929 : vector<8x128xf32>
    %1049 = arith.addf %1047, %1048 : vector<8x128xf32>
    %1050 = arith.mulf %1037, %827 : vector<8x128xf32>
    %1051 = arith.mulf %1038, %941 : vector<8x128xf32>
    %1052 = arith.subf %1050, %1051 : vector<8x128xf32>
    %1053 = arith.mulf %1038, %827 : vector<8x128xf32>
    %1054 = arith.mulf %1037, %941 : vector<8x128xf32>
    %1055 = arith.addf %1053, %1054 : vector<8x128xf32>
    %1056 = arith.mulf %1037, %833 : vector<8x128xf32>
    %1057 = arith.mulf %1038, %947 : vector<8x128xf32>
    %1058 = arith.subf %1056, %1057 : vector<8x128xf32>
    %1059 = arith.mulf %1038, %833 : vector<8x128xf32>
    %1060 = arith.mulf %1037, %947 : vector<8x128xf32>
    %1061 = arith.addf %1059, %1060 : vector<8x128xf32>
    %1062 = arith.mulf %1037, %839 : vector<8x128xf32>
    %1063 = arith.mulf %1038, %953 : vector<8x128xf32>
    %1064 = arith.subf %1062, %1063 : vector<8x128xf32>
    %1065 = arith.mulf %1038, %839 : vector<8x128xf32>
    %1066 = arith.mulf %1037, %953 : vector<8x128xf32>
    %1067 = arith.addf %1065, %1066 : vector<8x128xf32>
    %1068 = arith.subf %983, %869 : vector<8x128xf32>
    %cst_164 = arith.constant 2.000000e+00 : f32
    %1069 = vector.broadcast %cst_164 : f32 to vector<8x128xf32>
    %1070 = arith.mulf %1069, %989 : vector<8x128xf32>
    %cst_165 = arith.constant 0.000000e+00 : f32
    %1071 = vector.broadcast %cst_165 : f32 to vector<8x128xf32>
    %1072 = arith.cmpf oge, %1068, %1071 : vector<8x128xf32>
    %cst_166 = arith.constant 1.000000e+00 : f32
    %cst_167 = arith.constant -1.000000e+00 : f32
    %1073 = vector.broadcast %cst_166 : f32 to vector<8x128xf32>
    %1074 = vector.broadcast %cst_167 : f32 to vector<8x128xf32>
    %1075 = arith.select %1072, %1073, %1074 : vector<8x128xi1>, vector<8x128xf32>
    %1076 = math.absf %1068 : vector<8x128xf32>
    %1077 = arith.mulf %1068, %1068 : vector<8x128xf32>
    %1078 = arith.mulf %1070, %1070 : vector<8x128xf32>
    %1079 = arith.addf %1077, %1078 : vector<8x128xf32>
    %1080 = math.sqrt %1079 : vector<8x128xf32>
    %1081 = arith.addf %1076, %1080 : vector<8x128xf32>
    %cst_168 = arith.constant 1.000000e-30 : f32
    %1082 = vector.broadcast %cst_168 : f32 to vector<8x128xf32>
    %1083 = arith.addf %1081, %1082 : vector<8x128xf32>
    %1084 = tpu.reciprocal %1083 {approx = true} : vector<8x128xf32> -> vector<8x128xf32>
    %1085 = arith.mulf %1083, %1084 : vector<8x128xf32>
    %cst_169 = arith.constant 2.000000e+00 : f32
    %1086 = vector.broadcast %cst_169 : f32 to vector<8x128xf32>
    %1087 = arith.subf %1086, %1085 : vector<8x128xf32>
    %1088 = arith.mulf %1084, %1087 : vector<8x128xf32>
    %1089 = arith.mulf %1070, %1075 : vector<8x128xf32>
    %1090 = arith.mulf %1089, %1088 : vector<8x128xf32>
    %1091 = arith.mulf %1090, %1090 : vector<8x128xf32>
    %cst_170 = arith.constant 1.000000e+00 : f32
    %1092 = vector.broadcast %cst_170 : f32 to vector<8x128xf32>
    %1093 = arith.addf %1092, %1091 : vector<8x128xf32>
    %1094 = math.rsqrt %1093 : vector<8x128xf32>
    %1095 = arith.mulf %1090, %1094 : vector<8x128xf32>
    %1096 = arith.mulf %1090, %989 : vector<8x128xf32>
    %1097 = arith.subf %869, %1096 : vector<8x128xf32>
    %1098 = arith.mulf %1090, %989 : vector<8x128xf32>
    %1099 = arith.addf %983, %1098 : vector<8x128xf32>
    %cst_171 = arith.constant 0.000000e+00 : f32
    %1100 = vector.broadcast %cst_171 : f32 to vector<8x128xf32>
    %1101 = arith.mulf %1094, %992 : vector<8x128xf32>
    %1102 = arith.mulf %1095, %986 : vector<8x128xf32>
    %1103 = arith.subf %1101, %1102 : vector<8x128xf32>
    %1104 = arith.mulf %1095, %992 : vector<8x128xf32>
    %1105 = arith.mulf %1094, %986 : vector<8x128xf32>
    %1106 = arith.addf %1104, %1105 : vector<8x128xf32>
    %1107 = arith.mulf %1094, %881 : vector<8x128xf32>
    %1108 = arith.mulf %1095, %995 : vector<8x128xf32>
    %1109 = arith.subf %1107, %1108 : vector<8x128xf32>
    %1110 = arith.mulf %1095, %881 : vector<8x128xf32>
    %1111 = arith.mulf %1094, %995 : vector<8x128xf32>
    %1112 = arith.addf %1110, %1111 : vector<8x128xf32>
    %1113 = arith.mulf %1094, %887 : vector<8x128xf32>
    %1114 = arith.mulf %1095, %1001 : vector<8x128xf32>
    %1115 = arith.subf %1113, %1114 : vector<8x128xf32>
    %1116 = arith.mulf %1095, %887 : vector<8x128xf32>
    %1117 = arith.mulf %1094, %1001 : vector<8x128xf32>
    %1118 = arith.addf %1116, %1117 : vector<8x128xf32>
    %1119 = arith.mulf %1094, %893 : vector<8x128xf32>
    %1120 = arith.mulf %1095, %1007 : vector<8x128xf32>
    %1121 = arith.subf %1119, %1120 : vector<8x128xf32>
    %1122 = arith.mulf %1095, %893 : vector<8x128xf32>
    %1123 = arith.mulf %1094, %1007 : vector<8x128xf32>
    %1124 = arith.addf %1122, %1123 : vector<8x128xf32>
    %1125 = arith.subf %1040, %926 : vector<8x128xf32>
    %cst_172 = arith.constant 2.000000e+00 : f32
    %1126 = vector.broadcast %cst_172 : f32 to vector<8x128xf32>
    %1127 = arith.mulf %1126, %1046 : vector<8x128xf32>
    %cst_173 = arith.constant 0.000000e+00 : f32
    %1128 = vector.broadcast %cst_173 : f32 to vector<8x128xf32>
    %1129 = arith.cmpf oge, %1125, %1128 : vector<8x128xf32>
    %cst_174 = arith.constant 1.000000e+00 : f32
    %cst_175 = arith.constant -1.000000e+00 : f32
    %1130 = vector.broadcast %cst_174 : f32 to vector<8x128xf32>
    %1131 = vector.broadcast %cst_175 : f32 to vector<8x128xf32>
    %1132 = arith.select %1129, %1130, %1131 : vector<8x128xi1>, vector<8x128xf32>
    %1133 = math.absf %1125 : vector<8x128xf32>
    %1134 = arith.mulf %1125, %1125 : vector<8x128xf32>
    %1135 = arith.mulf %1127, %1127 : vector<8x128xf32>
    %1136 = arith.addf %1134, %1135 : vector<8x128xf32>
    %1137 = math.sqrt %1136 : vector<8x128xf32>
    %1138 = arith.addf %1133, %1137 : vector<8x128xf32>
    %cst_176 = arith.constant 1.000000e-30 : f32
    %1139 = vector.broadcast %cst_176 : f32 to vector<8x128xf32>
    %1140 = arith.addf %1138, %1139 : vector<8x128xf32>
    %1141 = tpu.reciprocal %1140 {approx = true} : vector<8x128xf32> -> vector<8x128xf32>
    %1142 = arith.mulf %1140, %1141 : vector<8x128xf32>
    %cst_177 = arith.constant 2.000000e+00 : f32
    %1143 = vector.broadcast %cst_177 : f32 to vector<8x128xf32>
    %1144 = arith.subf %1143, %1142 : vector<8x128xf32>
    %1145 = arith.mulf %1141, %1144 : vector<8x128xf32>
    %1146 = arith.mulf %1127, %1132 : vector<8x128xf32>
    %1147 = arith.mulf %1146, %1145 : vector<8x128xf32>
    %1148 = arith.mulf %1147, %1147 : vector<8x128xf32>
    %cst_178 = arith.constant 1.000000e+00 : f32
    %1149 = vector.broadcast %cst_178 : f32 to vector<8x128xf32>
    %1150 = arith.addf %1149, %1148 : vector<8x128xf32>
    %1151 = math.rsqrt %1150 : vector<8x128xf32>
    %1152 = arith.mulf %1147, %1151 : vector<8x128xf32>
    %1153 = arith.mulf %1147, %1046 : vector<8x128xf32>
    %1154 = arith.subf %926, %1153 : vector<8x128xf32>
    %1155 = arith.mulf %1147, %1046 : vector<8x128xf32>
    %1156 = arith.addf %1040, %1155 : vector<8x128xf32>
    %cst_179 = arith.constant 0.000000e+00 : f32
    %1157 = vector.broadcast %cst_179 : f32 to vector<8x128xf32>
    %1158 = arith.mulf %1151, %1049 : vector<8x128xf32>
    %1159 = arith.mulf %1152, %1043 : vector<8x128xf32>
    %1160 = arith.subf %1158, %1159 : vector<8x128xf32>
    %1161 = arith.mulf %1152, %1049 : vector<8x128xf32>
    %1162 = arith.mulf %1151, %1043 : vector<8x128xf32>
    %1163 = arith.addf %1161, %1162 : vector<8x128xf32>
    %1164 = arith.mulf %1151, %938 : vector<8x128xf32>
    %1165 = arith.mulf %1152, %1052 : vector<8x128xf32>
    %1166 = arith.subf %1164, %1165 : vector<8x128xf32>
    %1167 = arith.mulf %1152, %938 : vector<8x128xf32>
    %1168 = arith.mulf %1151, %1052 : vector<8x128xf32>
    %1169 = arith.addf %1167, %1168 : vector<8x128xf32>
    %1170 = arith.mulf %1151, %944 : vector<8x128xf32>
    %1171 = arith.mulf %1152, %1058 : vector<8x128xf32>
    %1172 = arith.subf %1170, %1171 : vector<8x128xf32>
    %1173 = arith.mulf %1152, %944 : vector<8x128xf32>
    %1174 = arith.mulf %1151, %1058 : vector<8x128xf32>
    %1175 = arith.addf %1173, %1174 : vector<8x128xf32>
    %1176 = arith.mulf %1151, %950 : vector<8x128xf32>
    %1177 = arith.mulf %1152, %1064 : vector<8x128xf32>
    %1178 = arith.subf %1176, %1177 : vector<8x128xf32>
    %1179 = arith.mulf %1152, %950 : vector<8x128xf32>
    %1180 = arith.mulf %1151, %1064 : vector<8x128xf32>
    %1181 = arith.addf %1179, %1180 : vector<8x128xf32>
    %1182 = arith.subf %985, %1097 : vector<8x128xf32>
    %cst_180 = arith.constant 2.000000e+00 : f32
    %1183 = vector.broadcast %cst_180 : f32 to vector<8x128xf32>
    %1184 = arith.mulf %1183, %1103 : vector<8x128xf32>
    %cst_181 = arith.constant 0.000000e+00 : f32
    %1185 = vector.broadcast %cst_181 : f32 to vector<8x128xf32>
    %1186 = arith.cmpf oge, %1182, %1185 : vector<8x128xf32>
    %cst_182 = arith.constant 1.000000e+00 : f32
    %cst_183 = arith.constant -1.000000e+00 : f32
    %1187 = vector.broadcast %cst_182 : f32 to vector<8x128xf32>
    %1188 = vector.broadcast %cst_183 : f32 to vector<8x128xf32>
    %1189 = arith.select %1186, %1187, %1188 : vector<8x128xi1>, vector<8x128xf32>
    %1190 = math.absf %1182 : vector<8x128xf32>
    %1191 = arith.mulf %1182, %1182 : vector<8x128xf32>
    %1192 = arith.mulf %1184, %1184 : vector<8x128xf32>
    %1193 = arith.addf %1191, %1192 : vector<8x128xf32>
    %1194 = math.sqrt %1193 : vector<8x128xf32>
    %1195 = arith.addf %1190, %1194 : vector<8x128xf32>
    %cst_184 = arith.constant 1.000000e-30 : f32
    %1196 = vector.broadcast %cst_184 : f32 to vector<8x128xf32>
    %1197 = arith.addf %1195, %1196 : vector<8x128xf32>
    %1198 = tpu.reciprocal %1197 {approx = true} : vector<8x128xf32> -> vector<8x128xf32>
    %1199 = arith.mulf %1197, %1198 : vector<8x128xf32>
    %cst_185 = arith.constant 2.000000e+00 : f32
    %1200 = vector.broadcast %cst_185 : f32 to vector<8x128xf32>
    %1201 = arith.subf %1200, %1199 : vector<8x128xf32>
    %1202 = arith.mulf %1198, %1201 : vector<8x128xf32>
    %1203 = arith.mulf %1184, %1189 : vector<8x128xf32>
    %1204 = arith.mulf %1203, %1202 : vector<8x128xf32>
    %1205 = arith.mulf %1204, %1204 : vector<8x128xf32>
    %cst_186 = arith.constant 1.000000e+00 : f32
    %1206 = vector.broadcast %cst_186 : f32 to vector<8x128xf32>
    %1207 = arith.addf %1206, %1205 : vector<8x128xf32>
    %1208 = math.rsqrt %1207 : vector<8x128xf32>
    %1209 = arith.mulf %1204, %1208 : vector<8x128xf32>
    %1210 = arith.mulf %1204, %1103 : vector<8x128xf32>
    %1211 = arith.subf %1097, %1210 : vector<8x128xf32>
    %1212 = arith.mulf %1204, %1103 : vector<8x128xf32>
    %1213 = arith.addf %985, %1212 : vector<8x128xf32>
    %cst_187 = arith.constant 0.000000e+00 : f32
    %1214 = vector.broadcast %cst_187 : f32 to vector<8x128xf32>
    %1215 = arith.mulf %1208, %1100 : vector<8x128xf32>
    %1216 = arith.mulf %1209, %1106 : vector<8x128xf32>
    %1217 = arith.subf %1215, %1216 : vector<8x128xf32>
    %1218 = arith.mulf %1209, %1100 : vector<8x128xf32>
    %1219 = arith.mulf %1208, %1106 : vector<8x128xf32>
    %1220 = arith.addf %1218, %1219 : vector<8x128xf32>
    %1221 = arith.mulf %1208, %1109 : vector<8x128xf32>
    %1222 = arith.mulf %1209, %998 : vector<8x128xf32>
    %1223 = arith.subf %1221, %1222 : vector<8x128xf32>
    %1224 = arith.mulf %1209, %1109 : vector<8x128xf32>
    %1225 = arith.mulf %1208, %998 : vector<8x128xf32>
    %1226 = arith.addf %1224, %1225 : vector<8x128xf32>
    %1227 = arith.mulf %1208, %1115 : vector<8x128xf32>
    %1228 = arith.mulf %1209, %1004 : vector<8x128xf32>
    %1229 = arith.subf %1227, %1228 : vector<8x128xf32>
    %1230 = arith.mulf %1209, %1115 : vector<8x128xf32>
    %1231 = arith.mulf %1208, %1004 : vector<8x128xf32>
    %1232 = arith.addf %1230, %1231 : vector<8x128xf32>
    %1233 = arith.mulf %1208, %1121 : vector<8x128xf32>
    %1234 = arith.mulf %1209, %1010 : vector<8x128xf32>
    %1235 = arith.subf %1233, %1234 : vector<8x128xf32>
    %1236 = arith.mulf %1209, %1121 : vector<8x128xf32>
    %1237 = arith.mulf %1208, %1010 : vector<8x128xf32>
    %1238 = arith.addf %1236, %1237 : vector<8x128xf32>
    %1239 = arith.subf %1042, %1154 : vector<8x128xf32>
    %cst_188 = arith.constant 2.000000e+00 : f32
    %1240 = vector.broadcast %cst_188 : f32 to vector<8x128xf32>
    %1241 = arith.mulf %1240, %1160 : vector<8x128xf32>
    %cst_189 = arith.constant 0.000000e+00 : f32
    %1242 = vector.broadcast %cst_189 : f32 to vector<8x128xf32>
    %1243 = arith.cmpf oge, %1239, %1242 : vector<8x128xf32>
    %cst_190 = arith.constant 1.000000e+00 : f32
    %cst_191 = arith.constant -1.000000e+00 : f32
    %1244 = vector.broadcast %cst_190 : f32 to vector<8x128xf32>
    %1245 = vector.broadcast %cst_191 : f32 to vector<8x128xf32>
    %1246 = arith.select %1243, %1244, %1245 : vector<8x128xi1>, vector<8x128xf32>
    %1247 = math.absf %1239 : vector<8x128xf32>
    %1248 = arith.mulf %1239, %1239 : vector<8x128xf32>
    %1249 = arith.mulf %1241, %1241 : vector<8x128xf32>
    %1250 = arith.addf %1248, %1249 : vector<8x128xf32>
    %1251 = math.sqrt %1250 : vector<8x128xf32>
    %1252 = arith.addf %1247, %1251 : vector<8x128xf32>
    %cst_192 = arith.constant 1.000000e-30 : f32
    %1253 = vector.broadcast %cst_192 : f32 to vector<8x128xf32>
    %1254 = arith.addf %1252, %1253 : vector<8x128xf32>
    %1255 = tpu.reciprocal %1254 {approx = true} : vector<8x128xf32> -> vector<8x128xf32>
    %1256 = arith.mulf %1254, %1255 : vector<8x128xf32>
    %cst_193 = arith.constant 2.000000e+00 : f32
    %1257 = vector.broadcast %cst_193 : f32 to vector<8x128xf32>
    %1258 = arith.subf %1257, %1256 : vector<8x128xf32>
    %1259 = arith.mulf %1255, %1258 : vector<8x128xf32>
    %1260 = arith.mulf %1241, %1246 : vector<8x128xf32>
    %1261 = arith.mulf %1260, %1259 : vector<8x128xf32>
    %1262 = arith.mulf %1261, %1261 : vector<8x128xf32>
    %cst_194 = arith.constant 1.000000e+00 : f32
    %1263 = vector.broadcast %cst_194 : f32 to vector<8x128xf32>
    %1264 = arith.addf %1263, %1262 : vector<8x128xf32>
    %1265 = math.rsqrt %1264 : vector<8x128xf32>
    %1266 = arith.mulf %1261, %1265 : vector<8x128xf32>
    %1267 = arith.mulf %1261, %1160 : vector<8x128xf32>
    %1268 = arith.subf %1154, %1267 : vector<8x128xf32>
    %1269 = arith.mulf %1261, %1160 : vector<8x128xf32>
    %1270 = arith.addf %1042, %1269 : vector<8x128xf32>
    %cst_195 = arith.constant 0.000000e+00 : f32
    %1271 = vector.broadcast %cst_195 : f32 to vector<8x128xf32>
    %1272 = arith.mulf %1265, %1157 : vector<8x128xf32>
    %1273 = arith.mulf %1266, %1163 : vector<8x128xf32>
    %1274 = arith.subf %1272, %1273 : vector<8x128xf32>
    %1275 = arith.mulf %1266, %1157 : vector<8x128xf32>
    %1276 = arith.mulf %1265, %1163 : vector<8x128xf32>
    %1277 = arith.addf %1275, %1276 : vector<8x128xf32>
    %1278 = arith.mulf %1265, %1166 : vector<8x128xf32>
    %1279 = arith.mulf %1266, %1055 : vector<8x128xf32>
    %1280 = arith.subf %1278, %1279 : vector<8x128xf32>
    %1281 = arith.mulf %1266, %1166 : vector<8x128xf32>
    %1282 = arith.mulf %1265, %1055 : vector<8x128xf32>
    %1283 = arith.addf %1281, %1282 : vector<8x128xf32>
    %1284 = arith.mulf %1265, %1172 : vector<8x128xf32>
    %1285 = arith.mulf %1266, %1061 : vector<8x128xf32>
    %1286 = arith.subf %1284, %1285 : vector<8x128xf32>
    %1287 = arith.mulf %1266, %1172 : vector<8x128xf32>
    %1288 = arith.mulf %1265, %1061 : vector<8x128xf32>
    %1289 = arith.addf %1287, %1288 : vector<8x128xf32>
    %1290 = arith.mulf %1265, %1178 : vector<8x128xf32>
    %1291 = arith.mulf %1266, %1067 : vector<8x128xf32>
    %1292 = arith.subf %1290, %1291 : vector<8x128xf32>
    %1293 = arith.mulf %1266, %1178 : vector<8x128xf32>
    %1294 = arith.mulf %1265, %1067 : vector<8x128xf32>
    %1295 = arith.addf %1293, %1294 : vector<8x128xf32>
    %1296 = arith.subf %1213, %1099 : vector<8x128xf32>
    %cst_196 = arith.constant 2.000000e+00 : f32
    %1297 = vector.broadcast %cst_196 : f32 to vector<8x128xf32>
    %1298 = arith.mulf %1297, %1220 : vector<8x128xf32>
    %cst_197 = arith.constant 0.000000e+00 : f32
    %1299 = vector.broadcast %cst_197 : f32 to vector<8x128xf32>
    %1300 = arith.cmpf oge, %1296, %1299 : vector<8x128xf32>
    %cst_198 = arith.constant 1.000000e+00 : f32
    %cst_199 = arith.constant -1.000000e+00 : f32
    %1301 = vector.broadcast %cst_198 : f32 to vector<8x128xf32>
    %1302 = vector.broadcast %cst_199 : f32 to vector<8x128xf32>
    %1303 = arith.select %1300, %1301, %1302 : vector<8x128xi1>, vector<8x128xf32>
    %1304 = math.absf %1296 : vector<8x128xf32>
    %1305 = arith.mulf %1296, %1296 : vector<8x128xf32>
    %1306 = arith.mulf %1298, %1298 : vector<8x128xf32>
    %1307 = arith.addf %1305, %1306 : vector<8x128xf32>
    %1308 = math.sqrt %1307 : vector<8x128xf32>
    %1309 = arith.addf %1304, %1308 : vector<8x128xf32>
    %cst_200 = arith.constant 1.000000e-30 : f32
    %1310 = vector.broadcast %cst_200 : f32 to vector<8x128xf32>
    %1311 = arith.addf %1309, %1310 : vector<8x128xf32>
    %1312 = tpu.reciprocal %1311 {approx = true} : vector<8x128xf32> -> vector<8x128xf32>
    %1313 = arith.mulf %1311, %1312 : vector<8x128xf32>
    %cst_201 = arith.constant 2.000000e+00 : f32
    %1314 = vector.broadcast %cst_201 : f32 to vector<8x128xf32>
    %1315 = arith.subf %1314, %1313 : vector<8x128xf32>
    %1316 = arith.mulf %1312, %1315 : vector<8x128xf32>
    %1317 = arith.mulf %1298, %1303 : vector<8x128xf32>
    %1318 = arith.mulf %1317, %1316 : vector<8x128xf32>
    %1319 = arith.mulf %1318, %1318 : vector<8x128xf32>
    %cst_202 = arith.constant 1.000000e+00 : f32
    %1320 = vector.broadcast %cst_202 : f32 to vector<8x128xf32>
    %1321 = arith.addf %1320, %1319 : vector<8x128xf32>
    %1322 = math.rsqrt %1321 : vector<8x128xf32>
    %1323 = arith.mulf %1318, %1322 : vector<8x128xf32>
    %1324 = arith.mulf %1318, %1220 : vector<8x128xf32>
    %1325 = arith.subf %1099, %1324 : vector<8x128xf32>
    %1326 = arith.mulf %1318, %1220 : vector<8x128xf32>
    %1327 = arith.addf %1213, %1326 : vector<8x128xf32>
    %cst_203 = arith.constant 0.000000e+00 : f32
    %1328 = vector.broadcast %cst_203 : f32 to vector<8x128xf32>
    %1329 = arith.mulf %1322, %1217 : vector<8x128xf32>
    %1330 = arith.mulf %1323, %1214 : vector<8x128xf32>
    %1331 = arith.subf %1329, %1330 : vector<8x128xf32>
    %1332 = arith.mulf %1323, %1217 : vector<8x128xf32>
    %1333 = arith.mulf %1322, %1214 : vector<8x128xf32>
    %1334 = arith.addf %1332, %1333 : vector<8x128xf32>
    %1335 = arith.mulf %1322, %1112 : vector<8x128xf32>
    %1336 = arith.mulf %1323, %1226 : vector<8x128xf32>
    %1337 = arith.subf %1335, %1336 : vector<8x128xf32>
    %1338 = arith.mulf %1323, %1112 : vector<8x128xf32>
    %1339 = arith.mulf %1322, %1226 : vector<8x128xf32>
    %1340 = arith.addf %1338, %1339 : vector<8x128xf32>
    %1341 = arith.mulf %1322, %1118 : vector<8x128xf32>
    %1342 = arith.mulf %1323, %1232 : vector<8x128xf32>
    %1343 = arith.subf %1341, %1342 : vector<8x128xf32>
    %1344 = arith.mulf %1323, %1118 : vector<8x128xf32>
    %1345 = arith.mulf %1322, %1232 : vector<8x128xf32>
    %1346 = arith.addf %1344, %1345 : vector<8x128xf32>
    %1347 = arith.mulf %1322, %1124 : vector<8x128xf32>
    %1348 = arith.mulf %1323, %1238 : vector<8x128xf32>
    %1349 = arith.subf %1347, %1348 : vector<8x128xf32>
    %1350 = arith.mulf %1323, %1124 : vector<8x128xf32>
    %1351 = arith.mulf %1322, %1238 : vector<8x128xf32>
    %1352 = arith.addf %1350, %1351 : vector<8x128xf32>
    %1353 = arith.subf %1270, %1156 : vector<8x128xf32>
    %cst_204 = arith.constant 2.000000e+00 : f32
    %1354 = vector.broadcast %cst_204 : f32 to vector<8x128xf32>
    %1355 = arith.mulf %1354, %1277 : vector<8x128xf32>
    %cst_205 = arith.constant 0.000000e+00 : f32
    %1356 = vector.broadcast %cst_205 : f32 to vector<8x128xf32>
    %1357 = arith.cmpf oge, %1353, %1356 : vector<8x128xf32>
    %cst_206 = arith.constant 1.000000e+00 : f32
    %cst_207 = arith.constant -1.000000e+00 : f32
    %1358 = vector.broadcast %cst_206 : f32 to vector<8x128xf32>
    %1359 = vector.broadcast %cst_207 : f32 to vector<8x128xf32>
    %1360 = arith.select %1357, %1358, %1359 : vector<8x128xi1>, vector<8x128xf32>
    %1361 = math.absf %1353 : vector<8x128xf32>
    %1362 = arith.mulf %1353, %1353 : vector<8x128xf32>
    %1363 = arith.mulf %1355, %1355 : vector<8x128xf32>
    %1364 = arith.addf %1362, %1363 : vector<8x128xf32>
    %1365 = math.sqrt %1364 : vector<8x128xf32>
    %1366 = arith.addf %1361, %1365 : vector<8x128xf32>
    %cst_208 = arith.constant 1.000000e-30 : f32
    %1367 = vector.broadcast %cst_208 : f32 to vector<8x128xf32>
    %1368 = arith.addf %1366, %1367 : vector<8x128xf32>
    %1369 = tpu.reciprocal %1368 {approx = true} : vector<8x128xf32> -> vector<8x128xf32>
    %1370 = arith.mulf %1368, %1369 : vector<8x128xf32>
    %cst_209 = arith.constant 2.000000e+00 : f32
    %1371 = vector.broadcast %cst_209 : f32 to vector<8x128xf32>
    %1372 = arith.subf %1371, %1370 : vector<8x128xf32>
    %1373 = arith.mulf %1369, %1372 : vector<8x128xf32>
    %1374 = arith.mulf %1355, %1360 : vector<8x128xf32>
    %1375 = arith.mulf %1374, %1373 : vector<8x128xf32>
    %1376 = arith.mulf %1375, %1375 : vector<8x128xf32>
    %cst_210 = arith.constant 1.000000e+00 : f32
    %1377 = vector.broadcast %cst_210 : f32 to vector<8x128xf32>
    %1378 = arith.addf %1377, %1376 : vector<8x128xf32>
    %1379 = math.rsqrt %1378 : vector<8x128xf32>
    %1380 = arith.mulf %1375, %1379 : vector<8x128xf32>
    %1381 = arith.mulf %1375, %1277 : vector<8x128xf32>
    %1382 = arith.subf %1156, %1381 : vector<8x128xf32>
    %1383 = arith.mulf %1375, %1277 : vector<8x128xf32>
    %1384 = arith.addf %1270, %1383 : vector<8x128xf32>
    %cst_211 = arith.constant 0.000000e+00 : f32
    %1385 = vector.broadcast %cst_211 : f32 to vector<8x128xf32>
    %1386 = arith.mulf %1379, %1274 : vector<8x128xf32>
    %1387 = arith.mulf %1380, %1271 : vector<8x128xf32>
    %1388 = arith.subf %1386, %1387 : vector<8x128xf32>
    %1389 = arith.mulf %1380, %1274 : vector<8x128xf32>
    %1390 = arith.mulf %1379, %1271 : vector<8x128xf32>
    %1391 = arith.addf %1389, %1390 : vector<8x128xf32>
    %1392 = arith.mulf %1379, %1169 : vector<8x128xf32>
    %1393 = arith.mulf %1380, %1283 : vector<8x128xf32>
    %1394 = arith.subf %1392, %1393 : vector<8x128xf32>
    %1395 = arith.mulf %1380, %1169 : vector<8x128xf32>
    %1396 = arith.mulf %1379, %1283 : vector<8x128xf32>
    %1397 = arith.addf %1395, %1396 : vector<8x128xf32>
    %1398 = arith.mulf %1379, %1175 : vector<8x128xf32>
    %1399 = arith.mulf %1380, %1289 : vector<8x128xf32>
    %1400 = arith.subf %1398, %1399 : vector<8x128xf32>
    %1401 = arith.mulf %1380, %1175 : vector<8x128xf32>
    %1402 = arith.mulf %1379, %1289 : vector<8x128xf32>
    %1403 = arith.addf %1401, %1402 : vector<8x128xf32>
    %1404 = arith.mulf %1379, %1181 : vector<8x128xf32>
    %1405 = arith.mulf %1380, %1295 : vector<8x128xf32>
    %1406 = arith.subf %1404, %1405 : vector<8x128xf32>
    %1407 = arith.mulf %1380, %1181 : vector<8x128xf32>
    %1408 = arith.mulf %1379, %1295 : vector<8x128xf32>
    %1409 = arith.addf %1407, %1408 : vector<8x128xf32>
    %1410 = arith.subf %1325, %1211 : vector<8x128xf32>
    %cst_212 = arith.constant 2.000000e+00 : f32
    %1411 = vector.broadcast %cst_212 : f32 to vector<8x128xf32>
    %1412 = arith.mulf %1411, %1331 : vector<8x128xf32>
    %cst_213 = arith.constant 0.000000e+00 : f32
    %1413 = vector.broadcast %cst_213 : f32 to vector<8x128xf32>
    %1414 = arith.cmpf oge, %1410, %1413 : vector<8x128xf32>
    %cst_214 = arith.constant 1.000000e+00 : f32
    %cst_215 = arith.constant -1.000000e+00 : f32
    %1415 = vector.broadcast %cst_214 : f32 to vector<8x128xf32>
    %1416 = vector.broadcast %cst_215 : f32 to vector<8x128xf32>
    %1417 = arith.select %1414, %1415, %1416 : vector<8x128xi1>, vector<8x128xf32>
    %1418 = math.absf %1410 : vector<8x128xf32>
    %1419 = arith.mulf %1410, %1410 : vector<8x128xf32>
    %1420 = arith.mulf %1412, %1412 : vector<8x128xf32>
    %1421 = arith.addf %1419, %1420 : vector<8x128xf32>
    %1422 = math.sqrt %1421 : vector<8x128xf32>
    %1423 = arith.addf %1418, %1422 : vector<8x128xf32>
    %cst_216 = arith.constant 1.000000e-30 : f32
    %1424 = vector.broadcast %cst_216 : f32 to vector<8x128xf32>
    %1425 = arith.addf %1423, %1424 : vector<8x128xf32>
    %1426 = tpu.reciprocal %1425 {approx = true} : vector<8x128xf32> -> vector<8x128xf32>
    %1427 = arith.mulf %1425, %1426 : vector<8x128xf32>
    %cst_217 = arith.constant 2.000000e+00 : f32
    %1428 = vector.broadcast %cst_217 : f32 to vector<8x128xf32>
    %1429 = arith.subf %1428, %1427 : vector<8x128xf32>
    %1430 = arith.mulf %1426, %1429 : vector<8x128xf32>
    %1431 = arith.mulf %1412, %1417 : vector<8x128xf32>
    %1432 = arith.mulf %1431, %1430 : vector<8x128xf32>
    %1433 = arith.mulf %1432, %1432 : vector<8x128xf32>
    %cst_218 = arith.constant 1.000000e+00 : f32
    %1434 = vector.broadcast %cst_218 : f32 to vector<8x128xf32>
    %1435 = arith.addf %1434, %1433 : vector<8x128xf32>
    %1436 = math.rsqrt %1435 : vector<8x128xf32>
    %1437 = arith.mulf %1432, %1436 : vector<8x128xf32>
    %1438 = arith.mulf %1432, %1331 : vector<8x128xf32>
    %1439 = arith.subf %1211, %1438 : vector<8x128xf32>
    %1440 = arith.mulf %1432, %1331 : vector<8x128xf32>
    %1441 = arith.addf %1325, %1440 : vector<8x128xf32>
    %cst_219 = arith.constant 0.000000e+00 : f32
    %1442 = vector.broadcast %cst_219 : f32 to vector<8x128xf32>
    %1443 = arith.mulf %1436, %1334 : vector<8x128xf32>
    %1444 = arith.mulf %1437, %1328 : vector<8x128xf32>
    %1445 = arith.subf %1443, %1444 : vector<8x128xf32>
    %1446 = arith.mulf %1437, %1334 : vector<8x128xf32>
    %1447 = arith.mulf %1436, %1328 : vector<8x128xf32>
    %1448 = arith.addf %1446, %1447 : vector<8x128xf32>
    %1449 = arith.mulf %1436, %1223 : vector<8x128xf32>
    %1450 = arith.mulf %1437, %1337 : vector<8x128xf32>
    %1451 = arith.subf %1449, %1450 : vector<8x128xf32>
    %1452 = arith.mulf %1437, %1223 : vector<8x128xf32>
    %1453 = arith.mulf %1436, %1337 : vector<8x128xf32>
    %1454 = arith.addf %1452, %1453 : vector<8x128xf32>
    %1455 = arith.mulf %1436, %1229 : vector<8x128xf32>
    %1456 = arith.mulf %1437, %1343 : vector<8x128xf32>
    %1457 = arith.subf %1455, %1456 : vector<8x128xf32>
    %1458 = arith.mulf %1437, %1229 : vector<8x128xf32>
    %1459 = arith.mulf %1436, %1343 : vector<8x128xf32>
    %1460 = arith.addf %1458, %1459 : vector<8x128xf32>
    %1461 = arith.mulf %1436, %1235 : vector<8x128xf32>
    %1462 = arith.mulf %1437, %1349 : vector<8x128xf32>
    %1463 = arith.subf %1461, %1462 : vector<8x128xf32>
    %1464 = arith.mulf %1437, %1235 : vector<8x128xf32>
    %1465 = arith.mulf %1436, %1349 : vector<8x128xf32>
    %1466 = arith.addf %1464, %1465 : vector<8x128xf32>
    %1467 = arith.subf %1382, %1268 : vector<8x128xf32>
    %cst_220 = arith.constant 2.000000e+00 : f32
    %1468 = vector.broadcast %cst_220 : f32 to vector<8x128xf32>
    %1469 = arith.mulf %1468, %1388 : vector<8x128xf32>
    %cst_221 = arith.constant 0.000000e+00 : f32
    %1470 = vector.broadcast %cst_221 : f32 to vector<8x128xf32>
    %1471 = arith.cmpf oge, %1467, %1470 : vector<8x128xf32>
    %cst_222 = arith.constant 1.000000e+00 : f32
    %cst_223 = arith.constant -1.000000e+00 : f32
    %1472 = vector.broadcast %cst_222 : f32 to vector<8x128xf32>
    %1473 = vector.broadcast %cst_223 : f32 to vector<8x128xf32>
    %1474 = arith.select %1471, %1472, %1473 : vector<8x128xi1>, vector<8x128xf32>
    %1475 = math.absf %1467 : vector<8x128xf32>
    %1476 = arith.mulf %1467, %1467 : vector<8x128xf32>
    %1477 = arith.mulf %1469, %1469 : vector<8x128xf32>
    %1478 = arith.addf %1476, %1477 : vector<8x128xf32>
    %1479 = math.sqrt %1478 : vector<8x128xf32>
    %1480 = arith.addf %1475, %1479 : vector<8x128xf32>
    %cst_224 = arith.constant 1.000000e-30 : f32
    %1481 = vector.broadcast %cst_224 : f32 to vector<8x128xf32>
    %1482 = arith.addf %1480, %1481 : vector<8x128xf32>
    %1483 = tpu.reciprocal %1482 {approx = true} : vector<8x128xf32> -> vector<8x128xf32>
    %1484 = arith.mulf %1482, %1483 : vector<8x128xf32>
    %cst_225 = arith.constant 2.000000e+00 : f32
    %1485 = vector.broadcast %cst_225 : f32 to vector<8x128xf32>
    %1486 = arith.subf %1485, %1484 : vector<8x128xf32>
    %1487 = arith.mulf %1483, %1486 : vector<8x128xf32>
    %1488 = arith.mulf %1469, %1474 : vector<8x128xf32>
    %1489 = arith.mulf %1488, %1487 : vector<8x128xf32>
    %1490 = arith.mulf %1489, %1489 : vector<8x128xf32>
    %cst_226 = arith.constant 1.000000e+00 : f32
    %1491 = vector.broadcast %cst_226 : f32 to vector<8x128xf32>
    %1492 = arith.addf %1491, %1490 : vector<8x128xf32>
    %1493 = math.rsqrt %1492 : vector<8x128xf32>
    %1494 = arith.mulf %1489, %1493 : vector<8x128xf32>
    %1495 = arith.mulf %1489, %1388 : vector<8x128xf32>
    %1496 = arith.subf %1268, %1495 : vector<8x128xf32>
    %1497 = arith.mulf %1489, %1388 : vector<8x128xf32>
    %1498 = arith.addf %1382, %1497 : vector<8x128xf32>
    %cst_227 = arith.constant 0.000000e+00 : f32
    %1499 = vector.broadcast %cst_227 : f32 to vector<8x128xf32>
    %1500 = arith.mulf %1493, %1391 : vector<8x128xf32>
    %1501 = arith.mulf %1494, %1385 : vector<8x128xf32>
    %1502 = arith.subf %1500, %1501 : vector<8x128xf32>
    %1503 = arith.mulf %1494, %1391 : vector<8x128xf32>
    %1504 = arith.mulf %1493, %1385 : vector<8x128xf32>
    %1505 = arith.addf %1503, %1504 : vector<8x128xf32>
    %1506 = arith.mulf %1493, %1280 : vector<8x128xf32>
    %1507 = arith.mulf %1494, %1394 : vector<8x128xf32>
    %1508 = arith.subf %1506, %1507 : vector<8x128xf32>
    %1509 = arith.mulf %1494, %1280 : vector<8x128xf32>
    %1510 = arith.mulf %1493, %1394 : vector<8x128xf32>
    %1511 = arith.addf %1509, %1510 : vector<8x128xf32>
    %1512 = arith.mulf %1493, %1286 : vector<8x128xf32>
    %1513 = arith.mulf %1494, %1400 : vector<8x128xf32>
    %1514 = arith.subf %1512, %1513 : vector<8x128xf32>
    %1515 = arith.mulf %1494, %1286 : vector<8x128xf32>
    %1516 = arith.mulf %1493, %1400 : vector<8x128xf32>
    %1517 = arith.addf %1515, %1516 : vector<8x128xf32>
    %1518 = arith.mulf %1493, %1292 : vector<8x128xf32>
    %1519 = arith.mulf %1494, %1406 : vector<8x128xf32>
    %1520 = arith.subf %1518, %1519 : vector<8x128xf32>
    %1521 = arith.mulf %1494, %1292 : vector<8x128xf32>
    %1522 = arith.mulf %1493, %1406 : vector<8x128xf32>
    %1523 = arith.addf %1521, %1522 : vector<8x128xf32>
    %1524 = arith.subf %1327, %1439 : vector<8x128xf32>
    %cst_228 = arith.constant 2.000000e+00 : f32
    %1525 = vector.broadcast %cst_228 : f32 to vector<8x128xf32>
    %1526 = arith.mulf %1525, %1445 : vector<8x128xf32>
    %cst_229 = arith.constant 0.000000e+00 : f32
    %1527 = vector.broadcast %cst_229 : f32 to vector<8x128xf32>
    %1528 = arith.cmpf oge, %1524, %1527 : vector<8x128xf32>
    %cst_230 = arith.constant 1.000000e+00 : f32
    %cst_231 = arith.constant -1.000000e+00 : f32
    %1529 = vector.broadcast %cst_230 : f32 to vector<8x128xf32>
    %1530 = vector.broadcast %cst_231 : f32 to vector<8x128xf32>
    %1531 = arith.select %1528, %1529, %1530 : vector<8x128xi1>, vector<8x128xf32>
    %1532 = math.absf %1524 : vector<8x128xf32>
    %1533 = arith.mulf %1524, %1524 : vector<8x128xf32>
    %1534 = arith.mulf %1526, %1526 : vector<8x128xf32>
    %1535 = arith.addf %1533, %1534 : vector<8x128xf32>
    %1536 = math.sqrt %1535 : vector<8x128xf32>
    %1537 = arith.addf %1532, %1536 : vector<8x128xf32>
    %cst_232 = arith.constant 1.000000e-30 : f32
    %1538 = vector.broadcast %cst_232 : f32 to vector<8x128xf32>
    %1539 = arith.addf %1537, %1538 : vector<8x128xf32>
    %1540 = tpu.reciprocal %1539 {approx = true} : vector<8x128xf32> -> vector<8x128xf32>
    %1541 = arith.mulf %1539, %1540 : vector<8x128xf32>
    %cst_233 = arith.constant 2.000000e+00 : f32
    %1542 = vector.broadcast %cst_233 : f32 to vector<8x128xf32>
    %1543 = arith.subf %1542, %1541 : vector<8x128xf32>
    %1544 = arith.mulf %1540, %1543 : vector<8x128xf32>
    %1545 = arith.mulf %1526, %1531 : vector<8x128xf32>
    %1546 = arith.mulf %1545, %1544 : vector<8x128xf32>
    %1547 = arith.mulf %1546, %1546 : vector<8x128xf32>
    %cst_234 = arith.constant 1.000000e+00 : f32
    %1548 = vector.broadcast %cst_234 : f32 to vector<8x128xf32>
    %1549 = arith.addf %1548, %1547 : vector<8x128xf32>
    %1550 = math.rsqrt %1549 : vector<8x128xf32>
    %1551 = arith.mulf %1546, %1550 : vector<8x128xf32>
    %1552 = arith.mulf %1546, %1445 : vector<8x128xf32>
    %1553 = arith.subf %1439, %1552 : vector<8x128xf32>
    %1554 = arith.mulf %1546, %1445 : vector<8x128xf32>
    %1555 = arith.addf %1327, %1554 : vector<8x128xf32>
    %1556 = arith.mulf %1551, %1442 : vector<8x128xf32>
    %1557 = arith.mulf %1550, %1448 : vector<8x128xf32>
    %1558 = arith.addf %1556, %1557 : vector<8x128xf32>
    %1559 = arith.mulf %1550, %1451 : vector<8x128xf32>
    %1560 = arith.mulf %1551, %1340 : vector<8x128xf32>
    %1561 = arith.subf %1559, %1560 : vector<8x128xf32>
    %1562 = arith.mulf %1551, %1451 : vector<8x128xf32>
    %1563 = arith.mulf %1550, %1340 : vector<8x128xf32>
    %1564 = arith.addf %1562, %1563 : vector<8x128xf32>
    %1565 = arith.mulf %1550, %1457 : vector<8x128xf32>
    %1566 = arith.mulf %1551, %1346 : vector<8x128xf32>
    %1567 = arith.subf %1565, %1566 : vector<8x128xf32>
    %1568 = arith.mulf %1551, %1457 : vector<8x128xf32>
    %1569 = arith.mulf %1550, %1346 : vector<8x128xf32>
    %1570 = arith.addf %1568, %1569 : vector<8x128xf32>
    %1571 = arith.mulf %1550, %1463 : vector<8x128xf32>
    %1572 = arith.mulf %1551, %1352 : vector<8x128xf32>
    %1573 = arith.subf %1571, %1572 : vector<8x128xf32>
    %1574 = arith.mulf %1551, %1463 : vector<8x128xf32>
    %1575 = arith.mulf %1550, %1352 : vector<8x128xf32>
    %1576 = arith.addf %1574, %1575 : vector<8x128xf32>
    %1577 = arith.subf %1384, %1496 : vector<8x128xf32>
    %cst_235 = arith.constant 2.000000e+00 : f32
    %1578 = vector.broadcast %cst_235 : f32 to vector<8x128xf32>
    %1579 = arith.mulf %1578, %1502 : vector<8x128xf32>
    %cst_236 = arith.constant 0.000000e+00 : f32
    %1580 = vector.broadcast %cst_236 : f32 to vector<8x128xf32>
    %1581 = arith.cmpf oge, %1577, %1580 : vector<8x128xf32>
    %cst_237 = arith.constant 1.000000e+00 : f32
    %cst_238 = arith.constant -1.000000e+00 : f32
    %1582 = vector.broadcast %cst_237 : f32 to vector<8x128xf32>
    %1583 = vector.broadcast %cst_238 : f32 to vector<8x128xf32>
    %1584 = arith.select %1581, %1582, %1583 : vector<8x128xi1>, vector<8x128xf32>
    %1585 = math.absf %1577 : vector<8x128xf32>
    %1586 = arith.mulf %1577, %1577 : vector<8x128xf32>
    %1587 = arith.mulf %1579, %1579 : vector<8x128xf32>
    %1588 = arith.addf %1586, %1587 : vector<8x128xf32>
    %1589 = math.sqrt %1588 : vector<8x128xf32>
    %1590 = arith.addf %1585, %1589 : vector<8x128xf32>
    %cst_239 = arith.constant 1.000000e-30 : f32
    %1591 = vector.broadcast %cst_239 : f32 to vector<8x128xf32>
    %1592 = arith.addf %1590, %1591 : vector<8x128xf32>
    %1593 = tpu.reciprocal %1592 {approx = true} : vector<8x128xf32> -> vector<8x128xf32>
    %1594 = arith.mulf %1592, %1593 : vector<8x128xf32>
    %cst_240 = arith.constant 2.000000e+00 : f32
    %1595 = vector.broadcast %cst_240 : f32 to vector<8x128xf32>
    %1596 = arith.subf %1595, %1594 : vector<8x128xf32>
    %1597 = arith.mulf %1593, %1596 : vector<8x128xf32>
    %1598 = arith.mulf %1579, %1584 : vector<8x128xf32>
    %1599 = arith.mulf %1598, %1597 : vector<8x128xf32>
    %1600 = arith.mulf %1599, %1599 : vector<8x128xf32>
    %cst_241 = arith.constant 1.000000e+00 : f32
    %1601 = vector.broadcast %cst_241 : f32 to vector<8x128xf32>
    %1602 = arith.addf %1601, %1600 : vector<8x128xf32>
    %1603 = math.rsqrt %1602 : vector<8x128xf32>
    %1604 = arith.mulf %1599, %1603 : vector<8x128xf32>
    %1605 = arith.mulf %1599, %1502 : vector<8x128xf32>
    %1606 = arith.subf %1496, %1605 : vector<8x128xf32>
    %1607 = arith.mulf %1599, %1502 : vector<8x128xf32>
    %1608 = arith.addf %1384, %1607 : vector<8x128xf32>
    %1609 = arith.mulf %1604, %1499 : vector<8x128xf32>
    %1610 = arith.mulf %1603, %1505 : vector<8x128xf32>
    %1611 = arith.addf %1609, %1610 : vector<8x128xf32>
    %1612 = arith.mulf %1603, %1508 : vector<8x128xf32>
    %1613 = arith.mulf %1604, %1397 : vector<8x128xf32>
    %1614 = arith.subf %1612, %1613 : vector<8x128xf32>
    %1615 = arith.mulf %1604, %1508 : vector<8x128xf32>
    %1616 = arith.mulf %1603, %1397 : vector<8x128xf32>
    %1617 = arith.addf %1615, %1616 : vector<8x128xf32>
    %1618 = arith.mulf %1603, %1514 : vector<8x128xf32>
    %1619 = arith.mulf %1604, %1403 : vector<8x128xf32>
    %1620 = arith.subf %1618, %1619 : vector<8x128xf32>
    %1621 = arith.mulf %1604, %1514 : vector<8x128xf32>
    %1622 = arith.mulf %1603, %1403 : vector<8x128xf32>
    %1623 = arith.addf %1621, %1622 : vector<8x128xf32>
    %1624 = arith.mulf %1603, %1520 : vector<8x128xf32>
    %1625 = arith.mulf %1604, %1409 : vector<8x128xf32>
    %1626 = arith.subf %1624, %1625 : vector<8x128xf32>
    %1627 = arith.mulf %1604, %1520 : vector<8x128xf32>
    %1628 = arith.mulf %1603, %1409 : vector<8x128xf32>
    %1629 = arith.addf %1627, %1628 : vector<8x128xf32>
    %1630 = arith.subf %1555, %1441 : vector<8x128xf32>
    %cst_242 = arith.constant 2.000000e+00 : f32
    %1631 = vector.broadcast %cst_242 : f32 to vector<8x128xf32>
    %1632 = arith.mulf %1631, %1558 : vector<8x128xf32>
    %cst_243 = arith.constant 0.000000e+00 : f32
    %1633 = vector.broadcast %cst_243 : f32 to vector<8x128xf32>
    %1634 = arith.cmpf oge, %1630, %1633 : vector<8x128xf32>
    %cst_244 = arith.constant 1.000000e+00 : f32
    %cst_245 = arith.constant -1.000000e+00 : f32
    %1635 = vector.broadcast %cst_244 : f32 to vector<8x128xf32>
    %1636 = vector.broadcast %cst_245 : f32 to vector<8x128xf32>
    %1637 = arith.select %1634, %1635, %1636 : vector<8x128xi1>, vector<8x128xf32>
    %1638 = math.absf %1630 : vector<8x128xf32>
    %1639 = arith.mulf %1630, %1630 : vector<8x128xf32>
    %1640 = arith.mulf %1632, %1632 : vector<8x128xf32>
    %1641 = arith.addf %1639, %1640 : vector<8x128xf32>
    %1642 = math.sqrt %1641 : vector<8x128xf32>
    %1643 = arith.addf %1638, %1642 : vector<8x128xf32>
    %cst_246 = arith.constant 1.000000e-30 : f32
    %1644 = vector.broadcast %cst_246 : f32 to vector<8x128xf32>
    %1645 = arith.addf %1643, %1644 : vector<8x128xf32>
    %1646 = tpu.reciprocal %1645 {approx = true} : vector<8x128xf32> -> vector<8x128xf32>
    %1647 = arith.mulf %1645, %1646 : vector<8x128xf32>
    %cst_247 = arith.constant 2.000000e+00 : f32
    %1648 = vector.broadcast %cst_247 : f32 to vector<8x128xf32>
    %1649 = arith.subf %1648, %1647 : vector<8x128xf32>
    %1650 = arith.mulf %1646, %1649 : vector<8x128xf32>
    %1651 = arith.mulf %1632, %1637 : vector<8x128xf32>
    %1652 = arith.mulf %1651, %1650 : vector<8x128xf32>
    %1653 = arith.mulf %1652, %1652 : vector<8x128xf32>
    %cst_248 = arith.constant 1.000000e+00 : f32
    %1654 = vector.broadcast %cst_248 : f32 to vector<8x128xf32>
    %1655 = arith.addf %1654, %1653 : vector<8x128xf32>
    %1656 = math.rsqrt %1655 : vector<8x128xf32>
    %1657 = arith.mulf %1652, %1656 : vector<8x128xf32>
    %1658 = arith.mulf %1652, %1558 : vector<8x128xf32>
    %1659 = arith.subf %1441, %1658 : vector<8x128xf32>
    %1660 = arith.mulf %1652, %1558 : vector<8x128xf32>
    %1661 = arith.addf %1555, %1660 : vector<8x128xf32>
    %1662 = arith.mulf %1656, %1454 : vector<8x128xf32>
    %1663 = arith.mulf %1657, %1564 : vector<8x128xf32>
    %1664 = arith.subf %1662, %1663 : vector<8x128xf32>
    %1665 = arith.mulf %1657, %1454 : vector<8x128xf32>
    %1666 = arith.mulf %1656, %1564 : vector<8x128xf32>
    %1667 = arith.addf %1665, %1666 : vector<8x128xf32>
    %1668 = arith.mulf %1656, %1460 : vector<8x128xf32>
    %1669 = arith.mulf %1657, %1570 : vector<8x128xf32>
    %1670 = arith.subf %1668, %1669 : vector<8x128xf32>
    %1671 = arith.mulf %1657, %1460 : vector<8x128xf32>
    %1672 = arith.mulf %1656, %1570 : vector<8x128xf32>
    %1673 = arith.addf %1671, %1672 : vector<8x128xf32>
    %1674 = arith.mulf %1656, %1466 : vector<8x128xf32>
    %1675 = arith.mulf %1657, %1576 : vector<8x128xf32>
    %1676 = arith.subf %1674, %1675 : vector<8x128xf32>
    %1677 = arith.mulf %1657, %1466 : vector<8x128xf32>
    %1678 = arith.mulf %1656, %1576 : vector<8x128xf32>
    %1679 = arith.addf %1677, %1678 : vector<8x128xf32>
    %1680 = arith.subf %1608, %1498 : vector<8x128xf32>
    %cst_249 = arith.constant 2.000000e+00 : f32
    %1681 = vector.broadcast %cst_249 : f32 to vector<8x128xf32>
    %1682 = arith.mulf %1681, %1611 : vector<8x128xf32>
    %cst_250 = arith.constant 0.000000e+00 : f32
    %1683 = vector.broadcast %cst_250 : f32 to vector<8x128xf32>
    %1684 = arith.cmpf oge, %1680, %1683 : vector<8x128xf32>
    %cst_251 = arith.constant 1.000000e+00 : f32
    %cst_252 = arith.constant -1.000000e+00 : f32
    %1685 = vector.broadcast %cst_251 : f32 to vector<8x128xf32>
    %1686 = vector.broadcast %cst_252 : f32 to vector<8x128xf32>
    %1687 = arith.select %1684, %1685, %1686 : vector<8x128xi1>, vector<8x128xf32>
    %1688 = math.absf %1680 : vector<8x128xf32>
    %1689 = arith.mulf %1680, %1680 : vector<8x128xf32>
    %1690 = arith.mulf %1682, %1682 : vector<8x128xf32>
    %1691 = arith.addf %1689, %1690 : vector<8x128xf32>
    %1692 = math.sqrt %1691 : vector<8x128xf32>
    %1693 = arith.addf %1688, %1692 : vector<8x128xf32>
    %cst_253 = arith.constant 1.000000e-30 : f32
    %1694 = vector.broadcast %cst_253 : f32 to vector<8x128xf32>
    %1695 = arith.addf %1693, %1694 : vector<8x128xf32>
    %1696 = tpu.reciprocal %1695 {approx = true} : vector<8x128xf32> -> vector<8x128xf32>
    %1697 = arith.mulf %1695, %1696 : vector<8x128xf32>
    %cst_254 = arith.constant 2.000000e+00 : f32
    %1698 = vector.broadcast %cst_254 : f32 to vector<8x128xf32>
    %1699 = arith.subf %1698, %1697 : vector<8x128xf32>
    %1700 = arith.mulf %1696, %1699 : vector<8x128xf32>
    %1701 = arith.mulf %1682, %1687 : vector<8x128xf32>
    %1702 = arith.mulf %1701, %1700 : vector<8x128xf32>
    %1703 = arith.mulf %1702, %1702 : vector<8x128xf32>
    %cst_255 = arith.constant 1.000000e+00 : f32
    %1704 = vector.broadcast %cst_255 : f32 to vector<8x128xf32>
    %1705 = arith.addf %1704, %1703 : vector<8x128xf32>
    %1706 = math.rsqrt %1705 : vector<8x128xf32>
    %1707 = arith.mulf %1702, %1706 : vector<8x128xf32>
    %1708 = arith.mulf %1702, %1611 : vector<8x128xf32>
    %1709 = arith.subf %1498, %1708 : vector<8x128xf32>
    %1710 = arith.mulf %1702, %1611 : vector<8x128xf32>
    %1711 = arith.addf %1608, %1710 : vector<8x128xf32>
    %1712 = arith.mulf %1706, %1511 : vector<8x128xf32>
    %1713 = arith.mulf %1707, %1617 : vector<8x128xf32>
    %1714 = arith.subf %1712, %1713 : vector<8x128xf32>
    %1715 = arith.mulf %1707, %1511 : vector<8x128xf32>
    %1716 = arith.mulf %1706, %1617 : vector<8x128xf32>
    %1717 = arith.addf %1715, %1716 : vector<8x128xf32>
    %1718 = arith.mulf %1706, %1517 : vector<8x128xf32>
    %1719 = arith.mulf %1707, %1623 : vector<8x128xf32>
    %1720 = arith.subf %1718, %1719 : vector<8x128xf32>
    %1721 = arith.mulf %1707, %1517 : vector<8x128xf32>
    %1722 = arith.mulf %1706, %1623 : vector<8x128xf32>
    %1723 = arith.addf %1721, %1722 : vector<8x128xf32>
    %1724 = arith.mulf %1706, %1523 : vector<8x128xf32>
    %1725 = arith.mulf %1707, %1629 : vector<8x128xf32>
    %1726 = arith.subf %1724, %1725 : vector<8x128xf32>
    %1727 = arith.mulf %1707, %1523 : vector<8x128xf32>
    %1728 = arith.mulf %1706, %1629 : vector<8x128xf32>
    %1729 = arith.addf %1727, %1728 : vector<8x128xf32>
    %1730 = arith.addf %1553, %1659 : vector<8x128xf32>
    %1731 = arith.addf %1730, %1661 : vector<8x128xf32>
    %1732 = math.absf %1731 : vector<8x128xf32>
    %cst_256 = arith.constant 1.000000e-07 : f32
    %1733 = vector.broadcast %cst_256 : f32 to vector<8x128xf32>
    %1734 = arith.mulf %1733, %1732 : vector<8x128xf32>
    %cst_257 = arith.constant 9.99999991E-38 : f32
    %1735 = vector.broadcast %cst_257 : f32 to vector<8x128xf32>
    %1736 = arith.addf %1734, %1735 : vector<8x128xf32>
    %1737 = arith.maximumf %1553, %1736 : vector<8x128xf32>
    %1738 = math.log %1737 : vector<8x128xf32>
    %1739 = arith.maximumf %1659, %1736 : vector<8x128xf32>
    %1740 = math.log %1739 : vector<8x128xf32>
    %1741 = arith.maximumf %1661, %1736 : vector<8x128xf32>
    %1742 = math.log %1741 : vector<8x128xf32>
    %1743 = arith.mulf %1561, %1738 : vector<8x128xf32>
    %1744 = arith.mulf %1664, %1740 : vector<8x128xf32>
    %1745 = arith.mulf %1667, %1742 : vector<8x128xf32>
    %1746 = arith.mulf %1567, %1738 : vector<8x128xf32>
    %1747 = arith.mulf %1670, %1740 : vector<8x128xf32>
    %1748 = arith.mulf %1673, %1742 : vector<8x128xf32>
    %1749 = arith.mulf %1573, %1738 : vector<8x128xf32>
    %1750 = arith.mulf %1676, %1740 : vector<8x128xf32>
    %1751 = arith.mulf %1679, %1742 : vector<8x128xf32>
    %1752 = arith.mulf %1743, %1561 : vector<8x128xf32>
    %1753 = arith.mulf %1744, %1664 : vector<8x128xf32>
    %1754 = arith.addf %1752, %1753 : vector<8x128xf32>
    %1755 = arith.mulf %1745, %1667 : vector<8x128xf32>
    %1756 = arith.addf %1754, %1755 : vector<8x128xf32>
    %1757 = arith.mulf %1743, %1567 : vector<8x128xf32>
    %1758 = arith.mulf %1744, %1670 : vector<8x128xf32>
    %1759 = arith.addf %1757, %1758 : vector<8x128xf32>
    %1760 = arith.mulf %1745, %1673 : vector<8x128xf32>
    %1761 = arith.addf %1759, %1760 : vector<8x128xf32>
    %1762 = arith.mulf %1743, %1573 : vector<8x128xf32>
    %1763 = arith.mulf %1744, %1676 : vector<8x128xf32>
    %1764 = arith.addf %1762, %1763 : vector<8x128xf32>
    %1765 = arith.mulf %1745, %1679 : vector<8x128xf32>
    %1766 = arith.addf %1764, %1765 : vector<8x128xf32>
    %1767 = arith.mulf %1746, %1567 : vector<8x128xf32>
    %1768 = arith.mulf %1747, %1670 : vector<8x128xf32>
    %1769 = arith.addf %1767, %1768 : vector<8x128xf32>
    %1770 = arith.mulf %1748, %1673 : vector<8x128xf32>
    %1771 = arith.addf %1769, %1770 : vector<8x128xf32>
    %1772 = arith.mulf %1746, %1573 : vector<8x128xf32>
    %1773 = arith.mulf %1747, %1676 : vector<8x128xf32>
    %1774 = arith.addf %1772, %1773 : vector<8x128xf32>
    %1775 = arith.mulf %1748, %1679 : vector<8x128xf32>
    %1776 = arith.addf %1774, %1775 : vector<8x128xf32>
    %1777 = arith.mulf %1749, %1573 : vector<8x128xf32>
    %1778 = arith.mulf %1750, %1676 : vector<8x128xf32>
    %1779 = arith.addf %1777, %1778 : vector<8x128xf32>
    %1780 = arith.mulf %1751, %1679 : vector<8x128xf32>
    %1781 = arith.addf %1779, %1780 : vector<8x128xf32>
    %1782 = arith.addf %1606, %1709 : vector<8x128xf32>
    %1783 = arith.addf %1782, %1711 : vector<8x128xf32>
    %1784 = math.absf %1783 : vector<8x128xf32>
    %cst_258 = arith.constant 1.000000e-07 : f32
    %1785 = vector.broadcast %cst_258 : f32 to vector<8x128xf32>
    %1786 = arith.mulf %1785, %1784 : vector<8x128xf32>
    %cst_259 = arith.constant 9.99999991E-38 : f32
    %1787 = vector.broadcast %cst_259 : f32 to vector<8x128xf32>
    %1788 = arith.addf %1786, %1787 : vector<8x128xf32>
    %1789 = arith.maximumf %1606, %1788 : vector<8x128xf32>
    %1790 = math.log %1789 : vector<8x128xf32>
    %1791 = arith.maximumf %1709, %1788 : vector<8x128xf32>
    %1792 = math.log %1791 : vector<8x128xf32>
    %1793 = arith.maximumf %1711, %1788 : vector<8x128xf32>
    %1794 = math.log %1793 : vector<8x128xf32>
    %1795 = arith.mulf %1614, %1790 : vector<8x128xf32>
    %1796 = arith.mulf %1714, %1792 : vector<8x128xf32>
    %1797 = arith.mulf %1717, %1794 : vector<8x128xf32>
    %1798 = arith.mulf %1620, %1790 : vector<8x128xf32>
    %1799 = arith.mulf %1720, %1792 : vector<8x128xf32>
    %1800 = arith.mulf %1723, %1794 : vector<8x128xf32>
    %1801 = arith.mulf %1626, %1790 : vector<8x128xf32>
    %1802 = arith.mulf %1726, %1792 : vector<8x128xf32>
    %1803 = arith.mulf %1729, %1794 : vector<8x128xf32>
    %1804 = arith.mulf %1795, %1614 : vector<8x128xf32>
    %1805 = arith.mulf %1796, %1714 : vector<8x128xf32>
    %1806 = arith.addf %1804, %1805 : vector<8x128xf32>
    %1807 = arith.mulf %1797, %1717 : vector<8x128xf32>
    %1808 = arith.addf %1806, %1807 : vector<8x128xf32>
    %1809 = arith.mulf %1795, %1620 : vector<8x128xf32>
    %1810 = arith.mulf %1796, %1720 : vector<8x128xf32>
    %1811 = arith.addf %1809, %1810 : vector<8x128xf32>
    %1812 = arith.mulf %1797, %1723 : vector<8x128xf32>
    %1813 = arith.addf %1811, %1812 : vector<8x128xf32>
    %1814 = arith.mulf %1795, %1626 : vector<8x128xf32>
    %1815 = arith.mulf %1796, %1726 : vector<8x128xf32>
    %1816 = arith.addf %1814, %1815 : vector<8x128xf32>
    %1817 = arith.mulf %1797, %1729 : vector<8x128xf32>
    %1818 = arith.addf %1816, %1817 : vector<8x128xf32>
    %1819 = arith.mulf %1798, %1620 : vector<8x128xf32>
    %1820 = arith.mulf %1799, %1720 : vector<8x128xf32>
    %1821 = arith.addf %1819, %1820 : vector<8x128xf32>
    %1822 = arith.mulf %1800, %1723 : vector<8x128xf32>
    %1823 = arith.addf %1821, %1822 : vector<8x128xf32>
    %1824 = arith.mulf %1798, %1626 : vector<8x128xf32>
    %1825 = arith.mulf %1799, %1726 : vector<8x128xf32>
    %1826 = arith.addf %1824, %1825 : vector<8x128xf32>
    %1827 = arith.mulf %1800, %1729 : vector<8x128xf32>
    %1828 = arith.addf %1826, %1827 : vector<8x128xf32>
    %1829 = arith.mulf %1801, %1626 : vector<8x128xf32>
    %1830 = arith.mulf %1802, %1726 : vector<8x128xf32>
    %1831 = arith.addf %1829, %1830 : vector<8x128xf32>
    %1832 = arith.mulf %1803, %1729 : vector<8x128xf32>
    %1833 = arith.addf %1831, %1832 : vector<8x128xf32>
    %cst_260 = arith.constant 0.000000e+00 : f32
    %1834 = vector.broadcast %cst_260 : f32 to vector<8x128xf32>
    %1835 = arith.subf %1756, %1808 : vector<8x128xf32>
    %1836 = arith.mulf %1835, %1835 : vector<8x128xf32>
    %1837 = arith.addf %1834, %1836 : vector<8x128xf32>
    %1838 = arith.subf %1761, %1813 : vector<8x128xf32>
    %1839 = arith.mulf %1838, %1838 : vector<8x128xf32>
    %cst_261 = arith.constant 2.000000e+00 : f32
    %1840 = vector.broadcast %cst_261 : f32 to vector<8x128xf32>
    %1841 = arith.mulf %1840, %1839 : vector<8x128xf32>
    %1842 = arith.addf %1837, %1841 : vector<8x128xf32>
    %1843 = arith.subf %1766, %1818 : vector<8x128xf32>
    %1844 = arith.mulf %1843, %1843 : vector<8x128xf32>
    %cst_262 = arith.constant 2.000000e+00 : f32
    %1845 = vector.broadcast %cst_262 : f32 to vector<8x128xf32>
    %1846 = arith.mulf %1845, %1844 : vector<8x128xf32>
    %1847 = arith.addf %1842, %1846 : vector<8x128xf32>
    %1848 = arith.subf %1771, %1823 : vector<8x128xf32>
    %1849 = arith.mulf %1848, %1848 : vector<8x128xf32>
    %1850 = arith.addf %1847, %1849 : vector<8x128xf32>
    %1851 = arith.subf %1776, %1828 : vector<8x128xf32>
    %1852 = arith.mulf %1851, %1851 : vector<8x128xf32>
    %cst_263 = arith.constant 2.000000e+00 : f32
    %1853 = vector.broadcast %cst_263 : f32 to vector<8x128xf32>
    %1854 = arith.mulf %1853, %1852 : vector<8x128xf32>
    %1855 = arith.addf %1850, %1854 : vector<8x128xf32>
    %1856 = arith.subf %1781, %1833 : vector<8x128xf32>
    %1857 = arith.mulf %1856, %1856 : vector<8x128xf32>
    %1858 = arith.addf %1855, %1857 : vector<8x128xf32>
    %1859 = arith.index_cast %3 : i32 to index
    %c0_264 = arith.constant 0 : index
    %1860 = vector.load %arg3[%1859, %c0_264] : memref<8x128xf32, #tpu.memory_space<vmem>>, vector<8x128xf32>
    tpu.vector_store %arg3[%1859, %c0_264], %1858 {strides = array<i32>} : memref<8x128xf32, #tpu.memory_space<vmem>>, vector<8x128xf32>,
    %c1_i32_265 = arith.constant 1 : i32
    return
  }
  func.func @transform_0(%arg0: i32) -> (i32, i32, i32) {
    %c0_i32 = arith.constant 0 : i32
    %c0_i32_0 = arith.constant 0 : i32
    %c0_i32_1 = arith.constant 0 : i32
    return %c0_i32, %arg0, %c0_i32_0 : i32, i32, i32
  }
  func.func @transform_1(%arg0: i32) -> (i32, i32, i32) {
    %c0_i32 = arith.constant 0 : i32
    %c0_i32_0 = arith.constant 0 : i32
    %c0_i32_1 = arith.constant 0 : i32
    return %c0_i32, %arg0, %c0_i32_0 : i32, i32, i32
  }
  func.func @transform_2(%arg0: i32) -> (i32, i32) {
    %c0_i32 = arith.constant 0 : i32
    %c0_i32_0 = arith.constant 0 : i32
    return %arg0, %c0_i32 : i32, i32
  }
}

</mosaic_0001>

<llo_original>
// kernel: le_mse.1
$region0: #{le_mse.1}
  #allocation0 [shape = 'u32[]', space=smem, size = 0x4, offset = 0x4, fixed_abs, tag = 'smem constant byte address 0x4 - core index']
  #allocation1 [shape = 'u32[144,128]{1,0:T(1,128)}', space=vmem, size = 0x12000, scoped, tag = 'internal scratch']
  %s0 = inlined_call_operand.vmem [shape: f32[6,16,128], index: 0, kind: input, shape index: {}]
  %s1 = inlined_call_operand.vmem [shape: f32[6,16,128], index: 1, kind: input, shape index: {}]
  %s2 = inlined_call_operand.vmem [shape: f32[16,128], index: 2, kind: output, shape index: {}]
  %s3 = sld [smem:[#allocation0]]
  $region117: #{le_mse.1} parent=0
    _
  %s5 = ssub.s32 1, %s3
  %s6 = scalar_select 0, %s5, %s3
  $region1: #{le_mse.1} parent=0
    #allocation2 [shape = 'u8[49152]{0}', space=vmem, size = 0xc000, scoped, tag = 'input window, operand 0']
    #allocation3 [shape = 'u8[49152]{0}', space=vmem, size = 0xc000, scoped, tag = 'input window, operand 1']
    loop: start=0, step=1, limit=4
    $region2: #{le_mse.1} parent=1 // loop_pre_header
      _
    $region3: #{le_mse.1} parent=1 // loop_header
      %s8 = sphi 0, %s12
      %p9 = scmp.ge.s32.totalorder %s8, 4
      %s18 = sphi 0, %s20
      %s21 = sphi 0, %s18
      %s22 = sphi 0, %s21
      %s38 = sphi 0, %s22
      %s44 = sphi 0, %s46
      %s47 = sphi 0, %s44
      %s48 = sphi 0, %s47
      %s64 = sphi 0, %s48
      %s70 = sphi 0, %s72
      %s73 = sphi 0, %s70
      %s74 = sphi 0, %s73
      %s90 = sphi 0, %s74
    $region4: #{le_mse.1} parent=1 // loop_header_branch
      %11 = sbr.rel (%p9) target = $region8
    $region5: #{le_mse.1} parent=1 // loop_body
      %s13 = ssub.s32 %s8, 1
      %s14 = ssub.s32 %s8, 2
      %s15 = sadd.s32 %s8, 1
      %s16 = ssub.s32 %s8, %s15
      %p17 = scmp.eq.s32.totalorder %s16, 0
      %s19 = sadd.s32 %s18, 1
      %s20 = scalar_select %p17, %s18, %s19
      %p23 = pneg %p17
      %p24 = scmp.eq.s32.totalorder %s8, 1
      %p25 = por %p23, %p24
      %p26 = scmp.ne.s32.totalorder %s18, %s21
      %p27 = scmp.eq.s32.totalorder %s8, 0
      %p28 = por %p26, %p27
      %p29 = scmp.ne.s32.totalorder %s18, %s21
      %p30 = scmp.eq.s32.totalorder %s13, 1
      %p31 = por %p29, %p30
      %p32 = scmp.ne.s32.totalorder %s21, %s22
      %p33 = scmp.eq.s32.totalorder %s13, 0
      %p34 = por %p32, %p33
      %p35 = scmp.ne.s32.totalorder %s21, %s22
      %p36 = scmp.eq.s32.totalorder %s14, 1
      %p37 = por %p35, %p36
      %p39 = scmp.ne.s32.totalorder %s22, %s38
      %p40 = scmp.eq.s32.totalorder %s14, 0
      %p41 = por %p39, %p40
      %s42 = ssub.s32 %s8, %s15
      %p43 = scmp.eq.s32.totalorder %s42, 0
      %s45 = sadd.s32 %s44, 1
      %s46 = scalar_select %p43, %s44, %s45
      %p49 = pneg %p43
      %p50 = scmp.eq.s32.totalorder %s8, 1
      %p51 = por %p49, %p50
      %p52 = scmp.ne.s32.totalorder %s44, %s47
      %p53 = scmp.eq.s32.totalorder %s8, 0
      %p54 = por %p52, %p53
      %p55 = scmp.ne.s32.totalorder %s44, %s47
      %p56 = scmp.eq.s32.totalorder %s13, 1
      %p57 = por %p55, %p56
      %p58 = scmp.ne.s32.totalorder %s47, %s48
      %p59 = scmp.eq.s32.totalorder %s13, 0
      %p60 = por %p58, %p59
      %p61 = scmp.ne.s32.totalorder %s47, %s48
      %p62 = scmp.eq.s32.totalorder %s14, 1
      %p63 = por %p61, %p62
      %p65 = scmp.ne.s32.totalorder %s48, %s64
      %p66 = scmp.eq.s32.totalorder %s14, 0
      %p67 = por %p65, %p66
      %s68 = ssub.s32 %s8, %s15
      %p69 = scmp.eq.s32.totalorder %s68, 0
      %s71 = sadd.s32 %s70, 1
      %s72 = scalar_select %p69, %s70, %s71
      %p75 = pneg %p69
      %p76 = scmp.eq.s32.totalorder %s8, 1
      %p77 = por %p75, %p76
      %p78 = scmp.ne.s32.totalorder %s70, %s73
      %p79 = scmp.eq.s32.totalorder %s8, 0
      %p80 = por %p78, %p79
      %p81 = scmp.ne.s32.totalorder %s70, %s73
      %p82 = scmp.eq.s32.totalorder %s13, 1
      %p83 = por %p81, %p82
      %p84 = scmp.ne.s32.totalorder %s73, %s74
      %p85 = scmp.eq.s32.totalorder %s13, 0
      %p86 = por %p84, %p85
      %p87 = scmp.ne.s32.totalorder %s73, %s74
      %p88 = scmp.eq.s32.totalorder %s14, 1
      %p89 = por %p87, %p88
      %p91 = scmp.ne.s32.totalorder %s74, %s90
      %p92 = scmp.eq.s32.totalorder %s14, 0
      %p93 = por %p91, %p92
      %p94 = scmp.le.s32.totalorder 1, %s8
      %p95 = scmp.lt.s32.totalorder %s8, 3
      %p96 = pnand %p94, %p95
      %p97 = pneg %p96
      // Predicated region
      $region9: #{le_mse.1} parent=5 // pred_check
        _
      $region10: #{le_mse.1} parent=5 // pred_check_branch
        %99 = sbr.rel (%p96) target = $region12
      $region11: #{le_mse.1} parent=5 // pred_region
        %s100 = ssub.s32 %s8, 1
      $region12: #{le_mse.1} parent=5 // pred_fallthru
        _
      %p101 = scmp.lt.s32.totalorder %s8, 2
      // Predicated region
      $region13: #{le_mse.1} parent=5 // pred_check
        %p102 = pneg %p101
      $region14: #{le_mse.1} parent=5 // pred_check_branch
        %104 = sbr.rel (%p102) target = $region16
      $region15: #{le_mse.1} parent=5 // pred_region
        // Predicated region
        $region17: #{le_mse.1} parent=15 // pred_check
          %p105 = pneg %p28
        $region18: #{le_mse.1} parent=15 // pred_check_branch
          %107 = sbr.rel (%p105) target = $region20
        $region19: #{le_mse.1} parent=15 // pred_region
          %s108 = sand.u32 %s18, 1
          %s109 = sand.u32 %s18, 1
          %s110 = smul.addr %s109, 48
          %s111 = scalar_lea.vmem [#allocation2], %s110
          %s112 = smul.addr %s8, 8
          %s113 = scalar_lea.vmem %s0, %s112
          // Predicated region
          $region21: #{le_mse.1} parent=19 // pred_check
            _
          $region22: #{le_mse.1} parent=19 // pred_check_branch
            %115 = sbr.rel (0) target = $region24
          $region23: #{le_mse.1} parent=19 // pred_region
            // Predicated region
            $region25: #{le_mse.1} parent=23 // pred_check
              _
            $region26: #{le_mse.1} parent=23 // pred_check_branch
              %117 = sbr.rel (0) target = $region28
            $region27: #{le_mse.1} parent=23 // pred_region
              // Predicated region
              $region40: #{le_mse.1} parent=27 // pred_check
                _
              $region41: #{le_mse.1} parent=27 // pred_check_branch
                %142 = sbr.rel (0) target = $region43
              $region42: #{le_mse.1} parent=27 // pred_region
                loop: start=0, step=1, limit=1
                $region44: #{le_mse.1} parent=42 // loop_pre_header
                  _
                $region45: #{le_mse.1} parent=42 // loop_header
                  %s144 = sphi 0, %s148
                  %p145 = scmp.ge.s32.totalorder %s144, 1
                  %s149 = sphi %s113, %s113
                  %s150 = sphi %s111, %s111
                $region46: #{le_mse.1} parent=42 // loop_header_branch
                  %147 = sbr.rel (%p145) target = $region50
                $region47: #{le_mse.1} parent=42 // loop_body
                  %v151 = vld [vmem:[%s149] sm:$0xff]
                  %152 = vst [vmem:[%s150] sm:$0xff] %v151
                  %v153 = vld [vmem:[%s149 + $0x10] sm:$0xff]
                  %154 = vst [vmem:[%s150 + $0x8] sm:$0xff] %v153
                  %v155 = vld [vmem:[%s149 + $0x20] sm:$0xff]
                  %156 = vst [vmem:[%s150 + $0x10] sm:$0xff] %v155
                  %v157 = vld [vmem:[%s149 + $0x30] sm:$0xff]
                  %158 = vst [vmem:[%s150 + $0x18] sm:$0xff] %v157
                  %v159 = vld [vmem:[%s149 + $0x40] sm:$0xff]
                  %160 = vst [vmem:[%s150 + $0x20] sm:$0xff] %v159
                  %v161 = vld [vmem:[%s149 + $0x50] sm:$0xff]
                  %162 = vst [vmem:[%s150 + $0x28] sm:$0xff] %v161
                $region48: #{le_mse.1} parent=42 // loop_footer
                  %s148 = sadd.s32 1, %s144
                $region49: #{le_mse.1} parent=42 // loop_footer_branch
                  %143 = sbr.rel target = $region45
                $region50: #{le_mse.1} parent=42 // loop_exit
                  _
              $region43: #{le_mse.1} parent=27 // pred_fallthru
                _
              // Predicated region
              $region51: #{le_mse.1} parent=27 // pred_check
                _
              $region52: #{le_mse.1} parent=27 // pred_check_branch
                %164 = sbr.rel target = $region54
              $region53: #{le_mse.1} parent=27 // pred_region
                _
              $region54: #{le_mse.1} parent=27 // pred_fallthru
                _
            $region28: #{le_mse.1} parent=23 // pred_fallthru
              _
            // Predicated region
            $region29: #{le_mse.1} parent=23 // pred_check
              _
            $region30: #{le_mse.1} parent=23 // pred_check_branch
              %119 = sbr.rel target = $region32
            $region31: #{le_mse.1} parent=23 // pred_region
              loop: start=0, step=1, limit=1
              $region33: #{le_mse.1} parent=31 // loop_pre_header
                _
              $region34: #{le_mse.1} parent=31 // loop_header
                %s122 = sphi 0, %s126
                %p123 = scmp.ge.s32.totalorder %s122, 1
                %s127 = sphi %s113, %s113
                %s128 = sphi %s111, %s111
              $region35: #{le_mse.1} parent=31 // loop_header_branch
                %125 = sbr.rel (%p123) target = $region39
              $region36: #{le_mse.1} parent=31 // loop_body
                %v129 = vld [vmem:[%s127] sm:$0xff]
                %130 = vst [vmem:[%s128] sm:$0xff] %v129
                %v131 = vld [vmem:[%s127 + $0x10] sm:$0xff]
                %132 = vst [vmem:[%s128 + $0x8] sm:$0xff] %v131
                %v133 = vld [vmem:[%s127 + $0x20] sm:$0xff]
                %134 = vst [vmem:[%s128 + $0x10] sm:$0xff] %v133
                %v135 = vld [vmem:[%s127 + $0x30] sm:$0xff]
                %136 = vst [vmem:[%s128 + $0x18] sm:$0xff] %v135
                %v137 = vld [vmem:[%s127 + $0x40] sm:$0xff]
                %138 = vst [vmem:[%s128 + $0x20] sm:$0xff] %v137
                %v139 = vld [vmem:[%s127 + $0x50] sm:$0xff]
                %140 = vst [vmem:[%s128 + $0x28] sm:$0xff] %v139
              $region37: #{le_mse.1} parent=31 // loop_footer
                %s126 = sadd.s32 1, %s122
              $region38: #{le_mse.1} parent=31 // loop_footer_branch
                %121 = sbr.rel target = $region34
              $region39: #{le_mse.1} parent=31 // loop_exit
                _
            $region32: #{le_mse.1} parent=23 // pred_fallthru
              _
          $region24: #{le_mse.1} parent=19 // pred_fallthru
            _
          %165 = vnop
        $region20: #{le_mse.1} parent=15 // pred_fallthru
          _
        // Predicated region
        $region55: #{le_mse.1} parent=15 // pred_check
          %p166 = pneg %p54
        $region56: #{le_mse.1} parent=15 // pred_check_branch
          %168 = sbr.rel (%p166) target = $region58
        $region57: #{le_mse.1} parent=15 // pred_region
          %s169 = sand.u32 %s44, 1
          %s170 = sand.u32 %s44, 1
          %s171 = smul.addr %s170, 48
          %s172 = scalar_lea.vmem [#allocation3], %s171
          %s173 = smul.addr %s8, 8
          %s174 = scalar_lea.vmem %s1, %s173
          // Predicated region
          $region59: #{le_mse.1} parent=57 // pred_check
            _
          $region60: #{le_mse.1} parent=57 // pred_check_branch
            %176 = sbr.rel (0) target = $region62
          $region61: #{le_mse.1} parent=57 // pred_region
            // Predicated region
            $region63: #{le_mse.1} parent=61 // pred_check
              _
            $region64: #{le_mse.1} parent=61 // pred_check_branch
              %178 = sbr.rel (0) target = $region66
            $region65: #{le_mse.1} parent=61 // pred_region
              // Predicated region
              $region78: #{le_mse.1} parent=65 // pred_check
                _
              $region79: #{le_mse.1} parent=65 // pred_check_branch
                %203 = sbr.rel (0) target = $region81
              $region80: #{le_mse.1} parent=65 // pred_region
                loop: start=0, step=1, limit=1
                $region82: #{le_mse.1} parent=80 // loop_pre_header
                  _
                $region83: #{le_mse.1} parent=80 // loop_header
                  %s205 = sphi 0, %s209
                  %p206 = scmp.ge.s32.totalorder %s205, 1
                  %s210 = sphi %s174, %s174
                  %s211 = sphi %s172, %s172
                $region84: #{le_mse.1} parent=80 // loop_header_branch
                  %208 = sbr.rel (%p206) target = $region88
                $region85: #{le_mse.1} parent=80 // loop_body
                  %v212 = vld [vmem:[%s210] sm:$0xff]
                  %213 = vst [vmem:[%s211] sm:$0xff] %v212
                  %v214 = vld [vmem:[%s210 + $0x10] sm:$0xff]
                  %215 = vst [vmem:[%s211 + $0x8] sm:$0xff] %v214
                  %v216 = vld [vmem:[%s210 + $0x20] sm:$0xff]
                  %217 = vst [vmem:[%s211 + $0x10] sm:$0xff] %v216
                  %v218 = vld [vmem:[%s210 + $0x30] sm:$0xff]
                  %219 = vst [vmem:[%s211 + $0x18] sm:$0xff] %v218
                  %v220 = vld [vmem:[%s210 + $0x40] sm:$0xff]
                  %221 = vst [vmem:[%s211 + $0x20] sm:$0xff] %v220
                  %v222 = vld [vmem:[%s210 + $0x50] sm:$0xff]
                  %223 = vst [vmem:[%s211 + $0x28] sm:$0xff] %v222
                $region86: #{le_mse.1} parent=80 // loop_footer
                  %s209 = sadd.s32 1, %s205
                $region87: #{le_mse.1} parent=80 // loop_footer_branch
                  %204 = sbr.rel target = $region83
                $region88: #{le_mse.1} parent=80 // loop_exit
                  _
              $region81: #{le_mse.1} parent=65 // pred_fallthru
                _
              // Predicated region
              $region89: #{le_mse.1} parent=65 // pred_check
                _
              $region90: #{le_mse.1} parent=65 // pred_check_branch
                %225 = sbr.rel target = $region92
              $region91: #{le_mse.1} parent=65 // pred_region
                _
              $region92: #{le_mse.1} parent=65 // pred_fallthru
                _
            $region66: #{le_mse.1} parent=61 // pred_fallthru
              _
            // Predicated region
            $region67: #{le_mse.1} parent=61 // pred_check
              _
            $region68: #{le_mse.1} parent=61 // pred_check_branch
              %180 = sbr.rel target = $region70
            $region69: #{le_mse.1} parent=61 // pred_region
              loop: start=0, step=1, limit=1
              $region71: #{le_mse.1} parent=69 // loop_pre_header
                _
              $region72: #{le_mse.1} parent=69 // loop_header
                %s183 = sphi 0, %s187
                %p184 = scmp.ge.s32.totalorder %s183, 1
                %s188 = sphi %s174, %s174
                %s189 = sphi %s172, %s172
              $region73: #{le_mse.1} parent=69 // loop_header_branch
                %186 = sbr.rel (%p184) target = $region77
              $region74: #{le_mse.1} parent=69 // loop_body
                %v190 = vld [vmem:[%s188] sm:$0xff]
                %191 = vst [vmem:[%s189] sm:$0xff] %v190
                %v192 = vld [vmem:[%s188 + $0x10] sm:$0xff]
                %193 = vst [vmem:[%s189 + $0x8] sm:$0xff] %v192
                %v194 = vld [vmem:[%s188 + $0x20] sm:$0xff]
                %195 = vst [vmem:[%s189 + $0x10] sm:$0xff] %v194
                %v196 = vld [vmem:[%s188 + $0x30] sm:$0xff]
                %197 = vst [vmem:[%s189 + $0x18] sm:$0xff] %v196
                %v198 = vld [vmem:[%s188 + $0x40] sm:$0xff]
                %199 = vst [vmem:[%s189 + $0x20] sm:$0xff] %v198
                %v200 = vld [vmem:[%s188 + $0x50] sm:$0xff]
                %201 = vst [vmem:[%s189 + $0x28] sm:$0xff] %v200
              $region75: #{le_mse.1} parent=69 // loop_footer
                %s187 = sadd.s32 1, %s183
              $region76: #{le_mse.1} parent=69 // loop_footer_branch
                %182 = sbr.rel target = $region72
              $region77: #{le_mse.1} parent=69 // loop_exit
                _
            $region70: #{le_mse.1} parent=61 // pred_fallthru
              _
          $region62: #{le_mse.1} parent=57 // pred_fallthru
            _
          %226 = vnop
        $region58: #{le_mse.1} parent=15 // pred_fallthru
          _
      $region16: #{le_mse.1} parent=5 // pred_fallthru
        _
      %p227 = scmp.le.s32.totalorder 1, %s8
      %p228 = scmp.lt.s32.totalorder %s8, 3
      %p229 = pnand %p227, %p228
      %p230 = pneg %p229
      // Predicated region
      $region93: #{le_mse.1} parent=5 // pred_check
        _
      $region94: #{le_mse.1} parent=5 // pred_check_branch
        %232 = sbr.rel (%p229) target = $region96
      $region95: #{le_mse.1} parent=5 // pred_region
        %s233 = ssub.s32 %s8, 1
        %s234 = sand.u32 %s21, 1
        %s235 = sand.u32 %s21, 1
        %s236 = smul.addr %s235, 48
        %s237 = scalar_lea.vmem [#allocation2], %s236
        // Predicated region
        $region97: #{le_mse.1} parent=95 // pred_check
          %p238 = pneg %p34
        $region98: #{le_mse.1} parent=95 // pred_check_branch
          %240 = sbr.rel (%p238) target = $region100
        $region99: #{le_mse.1} parent=95 // pred_region
          _
        $region100: #{le_mse.1} parent=95 // pred_fallthru
          _
        %s241 = sand.u32 %s47, 1
        %s242 = sand.u32 %s47, 1
        %s243 = smul.addr %s242, 48
        %s244 = scalar_lea.vmem [#allocation3], %s243
        // Predicated region
        $region101: #{le_mse.1} parent=95 // pred_check
          %p245 = pneg %p60
        $region102: #{le_mse.1} parent=95 // pred_check_branch
          %247 = sbr.rel (%p245) target = $region104
        $region103: #{le_mse.1} parent=95 // pred_region
          _
        $region104: #{le_mse.1} parent=95 // pred_fallthru
          _
        %s248 = sand.u32 %s21, 1
        %s249 = sand.u32 %s21, 1
        %s250 = smul.addr %s249, 48
        %s251 = scalar_lea.vmem [#allocation2], %s250
        %p252 = pneg %p34
        %p253 = pneg %p31
        %s254 = sand.u32 %s47, 1
        %s255 = sand.u32 %s47, 1
        %s256 = smul.addr %s255, 48
        %s257 = scalar_lea.vmem [#allocation3], %s256
        %p258 = pneg %p60
        %p259 = pneg %p57
        %p260 = pneg %p86
        %p261 = pneg %p83
        %p262 = scmp.lt.s32.totalorder %s13, 1
        %s263 = scalar_select %p262, %s13, 1
        %s264 = smul.addr %s263, 8
        %s265 = scalar_lea.vmem %s2, %s264
        %p266 = scmp.lt.s32.totalorder %s13, 1
        %s267 = scalar_select %p266, %s13, 1
        %s268 = smul.addr %s267, 8
        %s269 = scalar_lea.vmem %s2, %s268
        %v270 = vld [vmem:[%s237] sm:$0xff]
        %s271 = sadd.s32 0, 8
        %s272 = scalar_lea.vmem %s237, %s271 [#allocation2]
        %v273 = vld [vmem:[%s272] sm:$0xff]
        %s274 = sadd.s32 0, 16
        %s275 = scalar_lea.vmem %s237, %s274 [#allocation2]
        %v276 = vld [vmem:[%s275] sm:$0xff]
        %s277 = sadd.s32 0, 24
        %s278 = scalar_lea.vmem %s237, %s277 [#allocation2]
        %v279 = vld [vmem:[%s278] sm:$0xff]
        %s280 = sadd.s32 0, 32
        %s281 = scalar_lea.vmem %s237, %s280 [#allocation2]
        %v282 = vld [vmem:[%s281] sm:$0xff]
        %s283 = sadd.s32 0, 40
        %s284 = scalar_lea.vmem %s237, %s283 [#allocation2]
        %v285 = vld [vmem:[%s284] sm:$0xff]
        %v286 = vld [vmem:[%s244] sm:$0xff]
        %s287 = scalar_lea.vmem %s244, %s271 [#allocation3]
        %v288 = vld [vmem:[%s287] sm:$0xff]
        %s289 = scalar_lea.vmem %s244, %s274 [#allocation3]
        %v290 = vld [vmem:[%s289] sm:$0xff]
        %s291 = scalar_lea.vmem %s244, %s277 [#allocation3]
        %v292 = vld [vmem:[%s291] sm:$0xff]
        %s293 = scalar_lea.vmem %s244, %s280 [#allocation3]
        %v294 = vld [vmem:[%s293] sm:$0xff]
        %s295 = scalar_lea.vmem %s244, %s283 [#allocation3]
        %v296 = vld [vmem:[%s295] sm:$0xff]
        %v297 = vsub.f32 %v279, %v270
        %v298 = vmul.f32 %v273, 2.0
        %vm299 = vcmp.ge.f32.partialorder %v297, 0.0
        %v300 = vsel %vm299, 1.0, -1.0
        %v301 = vand.u32 2147483647, %v297
        %v302 = vmul.f32 %v297, %v297
        %v303 = vmul.f32 %v298, %v298
        %v304 = vadd.f32 %v302, %v303
        %v305 = vrsqrt.pop %v304
        %v306 = vmul.f32 %v304, %v305
        %vm307 = vcmp.eq.f32.partialorder %v304, inf
        %v308 = vsel %vm307, %v304, %v306
        %vm309 = vcmp.eq.f32.partialorder %v304, 0.0
        %v310 = vand.u32 %v304, 2147483648
        %v311 = vsel %vm309, %v310, %v308
        %v312 = vadd.f32 %v301, %v311
        %v313 = vadd.f32 %v312, 1e-30
        %v314 = vrcp.pop %v313
        %v315 = vmul.f32 %v313, %v314
        %v316 = vsub.f32 2.0, %v315
        %v317 = vmul.f32 %v314, %v316
        %v318 = vmul.f32 %v298, %v300
        %v319 = vmul.f32 %v318, %v317
        %v320 = vmul.f32 %v319, %v319
        %v321 = vadd.f32 %v320, 1.0
        %v322 = vrsqrt.pop %v321
        %v323 = vmul.f32 %v319, %v322
        %v324 = vmul.f32 %v319, %v273
        %v325 = vsub.f32 %v270, %v324
        %v326 = vadd.f32 %v279, %v324
        %v327 = vmul.f32 %v322, %v276
        %v328 = vmul.f32 %v323, %v282
        %v329 = vsub.f32 %v327, %v328
        %v330 = vmul.f32 %v323, %v276
        %v331 = vmul.f32 %v322, %v282
        %v332 = vadd.f32 %v330, %v331
        %v333 = vmul.f32 %v323, 0.0
        %v334 = vsub.f32 %v322, %v333
        %v335 = vmul.f32 %v322, 0.0
        %v336 = vadd.f32 %v323, %v335
        %v337 = vsub.f32 %v335, %v323
        %v338 = vadd.f32 %v333, %v322
        %v339 = vsub.f32 %v335, %v333
        %v340 = vadd.f32 %v333, %v335
        %v341 = vsub.f32 %v292, %v286
        %v342 = vmul.f32 %v288, 2.0
        %vm343 = vcmp.ge.f32.partialorder %v341, 0.0
        %v344 = vsel %vm343, 1.0, -1.0
        %v345 = vand.u32 2147483647, %v341
        %v346 = vmul.f32 %v341, %v341
        %v347 = vmul.f32 %v342, %v342
        %v348 = vadd.f32 %v346, %v347
        %v349 = vrsqrt.pop %v348
        %v350 = vmul.f32 %v348, %v349
        %vm351 = vcmp.eq.f32.partialorder %v348, inf
        %v352 = vsel %vm351, %v348, %v350
        %vm353 = vcmp.eq.f32.partialorder %v348, 0.0
        %v354 = vand.u32 %v348, 2147483648
        %v355 = vsel %vm353, %v354, %v352
        %v356 = vadd.f32 %v345, %v355
        %v357 = vadd.f32 %v356, 1e-30
        %v358 = vrcp.pop %v357
        %v359 = vmul.f32 %v357, %v358
        %v360 = vsub.f32 2.0, %v359
        %v361 = vmul.f32 %v358, %v360
        %v362 = vmul.f32 %v342, %v344
        %v363 = vmul.f32 %v362, %v361
        %v364 = vmul.f32 %v363, %v363
        %v365 = vadd.f32 %v364, 1.0
        %v366 = vrsqrt.pop %v365
        %v367 = vmul.f32 %v363, %v366
        %v368 = vmul.f32 %v363, %v288
        %v369 = vsub.f32 %v286, %v368
        %v370 = vadd.f32 %v292, %v368
        %v371 = vmul.f32 %v366, %v290
        %v372 = vmul.f32 %v367, %v294
        %v373 = vsub.f32 %v371, %v372
        %v374 = vmul.f32 %v367, %v290
        %v375 = vmul.f32 %v366, %v294
        %v376 = vadd.f32 %v374, %v375
        %v377 = vmul.f32 %v367, 0.0
        %v378 = vsub.f32 %v366, %v377
        %v379 = vmul.f32 %v366, 0.0
        %v380 = vadd.f32 %v367, %v379
        %v381 = vsub.f32 %v379, %v367
        %v382 = vadd.f32 %v377, %v366
        %v383 = vsub.f32 %v379, %v377
        %v384 = vadd.f32 %v377, %v379
        %v385 = vsub.f32 %v285, %v325
        %v386 = vmul.f32 %v329, 2.0
        %vm387 = vcmp.ge.f32.partialorder %v385, 0.0
        %v388 = vsel %vm387, 1.0, -1.0
        %v389 = vand.u32 2147483647, %v385
        %v390 = vmul.f32 %v385, %v385
        %v391 = vmul.f32 %v386, %v386
        %v392 = vadd.f32 %v390, %v391
        %v393 = vrsqrt.pop %v392
        %v394 = vmul.f32 %v392, %v393
        %vm395 = vcmp.eq.f32.partialorder %v392, inf
        %v396 = vsel %vm395, %v392, %v394
        %vm397 = vcmp.eq.f32.partialorder %v392, 0.0
        %v398 = vand.u32 %v392, 2147483648
        %v399 = vsel %vm397, %v398, %v396
        %v400 = vadd.f32 %v389, %v399
        %v401 = vadd.f32 %v400, 1e-30
        %v402 = vrcp.pop %v401
        %v403 = vmul.f32 %v401, %v402
        %v404 = vsub.f32 2.0, %v403
        %v405 = vmul.f32 %v402, %v404
        %v406 = vmul.f32 %v386, %v388
        %v407 = vmul.f32 %v406, %v405
        %v408 = vmul.f32 %v407, %v407
        %v409 = vadd.f32 %v408, 1.0
        %v410 = vrsqrt.pop %v409
        %v411 = vmul.f32 %v407, %v410
        %v412 = vmul.f32 %v407, %v329
        %v413 = vsub.f32 %v325, %v412
        %v414 = vadd.f32 %v285, %v412
        %v415 = vmul.f32 %v410, 0.0
        %v416 = vmul.f32 %v411, %v332
        %v417 = vsub.f32 %v415, %v416
        %v418 = vmul.f32 %v411, 0.0
        %v419 = vmul.f32 %v410, %v332
        %v420 = vadd.f32 %v418, %v419
        %v421 = vmul.f32 %v410, %v334
        %v422 = vsub.f32 %v421, %v418
        %v423 = vmul.f32 %v411, %v334
        %v424 = vadd.f32 %v423, %v415
        %v425 = vmul.f32 %v410, %v337
        %v426 = vsub.f32 %v425, %v418
        %v427 = vmul.f32 %v411, %v337
        %v428 = vadd.f32 %v427, %v415
        %v429 = vmul.f32 %v410, %v339
        %v430 = vsub.f32 %v429, %v411
        %v431 = vmul.f32 %v411, %v339
        %v432 = vadd.f32 %v431, %v410
        %v433 = vsub.f32 %v296, %v369
        %v434 = vmul.f32 %v373, 2.0
        %vm435 = vcmp.ge.f32.partialorder %v433, 0.0
        %v436 = vsel %vm435, 1.0, -1.0
        %v437 = vand.u32 2147483647, %v433
        %v438 = vmul.f32 %v433, %v433
        %v439 = vmul.f32 %v434, %v434
        %v440 = vadd.f32 %v438, %v439
        %v441 = vrsqrt.pop %v440
        %v442 = vmul.f32 %v440, %v441
        %vm443 = vcmp.eq.f32.partialorder %v440, inf
        %v444 = vsel %vm443, %v440, %v442
        %vm445 = vcmp.eq.f32.partialorder %v440, 0.0
        %v446 = vand.u32 %v440, 2147483648
        %v447 = vsel %vm445, %v446, %v444
        %v448 = vadd.f32 %v437, %v447
        %v449 = vadd.f32 %v448, 1e-30
        %v450 = vrcp.pop %v449
        %v451 = vmul.f32 %v449, %v450
        %v452 = vsub.f32 2.0, %v451
        %v453 = vmul.f32 %v450, %v452
        %v454 = vmul.f32 %v434, %v436
        %v455 = vmul.f32 %v454, %v453
        %v456 = vmul.f32 %v455, %v455
        %v457 = vadd.f32 %v456, 1.0
        %v458 = vrsqrt.pop %v457
        %v459 = vmul.f32 %v455, %v458
        %v460 = vmul.f32 %v455, %v373
        %v461 = vsub.f32 %v369, %v460
        %v462 = vadd.f32 %v296, %v460
        %v463 = vmul.f32 %v458, 0.0
        %v464 = vmul.f32 %v459, %v376
        %v465 = vsub.f32 %v463, %v464
        %v466 = vmul.f32 %v459, 0.0
        %v467 = vmul.f32 %v458, %v376
        %v468 = vadd.f32 %v466, %v467
        %v469 = vmul.f32 %v458, %v378
        %v470 = vsub.f32 %v469, %v466
        %v471 = vmul.f32 %v459, %v378
        %v472 = vadd.f32 %v471, %v463
        %v473 = vmul.f32 %v458, %v381
        %v474 = vsub.f32 %v473, %v466
        %v475 = vmul.f32 %v459, %v381
        %v476 = vadd.f32 %v475, %v463
        %v477 = vmul.f32 %v458, %v383
        %v478 = vsub.f32 %v477, %v459
        %v479 = vmul.f32 %v459, %v383
        %v480 = vadd.f32 %v479, %v458
        %v481 = vsub.f32 %v414, %v326
        %v482 = vmul.f32 %v420, 2.0
        %vm483 = vcmp.ge.f32.partialorder %v481, 0.0
        %v484 = vsel %vm483, 1.0, -1.0
        %v485 = vand.u32 2147483647, %v481
        %v486 = vmul.f32 %v481, %v481
        %v487 = vmul.f32 %v482, %v482
        %v488 = vadd.f32 %v486, %v487
        %v489 = vrsqrt.pop %v488
        %v490 = vmul.f32 %v488, %v489
        %vm491 = vcmp.eq.f32.partialorder %v488, inf
        %v492 = vsel %vm491, %v488, %v490
        %vm493 = vcmp.eq.f32.partialorder %v488, 0.0
        %v494 = vand.u32 %v488, 2147483648
        %v495 = vsel %vm493, %v494, %v492
        %v496 = vadd.f32 %v485, %v495
        %v497 = vadd.f32 %v496, 1e-30
        %v498 = vrcp.pop %v497
        %v499 = vmul.f32 %v497, %v498
        %v500 = vsub.f32 2.0, %v499
        %v501 = vmul.f32 %v498, %v500
        %v502 = vmul.f32 %v482, %v484
        %v503 = vmul.f32 %v502, %v501
        %v504 = vmul.f32 %v503, %v503
        %v505 = vadd.f32 %v504, 1.0
        %v506 = vrsqrt.pop %v505
        %v507 = vmul.f32 %v503, %v506
        %v508 = vmul.f32 %v503, %v420
        %v509 = vsub.f32 %v326, %v508
        %v510 = vadd.f32 %v414, %v508
        %v511 = vmul.f32 %v506, %v417
        %v512 = vmul.f32 %v507, 0.0
        %v513 = vsub.f32 %v511, %v512
        %v514 = vmul.f32 %v507, %v417
        %v515 = vmul.f32 %v506, 0.0
        %v516 = vadd.f32 %v514, %v515
        %v517 = vmul.f32 %v506, %v336
        %v518 = vmul.f32 %v507, %v424
        %v519 = vsub.f32 %v517, %v518
        %v520 = vmul.f32 %v507, %v336
        %v521 = vmul.f32 %v506, %v424
        %v522 = vadd.f32 %v520, %v521
        %v523 = vmul.f32 %v506, %v338
        %v524 = vmul.f32 %v507, %v428
        %v525 = vsub.f32 %v523, %v524
        %v526 = vmul.f32 %v507, %v338
        %v527 = vmul.f32 %v506, %v428
        %v528 = vadd.f32 %v526, %v527
        %v529 = vmul.f32 %v506, %v340
        %v530 = vmul.f32 %v507, %v432
        %v531 = vsub.f32 %v529, %v530
        %v532 = vmul.f32 %v507, %v340
        %v533 = vmul.f32 %v506, %v432
        %v534 = vadd.f32 %v532, %v533
        %v535 = vsub.f32 %v462, %v370
        %v536 = vmul.f32 %v468, 2.0
        %vm537 = vcmp.ge.f32.partialorder %v535, 0.0
        %v538 = vsel %vm537, 1.0, -1.0
        %v539 = vand.u32 2147483647, %v535
        %v540 = vmul.f32 %v535, %v535
        %v541 = vmul.f32 %v536, %v536
        %v542 = vadd.f32 %v540, %v541
        %v543 = vrsqrt.pop %v542
        %v544 = vmul.f32 %v542, %v543
        %vm545 = vcmp.eq.f32.partialorder %v542, inf
        %v546 = vsel %vm545, %v542, %v544
        %vm547 = vcmp.eq.f32.partialorder %v542, 0.0
        %v548 = vand.u32 %v542, 2147483648
        %v549 = vsel %vm547, %v548, %v546
        %v550 = vadd.f32 %v539, %v549
        %v551 = vadd.f32 %v550, 1e-30
        %v552 = vrcp.pop %v551
        %v553 = vmul.f32 %v551, %v552
        %v554 = vsub.f32 2.0, %v553
        %v555 = vmul.f32 %v552, %v554
        %v556 = vmul.f32 %v536, %v538
        %v557 = vmul.f32 %v556, %v555
        %v558 = vmul.f32 %v557, %v557
        %v559 = vadd.f32 %v558, 1.0
        %v560 = vrsqrt.pop %v559
        %v561 = vmul.f32 %v557, %v560
        %v562 = vmul.f32 %v557, %v468
        %v563 = vsub.f32 %v370, %v562
        %v564 = vadd.f32 %v462, %v562
        %v565 = vmul.f32 %v560, %v465
        %v566 = vmul.f32 %v561, 0.0
        %v567 = vsub.f32 %v565, %v566
        %v568 = vmul.f32 %v561, %v465
        %v569 = vmul.f32 %v560, 0.0
        %v570 = vadd.f32 %v568, %v569
        %v571 = vmul.f32 %v560, %v380
        %v572 = vmul.f32 %v561, %v472
        %v573 = vsub.f32 %v571, %v572
        %v574 = vmul.f32 %v561, %v380
        %v575 = vmul.f32 %v560, %v472
        %v576 = vadd.f32 %v574, %v575
        %v577 = vmul.f32 %v560, %v382
        %v578 = vmul.f32 %v561, %v476
        %v579 = vsub.f32 %v577, %v578
        %v580 = vmul.f32 %v561, %v382
        %v581 = vmul.f32 %v560, %v476
        %v582 = vadd.f32 %v580, %v581
        %v583 = vmul.f32 %v560, %v384
        %v584 = vmul.f32 %v561, %v480
        %v585 = vsub.f32 %v583, %v584
        %v586 = vmul.f32 %v561, %v384
        %v587 = vmul.f32 %v560, %v480
        %v588 = vadd.f32 %v586, %v587
        %v589 = vsub.f32 %v509, %v413
        %v590 = vmul.f32 %v513, 2.0
        %vm591 = vcmp.ge.f32.partialorder %v589, 0.0
        %v592 = vsel %vm591, 1.0, -1.0
        %v593 = vand.u32 2147483647, %v589
        %v594 = vmul.f32 %v589, %v589
        %v595 = vmul.f32 %v590, %v590
        %v596 = vadd.f32 %v594, %v595
        %v597 = vrsqrt.pop %v596
        %v598 = vmul.f32 %v596, %v597
        %vm599 = vcmp.eq.f32.partialorder %v596, inf
        %v600 = vsel %vm599, %v596, %v598
        %vm601 = vcmp.eq.f32.partialorder %v596, 0.0
        %v602 = vand.u32 %v596, 2147483648
        %v603 = vsel %vm601, %v602, %v600
        %v604 = vadd.f32 %v593, %v603
        %v605 = vadd.f32 %v604, 1e-30
        %v606 = vrcp.pop %v605
        %v607 = vmul.f32 %v605, %v606
        %v608 = vsub.f32 2.0, %v607
        %v609 = vmul.f32 %v606, %v608
        %v610 = vmul.f32 %v590, %v592
        %v611 = vmul.f32 %v610, %v609
        %v612 = vmul.f32 %v611, %v611
        %v613 = vadd.f32 %v612, 1.0
        %v614 = vrsqrt.pop %v613
        %v615 = vmul.f32 %v611, %v614
        %v616 = vmul.f32 %v611, %v513
        %v617 = vsub.f32 %v413, %v616
        %v618 = vadd.f32 %v509, %v616
        %v619 = vmul.f32 %v614, %v516
        %v620 = vmul.f32 %v615, 0.0
        %v621 = vsub.f32 %v619, %v620
        %v622 = vmul.f32 %v615, %v516
        %v623 = vmul.f32 %v614, 0.0
        %v624 = vadd.f32 %v622, %v623
        %v625 = vmul.f32 %v614, %v422
        %v626 = vmul.f32 %v615, %v519
        %v627 = vsub.f32 %v625, %v626
        %v628 = vmul.f32 %v615, %v422
        %v629 = vmul.f32 %v614, %v519
        %v630 = vadd.f32 %v628, %v629
        %v631 = vmul.f32 %v614, %v426
        %v632 = vmul.f32 %v615, %v525
        %v633 = vsub.f32 %v631, %v632
        %v634 = vmul.f32 %v615, %v426
        %v635 = vmul.f32 %v614, %v525
        %v636 = vadd.f32 %v634, %v635
        %v637 = vmul.f32 %v614, %v430
        %v638 = vmul.f32 %v615, %v531
        %v639 = vsub.f32 %v637, %v638
        %v640 = vmul.f32 %v615, %v430
        %v641 = vmul.f32 %v614, %v531
        %v642 = vadd.f32 %v640, %v641
        %v643 = vsub.f32 %v563, %v461
        %v644 = vmul.f32 %v567, 2.0
        %vm645 = vcmp.ge.f32.partialorder %v643, 0.0
        %v646 = vsel %vm645, 1.0, -1.0
        %v647 = vand.u32 2147483647, %v643
        %v648 = vmul.f32 %v643, %v643
        %v649 = vmul.f32 %v644, %v644
        %v650 = vadd.f32 %v648, %v649
        %v651 = vrsqrt.pop %v650
        %v652 = vmul.f32 %v650, %v651
        %vm653 = vcmp.eq.f32.partialorder %v650, inf
        %v654 = vsel %vm653, %v650, %v652
        %vm655 = vcmp.eq.f32.partialorder %v650, 0.0
        %v656 = vand.u32 %v650, 2147483648
        %v657 = vsel %vm655, %v656, %v654
        %v658 = vadd.f32 %v647, %v657
        %v659 = vadd.f32 %v658, 1e-30
        %v660 = vrcp.pop %v659
        %v661 = vmul.f32 %v659, %v660
        %v662 = vsub.f32 2.0, %v661
        %v663 = vmul.f32 %v660, %v662
        %v664 = vmul.f32 %v644, %v646
        %v665 = vmul.f32 %v664, %v663
        %v666 = vmul.f32 %v665, %v665
        %v667 = vadd.f32 %v666, 1.0
        %v668 = vrsqrt.pop %v667
        %v669 = vmul.f32 %v665, %v668
        %v670 = vmul.f32 %v665, %v567
        %v671 = vsub.f32 %v461, %v670
        %v672 = vadd.f32 %v563, %v670
        %v673 = vmul.f32 %v668, %v570
        %v674 = vmul.f32 %v669, 0.0
        %v675 = vsub.f32 %v673, %v674
        %v676 = vmul.f32 %v669, %v570
        %v677 = vmul.f32 %v668, 0.0
        %v678 = vadd.f32 %v676, %v677
        %v679 = vmul.f32 %v668, %v470
        %v680 = vmul.f32 %v669, %v573
        %v681 = vsub.f32 %v679, %v680
        %v682 = vmul.f32 %v669, %v470
        %v683 = vmul.f32 %v668, %v573
        %v684 = vadd.f32 %v682, %v683
        %v685 = vmul.f32 %v668, %v474
        %v686 = vmul.f32 %v669, %v579
        %v687 = vsub.f32 %v685, %v686
        %v688 = vmul.f32 %v669, %v474
        %v689 = vmul.f32 %v668, %v579
        %v690 = vadd.f32 %v688, %v689
        %v691 = vmul.f32 %v668, %v478
        %v692 = vmul.f32 %v669, %v585
        %v693 = vsub.f32 %v691, %v692
        %v694 = vmul.f32 %v669, %v478
        %v695 = vmul.f32 %v668, %v585
        %v696 = vadd.f32 %v694, %v695
        %v697 = vsub.f32 %v510, %v617
        %v698 = vmul.f32 %v621, 2.0
        %vm699 = vcmp.ge.f32.partialorder %v697, 0.0
        %v700 = vsel %vm699, 1.0, -1.0
        %v701 = vand.u32 2147483647, %v697
        %v702 = vmul.f32 %v697, %v697
        %v703 = vmul.f32 %v698, %v698
        %v704 = vadd.f32 %v702, %v703
        %v705 = vrsqrt.pop %v704
        %v706 = vmul.f32 %v704, %v705
        %vm707 = vcmp.eq.f32.partialorder %v704, inf
        %v708 = vsel %vm707, %v704, %v706
        %vm709 = vcmp.eq.f32.partialorder %v704, 0.0
        %v710 = vand.u32 %v704, 2147483648
        %v711 = vsel %vm709, %v710, %v708
        %v712 = vadd.f32 %v701, %v711
        %v713 = vadd.f32 %v712, 1e-30
        %v714 = vrcp.pop %v713
        %v715 = vmul.f32 %v713, %v714
        %v716 = vsub.f32 2.0, %v715
        %v717 = vmul.f32 %v714, %v716
        %v718 = vmul.f32 %v698, %v700
        %v719 = vmul.f32 %v718, %v717
        %v720 = vmul.f32 %v719, %v719
        %v721 = vadd.f32 %v720, 1.0
        %v722 = vrsqrt.pop %v721
        %v723 = vmul.f32 %v719, %v722
        %v724 = vmul.f32 %v719, %v621
        %v725 = vsub.f32 %v617, %v724
        %v726 = vadd.f32 %v510, %v724
        %v727 = vmul.f32 %v722, 0.0
        %v728 = vmul.f32 %v723, %v624
        %v729 = vsub.f32 %v727, %v728
        %v730 = vmul.f32 %v723, 0.0
        %v731 = vmul.f32 %v722, %v624
        %v732 = vadd.f32 %v730, %v731
        %v733 = vmul.f32 %v722, %v627
        %v734 = vmul.f32 %v723, %v522
        %v735 = vsub.f32 %v733, %v734
        %v736 = vmul.f32 %v723, %v627
        %v737 = vmul.f32 %v722, %v522
        %v738 = vadd.f32 %v736, %v737
        %v739 = vmul.f32 %v722, %v633
        %v740 = vmul.f32 %v723, %v528
        %v741 = vsub.f32 %v739, %v740
        %v742 = vmul.f32 %v723, %v633
        %v743 = vmul.f32 %v722, %v528
        %v744 = vadd.f32 %v742, %v743
        %v745 = vmul.f32 %v722, %v639
        %v746 = vmul.f32 %v723, %v534
        %v747 = vsub.f32 %v745, %v746
        %v748 = vmul.f32 %v723, %v639
        %v749 = vmul.f32 %v722, %v534
        %v750 = vadd.f32 %v748, %v749
        %v751 = vsub.f32 %v564, %v671
        %v752 = vmul.f32 %v675, 2.0
        %vm753 = vcmp.ge.f32.partialorder %v751, 0.0
        %v754 = vsel %vm753, 1.0, -1.0
        %v755 = vand.u32 2147483647, %v751
        %v756 = vmul.f32 %v751, %v751
        %v757 = vmul.f32 %v752, %v752
        %v758 = vadd.f32 %v756, %v757
        %v759 = vrsqrt.pop %v758
        %v760 = vmul.f32 %v758, %v759
        %vm761 = vcmp.eq.f32.partialorder %v758, inf
        %v762 = vsel %vm761, %v758, %v760
        %vm763 = vcmp.eq.f32.partialorder %v758, 0.0
        %v764 = vand.u32 %v758, 2147483648
        %v765 = vsel %vm763, %v764, %v762
        %v766 = vadd.f32 %v755, %v765
        %v767 = vadd.f32 %v766, 1e-30
        %v768 = vrcp.pop %v767
        %v769 = vmul.f32 %v767, %v768
        %v770 = vsub.f32 2.0, %v769
        %v771 = vmul.f32 %v768, %v770
        %v772 = vmul.f32 %v752, %v754
        %v773 = vmul.f32 %v772, %v771
        %v774 = vmul.f32 %v773, %v773
        %v775 = vadd.f32 %v774, 1.0
        %v776 = vrsqrt.pop %v775
        %v777 = vmul.f32 %v773, %v776
        %v778 = vmul.f32 %v773, %v675
        %v779 = vsub.f32 %v671, %v778
        %v780 = vadd.f32 %v564, %v778
        %v781 = vmul.f32 %v776, 0.0
        %v782 = vmul.f32 %v777, %v678
        %v783 = vsub.f32 %v781, %v782
        %v784 = vmul.f32 %v777, 0.0
        %v785 = vmul.f32 %v776, %v678
        %v786 = vadd.f32 %v784, %v785
        %v787 = vmul.f32 %v776, %v681
        %v788 = vmul.f32 %v777, %v576
        %v789 = vsub.f32 %v787, %v788
        %v790 = vmul.f32 %v777, %v681
        %v791 = vmul.f32 %v776, %v576
        %v792 = vadd.f32 %v790, %v791
        %v793 = vmul.f32 %v776, %v687
        %v794 = vmul.f32 %v777, %v582
        %v795 = vsub.f32 %v793, %v794
        %v796 = vmul.f32 %v777, %v687
        %v797 = vmul.f32 %v776, %v582
        %v798 = vadd.f32 %v796, %v797
        %v799 = vmul.f32 %v776, %v693
        %v800 = vmul.f32 %v777, %v588
        %v801 = vsub.f32 %v799, %v800
        %v802 = vmul.f32 %v777, %v693
        %v803 = vmul.f32 %v776, %v588
        %v804 = vadd.f32 %v802, %v803
        %v805 = vsub.f32 %v726, %v618
        %v806 = vmul.f32 %v732, 2.0
        %vm807 = vcmp.ge.f32.partialorder %v805, 0.0
        %v808 = vsel %vm807, 1.0, -1.0
        %v809 = vand.u32 2147483647, %v805
        %v810 = vmul.f32 %v805, %v805
        %v811 = vmul.f32 %v806, %v806
        %v812 = vadd.f32 %v810, %v811
        %v813 = vrsqrt.pop %v812
        %v814 = vmul.f32 %v812, %v813
        %vm815 = vcmp.eq.f32.partialorder %v812, inf
        %v816 = vsel %vm815, %v812, %v814
        %vm817 = vcmp.eq.f32.partialorder %v812, 0.0
        %v818 = vand.u32 %v812, 2147483648
        %v819 = vsel %vm817, %v818, %v816
        %v820 = vadd.f32 %v809, %v819
        %v821 = vadd.f32 %v820, 1e-30
        %v822 = vrcp.pop %v821
        %v823 = vmul.f32 %v821, %v822
        %v824 = vsub.f32 2.0, %v823
        %v825 = vmul.f32 %v822, %v824
        %v826 = vmul.f32 %v806, %v808
        %v827 = vmul.f32 %v826, %v825
        %v828 = vmul.f32 %v827, %v827
        %v829 = vadd.f32 %v828, 1.0
        %v830 = vrsqrt.pop %v829
        %v831 = vmul.f32 %v827, %v830
        %v832 = vmul.f32 %v827, %v732
        %v833 = vsub.f32 %v618, %v832
        %v834 = vadd.f32 %v726, %v832
        %v835 = vmul.f32 %v830, %v729
        %v836 = vmul.f32 %v831, 0.0
        %v837 = vsub.f32 %v835, %v836
        %v838 = vmul.f32 %v831, %v729
        %v839 = vmul.f32 %v830, 0.0
        %v840 = vadd.f32 %v838, %v839
        %v841 = vmul.f32 %v830, %v630
        %v842 = vmul.f32 %v831, %v738
        %v843 = vsub.f32 %v841, %v842
        %v844 = vmul.f32 %v831, %v630
        %v845 = vmul.f32 %v830, %v738
        %v846 = vadd.f32 %v844, %v845
        %v847 = vmul.f32 %v830, %v636
        %v848 = vmul.f32 %v831, %v744
        %v849 = vsub.f32 %v847, %v848
        %v850 = vmul.f32 %v831, %v636
        %v851 = vmul.f32 %v830, %v744
        %v852 = vadd.f32 %v850, %v851
        %v853 = vmul.f32 %v830, %v642
        %v854 = vmul.f32 %v831, %v750
        %v855 = vsub.f32 %v853, %v854
        %v856 = vmul.f32 %v831, %v642
        %v857 = vmul.f32 %v830, %v750
        %v858 = vadd.f32 %v856, %v857
        %v859 = vsub.f32 %v780, %v672
        %v860 = vmul.f32 %v786, 2.0
        %vm861 = vcmp.ge.f32.partialorder %v859, 0.0
        %v862 = vsel %vm861, 1.0, -1.0
        %v863 = vand.u32 2147483647, %v859
        %v864 = vmul.f32 %v859, %v859
        %v865 = vmul.f32 %v860, %v860
        %v866 = vadd.f32 %v864, %v865
        %v867 = vrsqrt.pop %v866
        %v868 = vmul.f32 %v866, %v867
        %vm869 = vcmp.eq.f32.partialorder %v866, inf
        %v870 = vsel %vm869, %v866, %v868
        %vm871 = vcmp.eq.f32.partialorder %v866, 0.0
        %v872 = vand.u32 %v866, 2147483648
        %v873 = vsel %vm871, %v872, %v870
        %v874 = vadd.f32 %v863, %v873
        %v875 = vadd.f32 %v874, 1e-30
        %v876 = vrcp.pop %v875
        %v877 = vmul.f32 %v875, %v876
        %v878 = vsub.f32 2.0, %v877
        %v879 = vmul.f32 %v876, %v878
        %v880 = vmul.f32 %v860, %v862
        %v881 = vmul.f32 %v880, %v879
        %v882 = vmul.f32 %v881, %v881
        %v883 = vadd.f32 %v882, 1.0
        %v884 = vrsqrt.pop %v883
        %v885 = vmul.f32 %v881, %v884
        %v886 = vmul.f32 %v881, %v786
        %v887 = vsub.f32 %v672, %v886
        %v888 = vadd.f32 %v780, %v886
        %v889 = vmul.f32 %v884, %v783
        %v890 = vmul.f32 %v885, 0.0
        %v891 = vsub.f32 %v889, %v890
        %v892 = vmul.f32 %v885, %v783
        %v893 = vmul.f32 %v884, 0.0
        %v894 = vadd.f32 %v892, %v893
        %v895 = vmul.f32 %v884, %v684
        %v896 = vmul.f32 %v885, %v792
        %v897 = vsub.f32 %v895, %v896
        %v898 = vmul.f32 %v885, %v684
        %v899 = vmul.f32 %v884, %v792
        %v900 = vadd.f32 %v898, %v899
        %v901 = vmul.f32 %v884, %v690
        %v902 = vmul.f32 %v885, %v798
        %v903 = vsub.f32 %v901, %v902
        %v904 = vmul.f32 %v885, %v690
        %v905 = vmul.f32 %v884, %v798
        %v906 = vadd.f32 %v904, %v905
        %v907 = vmul.f32 %v884, %v696
        %v908 = vmul.f32 %v885, %v804
        %v909 = vsub.f32 %v907, %v908
        %v910 = vmul.f32 %v885, %v696
        %v911 = vmul.f32 %v884, %v804
        %v912 = vadd.f32 %v910, %v911
        %v913 = vsub.f32 %v833, %v725
        %v914 = vmul.f32 %v837, 2.0
        %vm915 = vcmp.ge.f32.partialorder %v913, 0.0
        %v916 = vsel %vm915, 1.0, -1.0
        %v917 = vand.u32 2147483647, %v913
        %v918 = vmul.f32 %v913, %v913
        %v919 = vmul.f32 %v914, %v914
        %v920 = vadd.f32 %v918, %v919
        %v921 = vrsqrt.pop %v920
        %v922 = vmul.f32 %v920, %v921
        %vm923 = vcmp.eq.f32.partialorder %v920, inf
        %v924 = vsel %vm923, %v920, %v922
        %vm925 = vcmp.eq.f32.partialorder %v920, 0.0
        %v926 = vand.u32 %v920, 2147483648
        %v927 = vsel %vm925, %v926, %v924
        %v928 = vadd.f32 %v917, %v927
        %v929 = vadd.f32 %v928, 1e-30
        %v930 = vrcp.pop %v929
        %v931 = vmul.f32 %v929, %v930
        %v932 = vsub.f32 2.0, %v931
        %v933 = vmul.f32 %v930, %v932
        %v934 = vmul.f32 %v914, %v916
        %v935 = vmul.f32 %v934, %v933
        %v936 = vmul.f32 %v935, %v935
        %v937 = vadd.f32 %v936, 1.0
        %v938 = vrsqrt.pop %v937
        %v939 = vmul.f32 %v935, %v938
        %v940 = vmul.f32 %v935, %v837
        %v941 = vsub.f32 %v725, %v940
        %v942 = vadd.f32 %v833, %v940
        %v943 = vmul.f32 %v938, %v840
        %v944 = vmul.f32 %v939, 0.0
        %v945 = vsub.f32 %v943, %v944
        %v946 = vmul.f32 %v939, %v840
        %v947 = vmul.f32 %v938, 0.0
        %v948 = vadd.f32 %v946, %v947
        %v949 = vmul.f32 %v938, %v735
        %v950 = vmul.f32 %v939, %v843
        %v951 = vsub.f32 %v949, %v950
        %v952 = vmul.f32 %v939, %v735
        %v953 = vmul.f32 %v938, %v843
        %v954 = vadd.f32 %v952, %v953
        %v955 = vmul.f32 %v938, %v741
        %v956 = vmul.f32 %v939, %v849
        %v957 = vsub.f32 %v955, %v956
        %v958 = vmul.f32 %v939, %v741
        %v959 = vmul.f32 %v938, %v849
        %v960 = vadd.f32 %v958, %v959
        %v961 = vmul.f32 %v938, %v747
        %v962 = vmul.f32 %v939, %v855
        %v963 = vsub.f32 %v961, %v962
        %v964 = vmul.f32 %v939, %v747
        %v965 = vmul.f32 %v938, %v855
        %v966 = vadd.f32 %v964, %v965
        %v967 = vsub.f32 %v887, %v779
        %v968 = vmul.f32 %v891, 2.0
        %vm969 = vcmp.ge.f32.partialorder %v967, 0.0
        %v970 = vsel %vm969, 1.0, -1.0
        %v971 = vand.u32 2147483647, %v967
        %v972 = vmul.f32 %v967, %v967
        %v973 = vmul.f32 %v968, %v968
        %v974 = vadd.f32 %v972, %v973
        %v975 = vrsqrt.pop %v974
        %v976 = vmul.f32 %v974, %v975
        %vm977 = vcmp.eq.f32.partialorder %v974, inf
        %v978 = vsel %vm977, %v974, %v976
        %vm979 = vcmp.eq.f32.partialorder %v974, 0.0
        %v980 = vand.u32 %v974, 2147483648
        %v981 = vsel %vm979, %v980, %v978
        %v982 = vadd.f32 %v971, %v981
        %v983 = vadd.f32 %v982, 1e-30
        %v984 = vrcp.pop %v983
        %v985 = vmul.f32 %v983, %v984
        %v986 = vsub.f32 2.0, %v985
        %v987 = vmul.f32 %v984, %v986
        %v988 = vmul.f32 %v968, %v970
        %v989 = vmul.f32 %v988, %v987
        %v990 = vmul.f32 %v989, %v989
        %v991 = vadd.f32 %v990, 1.0
        %v992 = vrsqrt.pop %v991
        %v993 = vmul.f32 %v989, %v992
        %v994 = vmul.f32 %v989, %v891
        %v995 = vsub.f32 %v779, %v994
        %v996 = vadd.f32 %v887, %v994
        %v997 = vmul.f32 %v992, %v894
        %v998 = vmul.f32 %v993, 0.0
        %v999 = vsub.f32 %v997, %v998
        %v1000 = vmul.f32 %v993, %v894
        %v1001 = vmul.f32 %v992, 0.0
        %v1002 = vadd.f32 %v1000, %v1001
        %v1003 = vmul.f32 %v992, %v789
        %v1004 = vmul.f32 %v993, %v897
        %v1005 = vsub.f32 %v1003, %v1004
        %v1006 = vmul.f32 %v993, %v789
        %v1007 = vmul.f32 %v992, %v897
        %v1008 = vadd.f32 %v1006, %v1007
        %v1009 = vmul.f32 %v992, %v795
        %v1010 = vmul.f32 %v993, %v903
        %v1011 = vsub.f32 %v1009, %v1010
        %v1012 = vmul.f32 %v993, %v795
        %v1013 = vmul.f32 %v992, %v903
        %v1014 = vadd.f32 %v1012, %v1013
        %v1015 = vmul.f32 %v992, %v801
        %v1016 = vmul.f32 %v993, %v909
        %v1017 = vsub.f32 %v1015, %v1016
        %v1018 = vmul.f32 %v993, %v801
        %v1019 = vmul.f32 %v992, %v909
        %v1020 = vadd.f32 %v1018, %v1019
        %v1021 = vsub.f32 %v834, %v941
        %v1022 = vmul.f32 %v945, 2.0
        %vm1023 = vcmp.ge.f32.partialorder %v1021, 0.0
        %v1024 = vsel %vm1023, 1.0, -1.0
        %v1025 = vand.u32 2147483647, %v1021
        %v1026 = vmul.f32 %v1021, %v1021
        %v1027 = vmul.f32 %v1022, %v1022
        %v1028 = vadd.f32 %v1026, %v1027
        %v1029 = vrsqrt.pop %v1028
        %v1030 = vmul.f32 %v1028, %v1029
        %vm1031 = vcmp.eq.f32.partialorder %v1028, inf
        %v1032 = vsel %vm1031, %v1028, %v1030
        %vm1033 = vcmp.eq.f32.partialorder %v1028, 0.0
        %v1034 = vand.u32 %v1028, 2147483648
        %v1035 = vsel %vm1033, %v1034, %v1032
        %v1036 = vadd.f32 %v1025, %v1035
        %v1037 = vadd.f32 %v1036, 1e-30
        %v1038 = vrcp.pop %v1037
        %v1039 = vmul.f32 %v1037, %v1038
        %v1040 = vsub.f32 2.0, %v1039
        %v1041 = vmul.f32 %v1038, %v1040
        %v1042 = vmul.f32 %v1022, %v1024
        %v1043 = vmul.f32 %v1042, %v1041
        %v1044 = vmul.f32 %v1043, %v1043
        %v1045 = vadd.f32 %v1044, 1.0
        %v1046 = vrsqrt.pop %v1045
        %v1047 = vmul.f32 %v1043, %v1046
        %v1048 = vmul.f32 %v1043, %v945
        %v1049 = vsub.f32 %v941, %v1048
        %v1050 = vadd.f32 %v834, %v1048
        %v1051 = vmul.f32 %v1046, 0.0
        %v1052 = vmul.f32 %v1047, %v948
        %v1053 = vsub.f32 %v1051, %v1052
        %v1054 = vmul.f32 %v1047, 0.0
        %v1055 = vmul.f32 %v1046, %v948
        %v1056 = vadd.f32 %v1054, %v1055
        %v1057 = vmul.f32 %v1046, %v951
        %v1058 = vmul.f32 %v1047, %v846
        %v1059 = vsub.f32 %v1057, %v1058
        %v1060 = vmul.f32 %v1047, %v951
        %v1061 = vmul.f32 %v1046, %v846
        %v1062 = vadd.f32 %v1060, %v1061
        %v1063 = vmul.f32 %v1046, %v957
        %v1064 = vmul.f32 %v1047, %v852
        %v1065 = vsub.f32 %v1063, %v1064
        %v1066 = vmul.f32 %v1047, %v957
        %v1067 = vmul.f32 %v1046, %v852
        %v1068 = vadd.f32 %v1066, %v1067
        %v1069 = vmul.f32 %v1046, %v963
        %v1070 = vmul.f32 %v1047, %v858
        %v1071 = vsub.f32 %v1069, %v1070
        %v1072 = vmul.f32 %v1047, %v963
        %v1073 = vmul.f32 %v1046, %v858
        %v1074 = vadd.f32 %v1072, %v1073
        %v1075 = vsub.f32 %v888, %v995
        %v1076 = vmul.f32 %v999, 2.0
        %vm1077 = vcmp.ge.f32.partialorder %v1075, 0.0
        %v1078 = vsel %vm1077, 1.0, -1.0
        %v1079 = vand.u32 2147483647, %v1075
        %v1080 = vmul.f32 %v1075, %v1075
        %v1081 = vmul.f32 %v1076, %v1076
        %v1082 = vadd.f32 %v1080, %v1081
        %v1083 = vrsqrt.pop %v1082
        %v1084 = vmul.f32 %v1082, %v1083
        %vm1085 = vcmp.eq.f32.partialorder %v1082, inf
        %v1086 = vsel %vm1085, %v1082, %v1084
        %vm1087 = vcmp.eq.f32.partialorder %v1082, 0.0
        %v1088 = vand.u32 %v1082, 2147483648
        %v1089 = vsel %vm1087, %v1088, %v1086
        %v1090 = vadd.f32 %v1079, %v1089
        %v1091 = vadd.f32 %v1090, 1e-30
        %v1092 = vrcp.pop %v1091
        %v1093 = vmul.f32 %v1091, %v1092
        %v1094 = vsub.f32 2.0, %v1093
        %v1095 = vmul.f32 %v1092, %v1094
        %v1096 = vmul.f32 %v1076, %v1078
        %v1097 = vmul.f32 %v1096, %v1095
        %v1098 = vmul.f32 %v1097, %v1097
        %v1099 = vadd.f32 %v1098, 1.0
        %v1100 = vrsqrt.pop %v1099
        %v1101 = vmul.f32 %v1097, %v1100
        %v1102 = vmul.f32 %v1097, %v999
        %v1103 = vsub.f32 %v995, %v1102
        %v1104 = vadd.f32 %v888, %v1102
        %v1105 = vmul.f32 %v1100, 0.0
        %v1106 = vmul.f32 %v1101, %v1002
        %v1107 = vsub.f32 %v1105, %v1106
        %v1108 = vmul.f32 %v1101, 0.0
        %v1109 = vmul.f32 %v1100, %v1002
        %v1110 = vadd.f32 %v1108, %v1109
        %v1111 = vmul.f32 %v1100, %v1005
        %v1112 = vmul.f32 %v1101, %v900
        %v1113 = vsub.f32 %v1111, %v1112
        %v1114 = vmul.f32 %v1101, %v1005
        %v1115 = vmul.f32 %v1100, %v900
        %v1116 = vadd.f32 %v1114, %v1115
        %v1117 = vmul.f32 %v1100, %v1011
        %v1118 = vmul.f32 %v1101, %v906
        %v1119 = vsub.f32 %v1117, %v1118
        %v1120 = vmul.f32 %v1101, %v1011
        %v1121 = vmul.f32 %v1100, %v906
        %v1122 = vadd.f32 %v1120, %v1121
        %v1123 = vmul.f32 %v1100, %v1017
        %v1124 = vmul.f32 %v1101, %v912
        %v1125 = vsub.f32 %v1123, %v1124
        %v1126 = vmul.f32 %v1101, %v1017
        %v1127 = vmul.f32 %v1100, %v912
        %v1128 = vadd.f32 %v1126, %v1127
        %v1129 = vsub.f32 %v1050, %v942
        %v1130 = vmul.f32 %v1056, 2.0
        %vm1131 = vcmp.ge.f32.partialorder %v1129, 0.0
        %v1132 = vsel %vm1131, 1.0, -1.0
        %v1133 = vand.u32 2147483647, %v1129
        %v1134 = vmul.f32 %v1129, %v1129
        %v1135 = vmul.f32 %v1130, %v1130
        %v1136 = vadd.f32 %v1134, %v1135
        %v1137 = vrsqrt.pop %v1136
        %v1138 = vmul.f32 %v1136, %v1137
        %vm1139 = vcmp.eq.f32.partialorder %v1136, inf
        %v1140 = vsel %vm1139, %v1136, %v1138
        %vm1141 = vcmp.eq.f32.partialorder %v1136, 0.0
        %v1142 = vand.u32 %v1136, 2147483648
        %v1143 = vsel %vm1141, %v1142, %v1140
        %v1144 = vadd.f32 %v1133, %v1143
        %v1145 = vadd.f32 %v1144, 1e-30
        %v1146 = vrcp.pop %v1145
        %v1147 = vmul.f32 %v1145, %v1146
        %v1148 = vsub.f32 2.0, %v1147
        %v1149 = vmul.f32 %v1146, %v1148
        %v1150 = vmul.f32 %v1130, %v1132
        %v1151 = vmul.f32 %v1150, %v1149
        %v1152 = vmul.f32 %v1151, %v1151
        %v1153 = vadd.f32 %v1152, 1.0
        %v1154 = vrsqrt.pop %v1153
        %v1155 = vmul.f32 %v1151, %v1154
        %v1156 = vmul.f32 %v1151, %v1056
        %v1157 = vsub.f32 %v942, %v1156
        %v1158 = vadd.f32 %v1050, %v1156
        %v1159 = vmul.f32 %v1154, %v1053
        %v1160 = vmul.f32 %v1155, 0.0
        %v1161 = vsub.f32 %v1159, %v1160
        %v1162 = vmul.f32 %v1155, %v1053
        %v1163 = vmul.f32 %v1154, 0.0
        %v1164 = vadd.f32 %v1162, %v1163
        %v1165 = vmul.f32 %v1154, %v954
        %v1166 = vmul.f32 %v1155, %v1062
        %v1167 = vsub.f32 %v1165, %v1166
        %v1168 = vmul.f32 %v1155, %v954
        %v1169 = vmul.f32 %v1154, %v1062
        %v1170 = vadd.f32 %v1168, %v1169
        %v1171 = vmul.f32 %v1154, %v960
        %v1172 = vmul.f32 %v1155, %v1068
        %v1173 = vsub.f32 %v1171, %v1172
        %v1174 = vmul.f32 %v1155, %v960
        %v1175 = vmul.f32 %v1154, %v1068
        %v1176 = vadd.f32 %v1174, %v1175
        %v1177 = vmul.f32 %v1154, %v966
        %v1178 = vmul.f32 %v1155, %v1074
        %v1179 = vsub.f32 %v1177, %v1178
        %v1180 = vmul.f32 %v1155, %v966
        %v1181 = vmul.f32 %v1154, %v1074
        %v1182 = vadd.f32 %v1180, %v1181
        %v1183 = vsub.f32 %v1104, %v996
        %v1184 = vmul.f32 %v1110, 2.0
        %vm1185 = vcmp.ge.f32.partialorder %v1183, 0.0
        %v1186 = vsel %vm1185, 1.0, -1.0
        %v1187 = vand.u32 2147483647, %v1183
        %v1188 = vmul.f32 %v1183, %v1183
        %v1189 = vmul.f32 %v1184, %v1184
        %v1190 = vadd.f32 %v1188, %v1189
        %v1191 = vrsqrt.pop %v1190
        %v1192 = vmul.f32 %v1190, %v1191
        %vm1193 = vcmp.eq.f32.partialorder %v1190, inf
        %v1194 = vsel %vm1193, %v1190, %v1192
        %vm1195 = vcmp.eq.f32.partialorder %v1190, 0.0
        %v1196 = vand.u32 %v1190, 2147483648
        %v1197 = vsel %vm1195, %v1196, %v1194
        %v1198 = vadd.f32 %v1187, %v1197
        %v1199 = vadd.f32 %v1198, 1e-30
        %v1200 = vrcp.pop %v1199
        %v1201 = vmul.f32 %v1199, %v1200
        %v1202 = vsub.f32 2.0, %v1201
        %v1203 = vmul.f32 %v1200, %v1202
        %v1204 = vmul.f32 %v1184, %v1186
        %v1205 = vmul.f32 %v1204, %v1203
        %v1206 = vmul.f32 %v1205, %v1205
        %v1207 = vadd.f32 %v1206, 1.0
        %v1208 = vrsqrt.pop %v1207
        %v1209 = vmul.f32 %v1205, %v1208
        %v1210 = vmul.f32 %v1205, %v1110
        %v1211 = vsub.f32 %v996, %v1210
        %v1212 = vadd.f32 %v1104, %v1210
        %v1213 = vmul.f32 %v1208, %v1107
        %v1214 = vmul.f32 %v1209, 0.0
        %v1215 = vsub.f32 %v1213, %v1214
        %v1216 = vmul.f32 %v1209, %v1107
        %v1217 = vmul.f32 %v1208, 0.0
        %v1218 = vadd.f32 %v1216, %v1217
        %v1219 = vmul.f32 %v1208, %v1008
        %v1220 = vmul.f32 %v1209, %v1116
        %v1221 = vsub.f32 %v1219, %v1220
        %v1222 = vmul.f32 %v1209, %v1008
        %v1223 = vmul.f32 %v1208, %v1116
        %v1224 = vadd.f32 %v1222, %v1223
        %v1225 = vmul.f32 %v1208, %v1014
        %v1226 = vmul.f32 %v1209, %v1122
        %v1227 = vsub.f32 %v1225, %v1226
        %v1228 = vmul.f32 %v1209, %v1014
        %v1229 = vmul.f32 %v1208, %v1122
        %v1230 = vadd.f32 %v1228, %v1229
        %v1231 = vmul.f32 %v1208, %v1020
        %v1232 = vmul.f32 %v1209, %v1128
        %v1233 = vsub.f32 %v1231, %v1232
        %v1234 = vmul.f32 %v1209, %v1020
        %v1235 = vmul.f32 %v1208, %v1128
        %v1236 = vadd.f32 %v1234, %v1235
        %v1237 = vsub.f32 %v1157, %v1049
        %v1238 = vmul.f32 %v1161, 2.0
        %vm1239 = vcmp.ge.f32.partialorder %v1237, 0.0
        %v1240 = vsel %vm1239, 1.0, -1.0
        %v1241 = vand.u32 2147483647, %v1237
        %v1242 = vmul.f32 %v1237, %v1237
        %v1243 = vmul.f32 %v1238, %v1238
        %v1244 = vadd.f32 %v1242, %v1243
        %v1245 = vrsqrt.pop %v1244
        %v1246 = vmul.f32 %v1244, %v1245
        %vm1247 = vcmp.eq.f32.partialorder %v1244, inf
        %v1248 = vsel %vm1247, %v1244, %v1246
        %vm1249 = vcmp.eq.f32.partialorder %v1244, 0.0
        %v1250 = vand.u32 %v1244, 2147483648
        %v1251 = vsel %vm1249, %v1250, %v1248
        %v1252 = vadd.f32 %v1241, %v1251
        %v1253 = vadd.f32 %v1252, 1e-30
        %v1254 = vrcp.pop %v1253
        %v1255 = vmul.f32 %v1253, %v1254
        %v1256 = vsub.f32 2.0, %v1255
        %v1257 = vmul.f32 %v1254, %v1256
        %v1258 = vmul.f32 %v1238, %v1240
        %v1259 = vmul.f32 %v1258, %v1257
        %v1260 = vmul.f32 %v1259, %v1259
        %v1261 = vadd.f32 %v1260, 1.0
        %v1262 = vrsqrt.pop %v1261
        %v1263 = vmul.f32 %v1259, %v1262
        %v1264 = vmul.f32 %v1259, %v1161
        %v1265 = vsub.f32 %v1049, %v1264
        %v1266 = vadd.f32 %v1157, %v1264
        %v1267 = vmul.f32 %v1262, %v1164
        %v1268 = vmul.f32 %v1263, 0.0
        %v1269 = vsub.f32 %v1267, %v1268
        %v1270 = vmul.f32 %v1263, %v1164
        %v1271 = vmul.f32 %v1262, 0.0
        %v1272 = vadd.f32 %v1270, %v1271
        %v1273 = vmul.f32 %v1262, %v1059
        %v1274 = vmul.f32 %v1263, %v1167
        %v1275 = vsub.f32 %v1273, %v1274
        %v1276 = vmul.f32 %v1263, %v1059
        %v1277 = vmul.f32 %v1262, %v1167
        %v1278 = vadd.f32 %v1276, %v1277
        %v1279 = vmul.f32 %v1262, %v1065
        %v1280 = vmul.f32 %v1263, %v1173
        %v1281 = vsub.f32 %v1279, %v1280
        %v1282 = vmul.f32 %v1263, %v1065
        %v1283 = vmul.f32 %v1262, %v1173
        %v1284 = vadd.f32 %v1282, %v1283
        %v1285 = vmul.f32 %v1262, %v1071
        %v1286 = vmul.f32 %v1263, %v1179
        %v1287 = vsub.f32 %v1285, %v1286
        %v1288 = vmul.f32 %v1263, %v1071
        %v1289 = vmul.f32 %v1262, %v1179
        %v1290 = vadd.f32 %v1288, %v1289
        %v1291 = vsub.f32 %v1211, %v1103
        %v1292 = vmul.f32 %v1215, 2.0
        %vm1293 = vcmp.ge.f32.partialorder %v1291, 0.0
        %v1294 = vsel %vm1293, 1.0, -1.0
        %v1295 = vand.u32 2147483647, %v1291
        %v1296 = vmul.f32 %v1291, %v1291
        %v1297 = vmul.f32 %v1292, %v1292
        %v1298 = vadd.f32 %v1296, %v1297
        %v1299 = vrsqrt.pop %v1298
        %v1300 = vmul.f32 %v1298, %v1299
        %vm1301 = vcmp.eq.f32.partialorder %v1298, inf
        %v1302 = vsel %vm1301, %v1298, %v1300
        %vm1303 = vcmp.eq.f32.partialorder %v1298, 0.0
        %v1304 = vand.u32 %v1298, 2147483648
        %v1305 = vsel %vm1303, %v1304, %v1302
        %v1306 = vadd.f32 %v1295, %v1305
        %v1307 = vadd.f32 %v1306, 1e-30
        %v1308 = vrcp.pop %v1307
        %v1309 = vmul.f32 %v1307, %v1308
        %v1310 = vsub.f32 2.0, %v1309
        %v1311 = vmul.f32 %v1308, %v1310
        %v1312 = vmul.f32 %v1292, %v1294
        %v1313 = vmul.f32 %v1312, %v1311
        %v1314 = vmul.f32 %v1313, %v1313
        %v1315 = vadd.f32 %v1314, 1.0
        %v1316 = vrsqrt.pop %v1315
        %v1317 = vmul.f32 %v1313, %v1316
        %v1318 = vmul.f32 %v1313, %v1215
        %v1319 = vsub.f32 %v1103, %v1318
        %v1320 = vadd.f32 %v1211, %v1318
        %v1321 = vmul.f32 %v1316, %v1218
        %v1322 = vmul.f32 %v1317, 0.0
        %v1323 = vsub.f32 %v1321, %v1322
        %v1324 = vmul.f32 %v1317, %v1218
        %v1325 = vmul.f32 %v1316, 0.0
        %v1326 = vadd.f32 %v1324, %v1325
        %v1327 = vmul.f32 %v1316, %v1113
        %v1328 = vmul.f32 %v1317, %v1221
        %v1329 = vsub.f32 %v1327, %v1328
        %v1330 = vmul.f32 %v1317, %v1113
        %v1331 = vmul.f32 %v1316, %v1221
        %v1332 = vadd.f32 %v1330, %v1331
        %v1333 = vmul.f32 %v1316, %v1119
        %v1334 = vmul.f32 %v1317, %v1227
        %v1335 = vsub.f32 %v1333, %v1334
        %v1336 = vmul.f32 %v1317, %v1119
        %v1337 = vmul.f32 %v1316, %v1227
        %v1338 = vadd.f32 %v1336, %v1337
        %v1339 = vmul.f32 %v1316, %v1125
        %v1340 = vmul.f32 %v1317, %v1233
        %v1341 = vsub.f32 %v1339, %v1340
        %v1342 = vmul.f32 %v1317, %v1125
        %v1343 = vmul.f32 %v1316, %v1233
        %v1344 = vadd.f32 %v1342, %v1343
        %v1345 = vsub.f32 %v1158, %v1265
        %v1346 = vmul.f32 %v1269, 2.0
        %vm1347 = vcmp.ge.f32.partialorder %v1345, 0.0
        %v1348 = vsel %vm1347, 1.0, -1.0
        %v1349 = vand.u32 2147483647, %v1345
        %v1350 = vmul.f32 %v1345, %v1345
        %v1351 = vmul.f32 %v1346, %v1346
        %v1352 = vadd.f32 %v1350, %v1351
        %v1353 = vrsqrt.pop %v1352
        %v1354 = vmul.f32 %v1352, %v1353
        %vm1355 = vcmp.eq.f32.partialorder %v1352, inf
        %v1356 = vsel %vm1355, %v1352, %v1354
        %vm1357 = vcmp.eq.f32.partialorder %v1352, 0.0
        %v1358 = vand.u32 %v1352, 2147483648
        %v1359 = vsel %vm1357, %v1358, %v1356
        %v1360 = vadd.f32 %v1349, %v1359
        %v1361 = vadd.f32 %v1360, 1e-30
        %v1362 = vrcp.pop %v1361
        %v1363 = vmul.f32 %v1361, %v1362
        %v1364 = vsub.f32 2.0, %v1363
        %v1365 = vmul.f32 %v1362, %v1364
        %v1366 = vmul.f32 %v1346, %v1348
        %v1367 = vmul.f32 %v1366, %v1365
        %v1368 = vmul.f32 %v1367, %v1367
        %v1369 = vadd.f32 %v1368, 1.0
        %v1370 = vrsqrt.pop %v1369
        %v1371 = vmul.f32 %v1367, %v1370
        %v1372 = vmul.f32 %v1367, %v1269
        %v1373 = vsub.f32 %v1265, %v1372
        %v1374 = vadd.f32 %v1158, %v1372
        %v1375 = vmul.f32 %v1370, 0.0
        %v1376 = vmul.f32 %v1371, %v1272
        %v1377 = vsub.f32 %v1375, %v1376
        %v1378 = vmul.f32 %v1371, 0.0
        %v1379 = vmul.f32 %v1370, %v1272
        %v1380 = vadd.f32 %v1378, %v1379
        %v1381 = vmul.f32 %v1370, %v1275
        %v1382 = vmul.f32 %v1371, %v1170
        %v1383 = vsub.f32 %v1381, %v1382
        %v1384 = vmul.f32 %v1371, %v1275
        %v1385 = vmul.f32 %v1370, %v1170
        %v1386 = vadd.f32 %v1384, %v1385
        %v1387 = vmul.f32 %v1370, %v1281
        %v1388 = vmul.f32 %v1371, %v1176
        %v1389 = vsub.f32 %v1387, %v1388
        %v1390 = vmul.f32 %v1371, %v1281
        %v1391 = vmul.f32 %v1370, %v1176
        %v1392 = vadd.f32 %v1390, %v1391
        %v1393 = vmul.f32 %v1370, %v1287
        %v1394 = vmul.f32 %v1371, %v1182
        %v1395 = vsub.f32 %v1393, %v1394
        %v1396 = vmul.f32 %v1371, %v1287
        %v1397 = vmul.f32 %v1370, %v1182
        %v1398 = vadd.f32 %v1396, %v1397
        %v1399 = vsub.f32 %v1212, %v1319
        %v1400 = vmul.f32 %v1323, 2.0
        %vm1401 = vcmp.ge.f32.partialorder %v1399, 0.0
        %v1402 = vsel %vm1401, 1.0, -1.0
        %v1403 = vand.u32 2147483647, %v1399
        %v1404 = vmul.f32 %v1399, %v1399
        %v1405 = vmul.f32 %v1400, %v1400
        %v1406 = vadd.f32 %v1404, %v1405
        %v1407 = vrsqrt.pop %v1406
        %v1408 = vmul.f32 %v1406, %v1407
        %vm1409 = vcmp.eq.f32.partialorder %v1406, inf
        %v1410 = vsel %vm1409, %v1406, %v1408
        %vm1411 = vcmp.eq.f32.partialorder %v1406, 0.0
        %v1412 = vand.u32 %v1406, 2147483648
        %v1413 = vsel %vm1411, %v1412, %v1410
        %v1414 = vadd.f32 %v1403, %v1413
        %v1415 = vadd.f32 %v1414, 1e-30
        %v1416 = vrcp.pop %v1415
        %v1417 = vmul.f32 %v1415, %v1416
        %v1418 = vsub.f32 2.0, %v1417
        %v1419 = vmul.f32 %v1416, %v1418
        %v1420 = vmul.f32 %v1400, %v1402
        %v1421 = vmul.f32 %v1420, %v1419
        %v1422 = vmul.f32 %v1421, %v1421
        %v1423 = vadd.f32 %v1422, 1.0
        %v1424 = vrsqrt.pop %v1423
        %v1425 = vmul.f32 %v1421, %v1424
        %v1426 = vmul.f32 %v1421, %v1323
        %v1427 = vsub.f32 %v1319, %v1426
        %v1428 = vadd.f32 %v1212, %v1426
        %v1429 = vmul.f32 %v1424, 0.0
        %v1430 = vmul.f32 %v1425, %v1326
        %v1431 = vsub.f32 %v1429, %v1430
        %v1432 = vmul.f32 %v1425, 0.0
        %v1433 = vmul.f32 %v1424, %v1326
        %v1434 = vadd.f32 %v1432, %v1433
        %v1435 = vmul.f32 %v1424, %v1329
        %v1436 = vmul.f32 %v1425, %v1224
        %v1437 = vsub.f32 %v1435, %v1436
        %v1438 = vmul.f32 %v1425, %v1329
        %v1439 = vmul.f32 %v1424, %v1224
        %v1440 = vadd.f32 %v1438, %v1439
        %v1441 = vmul.f32 %v1424, %v1335
        %v1442 = vmul.f32 %v1425, %v1230
        %v1443 = vsub.f32 %v1441, %v1442
        %v1444 = vmul.f32 %v1425, %v1335
        %v1445 = vmul.f32 %v1424, %v1230
        %v1446 = vadd.f32 %v1444, %v1445
        %v1447 = vmul.f32 %v1424, %v1341
        %v1448 = vmul.f32 %v1425, %v1236
        %v1449 = vsub.f32 %v1447, %v1448
        %v1450 = vmul.f32 %v1425, %v1341
        %v1451 = vmul.f32 %v1424, %v1236
        %v1452 = vadd.f32 %v1450, %v1451
        %v1453 = vsub.f32 %v1374, %v1266
        %v1454 = vmul.f32 %v1380, 2.0
        %vm1455 = vcmp.ge.f32.partialorder %v1453, 0.0
        %v1456 = vsel %vm1455, 1.0, -1.0
        %v1457 = vand.u32 2147483647, %v1453
        %v1458 = vmul.f32 %v1453, %v1453
        %v1459 = vmul.f32 %v1454, %v1454
        %v1460 = vadd.f32 %v1458, %v1459
        %v1461 = vrsqrt.pop %v1460
        %v1462 = vmul.f32 %v1460, %v1461
        %vm1463 = vcmp.eq.f32.partialorder %v1460, inf
        %v1464 = vsel %vm1463, %v1460, %v1462
        %vm1465 = vcmp.eq.f32.partialorder %v1460, 0.0
        %v1466 = vand.u32 %v1460, 2147483648
        %v1467 = vsel %vm1465, %v1466, %v1464
        %v1468 = vadd.f32 %v1457, %v1467
        %v1469 = vadd.f32 %v1468, 1e-30
        %v1470 = vrcp.pop %v1469
        %v1471 = vmul.f32 %v1469, %v1470
        %v1472 = vsub.f32 2.0, %v1471
        %v1473 = vmul.f32 %v1470, %v1472
        %v1474 = vmul.f32 %v1454, %v1456
        %v1475 = vmul.f32 %v1474, %v1473
        %v1476 = vmul.f32 %v1475, %v1475
        %v1477 = vadd.f32 %v1476, 1.0
        %v1478 = vrsqrt.pop %v1477
        %v1479 = vmul.f32 %v1475, %v1478
        %v1480 = vmul.f32 %v1475, %v1380
        %v1481 = vsub.f32 %v1266, %v1480
        %v1482 = vadd.f32 %v1374, %v1480
        %v1483 = vmul.f32 %v1478, %v1377
        %v1484 = vmul.f32 %v1479, 0.0
        %v1485 = vsub.f32 %v1483, %v1484
        %v1486 = vmul.f32 %v1479, %v1377
        %v1487 = vmul.f32 %v1478, 0.0
        %v1488 = vadd.f32 %v1486, %v1487
        %v1489 = vmul.f32 %v1478, %v1278
        %v1490 = vmul.f32 %v1479, %v1386
        %v1491 = vsub.f32 %v1489, %v1490
        %v1492 = vmul.f32 %v1479, %v1278
        %v1493 = vmul.f32 %v1478, %v1386
        %v1494 = vadd.f32 %v1492, %v1493
        %v1495 = vmul.f32 %v1478, %v1284
        %v1496 = vmul.f32 %v1479, %v1392
        %v1497 = vsub.f32 %v1495, %v1496
        %v1498 = vmul.f32 %v1479, %v1284
        %v1499 = vmul.f32 %v1478, %v1392
        %v1500 = vadd.f32 %v1498, %v1499
        %v1501 = vmul.f32 %v1478, %v1290
        %v1502 = vmul.f32 %v1479, %v1398
        %v1503 = vsub.f32 %v1501, %v1502
        %v1504 = vmul.f32 %v1479, %v1290
        %v1505 = vmul.f32 %v1478, %v1398
        %v1506 = vadd.f32 %v1504, %v1505
        %v1507 = vsub.f32 %v1428, %v1320
        %v1508 = vmul.f32 %v1434, 2.0
        %vm1509 = vcmp.ge.f32.partialorder %v1507, 0.0
        %v1510 = vsel %vm1509, 1.0, -1.0
        %v1511 = vand.u32 2147483647, %v1507
        %v1512 = vmul.f32 %v1507, %v1507
        %v1513 = vmul.f32 %v1508, %v1508
        %v1514 = vadd.f32 %v1512, %v1513
        %v1515 = vrsqrt.pop %v1514
        %v1516 = vmul.f32 %v1514, %v1515
        %vm1517 = vcmp.eq.f32.partialorder %v1514, inf
        %v1518 = vsel %vm1517, %v1514, %v1516
        %vm1519 = vcmp.eq.f32.partialorder %v1514, 0.0
        %v1520 = vand.u32 %v1514, 2147483648
        %v1521 = vsel %vm1519, %v1520, %v1518
        %v1522 = vadd.f32 %v1511, %v1521
        %v1523 = vadd.f32 %v1522, 1e-30
        %v1524 = vrcp.pop %v1523
        %v1525 = vmul.f32 %v1523, %v1524
        %v1526 = vsub.f32 2.0, %v1525
        %v1527 = vmul.f32 %v1524, %v1526
        %v1528 = vmul.f32 %v1508, %v1510
        %v1529 = vmul.f32 %v1528, %v1527
        %v1530 = vmul.f32 %v1529, %v1529
        %v1531 = vadd.f32 %v1530, 1.0
        %v1532 = vrsqrt.pop %v1531
        %v1533 = vmul.f32 %v1529, %v1532
        %v1534 = vmul.f32 %v1529, %v1434
        %v1535 = vsub.f32 %v1320, %v1534
        %v1536 = vadd.f32 %v1428, %v1534
        %v1537 = vmul.f32 %v1532, %v1431
        %v1538 = vmul.f32 %v1533, 0.0
        %v1539 = vsub.f32 %v1537, %v1538
        %v1540 = vmul.f32 %v1533, %v1431
        %v1541 = vmul.f32 %v1532, 0.0
        %v1542 = vadd.f32 %v1540, %v1541
        %v1543 = vmul.f32 %v1532, %v1332
        %v1544 = vmul.f32 %v1533, %v1440
        %v1545 = vsub.f32 %v1543, %v1544
        %v1546 = vmul.f32 %v1533, %v1332
        %v1547 = vmul.f32 %v1532, %v1440
        %v1548 = vadd.f32 %v1546, %v1547
        %v1549 = vmul.f32 %v1532, %v1338
        %v1550 = vmul.f32 %v1533, %v1446
        %v1551 = vsub.f32 %v1549, %v1550
        %v1552 = vmul.f32 %v1533, %v1338
        %v1553 = vmul.f32 %v1532, %v1446
        %v1554 = vadd.f32 %v1552, %v1553
        %v1555 = vmul.f32 %v1532, %v1344
        %v1556 = vmul.f32 %v1533, %v1452
        %v1557 = vsub.f32 %v1555, %v1556
        %v1558 = vmul.f32 %v1533, %v1344
        %v1559 = vmul.f32 %v1532, %v1452
        %v1560 = vadd.f32 %v1558, %v1559
        %v1561 = vsub.f32 %v1481, %v1373
        %v1562 = vmul.f32 %v1485, 2.0
        %vm1563 = vcmp.ge.f32.partialorder %v1561, 0.0
        %v1564 = vsel %vm1563, 1.0, -1.0
        %v1565 = vand.u32 2147483647, %v1561
        %v1566 = vmul.f32 %v1561, %v1561
        %v1567 = vmul.f32 %v1562, %v1562
        %v1568 = vadd.f32 %v1566, %v1567
        %v1569 = vrsqrt.pop %v1568
        %v1570 = vmul.f32 %v1568, %v1569
        %vm1571 = vcmp.eq.f32.partialorder %v1568, inf
        %v1572 = vsel %vm1571, %v1568, %v1570
        %vm1573 = vcmp.eq.f32.partialorder %v1568, 0.0
        %v1574 = vand.u32 %v1568, 2147483648
        %v1575 = vsel %vm1573, %v1574, %v1572
        %v1576 = vadd.f32 %v1565, %v1575
        %v1577 = vadd.f32 %v1576, 1e-30
        %v1578 = vrcp.pop %v1577
        %v1579 = vmul.f32 %v1577, %v1578
        %v1580 = vsub.f32 2.0, %v1579
        %v1581 = vmul.f32 %v1578, %v1580
        %v1582 = vmul.f32 %v1562, %v1564
        %v1583 = vmul.f32 %v1582, %v1581
        %v1584 = vmul.f32 %v1583, %v1583
        %v1585 = vadd.f32 %v1584, 1.0
        %v1586 = vrsqrt.pop %v1585
        %v1587 = vmul.f32 %v1583, %v1586
        %v1588 = vmul.f32 %v1583, %v1485
        %v1589 = vsub.f32 %v1373, %v1588
        %v1590 = vadd.f32 %v1481, %v1588
        %v1591 = vmul.f32 %v1586, %v1488
        %v1592 = vmul.f32 %v1587, 0.0
        %v1593 = vsub.f32 %v1591, %v1592
        %v1594 = vmul.f32 %v1587, %v1488
        %v1595 = vmul.f32 %v1586, 0.0
        %v1596 = vadd.f32 %v1594, %v1595
        %v1597 = vmul.f32 %v1586, %v1383
        %v1598 = vmul.f32 %v1587, %v1491
        %v1599 = vsub.f32 %v1597, %v1598
        %v1600 = vmul.f32 %v1587, %v1383
        %v1601 = vmul.f32 %v1586, %v1491
        %v1602 = vadd.f32 %v1600, %v1601
        %v1603 = vmul.f32 %v1586, %v1389
        %v1604 = vmul.f32 %v1587, %v1497
        %v1605 = vsub.f32 %v1603, %v1604
        %v1606 = vmul.f32 %v1587, %v1389
        %v1607 = vmul.f32 %v1586, %v1497
        %v1608 = vadd.f32 %v1606, %v1607
        %v1609 = vmul.f32 %v1586, %v1395
        %v1610 = vmul.f32 %v1587, %v1503
        %v1611 = vsub.f32 %v1609, %v1610
        %v1612 = vmul.f32 %v1587, %v1395
        %v1613 = vmul.f32 %v1586, %v1503
        %v1614 = vadd.f32 %v1612, %v1613
        %v1615 = vsub.f32 %v1535, %v1427
        %v1616 = vmul.f32 %v1539, 2.0
        %vm1617 = vcmp.ge.f32.partialorder %v1615, 0.0
        %v1618 = vsel %vm1617, 1.0, -1.0
        %v1619 = vand.u32 2147483647, %v1615
        %v1620 = vmul.f32 %v1615, %v1615
        %v1621 = vmul.f32 %v1616, %v1616
        %v1622 = vadd.f32 %v1620, %v1621
        %v1623 = vrsqrt.pop %v1622
        %v1624 = vmul.f32 %v1622, %v1623
        %vm1625 = vcmp.eq.f32.partialorder %v1622, inf
        %v1626 = vsel %vm1625, %v1622, %v1624
        %vm1627 = vcmp.eq.f32.partialorder %v1622, 0.0
        %v1628 = vand.u32 %v1622, 2147483648
        %v1629 = vsel %vm1627, %v1628, %v1626
        %v1630 = vadd.f32 %v1619, %v1629
        %v1631 = vadd.f32 %v1630, 1e-30
        %v1632 = vrcp.pop %v1631
        %v1633 = vmul.f32 %v1631, %v1632
        %v1634 = vsub.f32 2.0, %v1633
        %v1635 = vmul.f32 %v1632, %v1634
        %v1636 = vmul.f32 %v1616, %v1618
        %v1637 = vmul.f32 %v1636, %v1635
        %v1638 = vmul.f32 %v1637, %v1637
        %v1639 = vadd.f32 %v1638, 1.0
        %v1640 = vrsqrt.pop %v1639
        %v1641 = vmul.f32 %v1637, %v1640
        %v1642 = vmul.f32 %v1637, %v1539
        %v1643 = vsub.f32 %v1427, %v1642
        %v1644 = vadd.f32 %v1535, %v1642
        %v1645 = vmul.f32 %v1640, %v1542
        %v1646 = vmul.f32 %v1641, 0.0
        %v1647 = vsub.f32 %v1645, %v1646
        %v1648 = vmul.f32 %v1641, %v1542
        %v1649 = vmul.f32 %v1640, 0.0
        %v1650 = vadd.f32 %v1648, %v1649
        %v1651 = vmul.f32 %v1640, %v1437
        %v1652 = vmul.f32 %v1641, %v1545
        %v1653 = vsub.f32 %v1651, %v1652
        %v1654 = vmul.f32 %v1641, %v1437
        %v1655 = vmul.f32 %v1640, %v1545
        %v1656 = vadd.f32 %v1654, %v1655
        %v1657 = vmul.f32 %v1640, %v1443
        %v1658 = vmul.f32 %v1641, %v1551
        %v1659 = vsub.f32 %v1657, %v1658
        %v1660 = vmul.f32 %v1641, %v1443
        %v1661 = vmul.f32 %v1640, %v1551
        %v1662 = vadd.f32 %v1660, %v1661
        %v1663 = vmul.f32 %v1640, %v1449
        %v1664 = vmul.f32 %v1641, %v1557
        %v1665 = vsub.f32 %v1663, %v1664
        %v1666 = vmul.f32 %v1641, %v1449
        %v1667 = vmul.f32 %v1640, %v1557
        %v1668 = vadd.f32 %v1666, %v1667
        %v1669 = vsub.f32 %v1482, %v1589
        %v1670 = vmul.f32 %v1593, 2.0
        %vm1671 = vcmp.ge.f32.partialorder %v1669, 0.0
        %v1672 = vsel %vm1671, 1.0, -1.0
        %v1673 = vand.u32 2147483647, %v1669
        %v1674 = vmul.f32 %v1669, %v1669
        %v1675 = vmul.f32 %v1670, %v1670
        %v1676 = vadd.f32 %v1674, %v1675
        %v1677 = vrsqrt.pop %v1676
        %v1678 = vmul.f32 %v1676, %v1677
        %vm1679 = vcmp.eq.f32.partialorder %v1676, inf
        %v1680 = vsel %vm1679, %v1676, %v1678
        %vm1681 = vcmp.eq.f32.partialorder %v1676, 0.0
        %v1682 = vand.u32 %v1676, 2147483648
        %v1683 = vsel %vm1681, %v1682, %v1680
        %v1684 = vadd.f32 %v1673, %v1683
        %v1685 = vadd.f32 %v1684, 1e-30
        %v1686 = vrcp.pop %v1685
        %v1687 = vmul.f32 %v1685, %v1686
        %v1688 = vsub.f32 2.0, %v1687
        %v1689 = vmul.f32 %v1686, %v1688
        %v1690 = vmul.f32 %v1670, %v1672
        %v1691 = vmul.f32 %v1690, %v1689
        %v1692 = vmul.f32 %v1691, %v1691
        %v1693 = vadd.f32 %v1692, 1.0
        %v1694 = vrsqrt.pop %v1693
        %v1695 = vmul.f32 %v1691, %v1694
        %v1696 = vmul.f32 %v1691, %v1593
        %v1697 = vsub.f32 %v1589, %v1696
        %v1698 = vadd.f32 %v1482, %v1696
        %v1699 = vmul.f32 %v1695, 0.0
        %v1700 = vmul.f32 %v1694, %v1596
        %v1701 = vadd.f32 %v1699, %v1700
        %v1702 = vmul.f32 %v1694, %v1599
        %v1703 = vmul.f32 %v1695, %v1494
        %v1704 = vsub.f32 %v1702, %v1703
        %v1705 = vmul.f32 %v1695, %v1599
        %v1706 = vmul.f32 %v1694, %v1494
        %v1707 = vadd.f32 %v1705, %v1706
        %v1708 = vmul.f32 %v1694, %v1605
        %v1709 = vmul.f32 %v1695, %v1500
        %v1710 = vsub.f32 %v1708, %v1709
        %v1711 = vmul.f32 %v1695, %v1605
        %v1712 = vmul.f32 %v1694, %v1500
        %v1713 = vadd.f32 %v1711, %v1712
        %v1714 = vmul.f32 %v1694, %v1611
        %v1715 = vmul.f32 %v1695, %v1506
        %v1716 = vsub.f32 %v1714, %v1715
        %v1717 = vmul.f32 %v1695, %v1611
        %v1718 = vmul.f32 %v1694, %v1506
        %v1719 = vadd.f32 %v1717, %v1718
        %v1720 = vsub.f32 %v1536, %v1643
        %v1721 = vmul.f32 %v1647, 2.0
        %vm1722 = vcmp.ge.f32.partialorder %v1720, 0.0
        %v1723 = vsel %vm1722, 1.0, -1.0
        %v1724 = vand.u32 2147483647, %v1720
        %v1725 = vmul.f32 %v1720, %v1720
        %v1726 = vmul.f32 %v1721, %v1721
        %v1727 = vadd.f32 %v1725, %v1726
        %v1728 = vrsqrt.pop %v1727
        %v1729 = vmul.f32 %v1727, %v1728
        %vm1730 = vcmp.eq.f32.partialorder %v1727, inf
        %v1731 = vsel %vm1730, %v1727, %v1729
        %vm1732 = vcmp.eq.f32.partialorder %v1727, 0.0
        %v1733 = vand.u32 %v1727, 2147483648
        %v1734 = vsel %vm1732, %v1733, %v1731
        %v1735 = vadd.f32 %v1724, %v1734
        %v1736 = vadd.f32 %v1735, 1e-30
        %v1737 = vrcp.pop %v1736
        %v1738 = vmul.f32 %v1736, %v1737
        %v1739 = vsub.f32 2.0, %v1738
        %v1740 = vmul.f32 %v1737, %v1739
        %v1741 = vmul.f32 %v1721, %v1723
        %v1742 = vmul.f32 %v1741, %v1740
        %v1743 = vmul.f32 %v1742, %v1742
        %v1744 = vadd.f32 %v1743, 1.0
        %v1745 = vrsqrt.pop %v1744
        %v1746 = vmul.f32 %v1742, %v1745
        %v1747 = vmul.f32 %v1742, %v1647
        %v1748 = vsub.f32 %v1643, %v1747
        %v1749 = vadd.f32 %v1536, %v1747
        %v1750 = vmul.f32 %v1746, 0.0
        %v1751 = vmul.f32 %v1745, %v1650
        %v1752 = vadd.f32 %v1750, %v1751
        %v1753 = vmul.f32 %v1745, %v1653
        %v1754 = vmul.f32 %v1746, %v1548
        %v1755 = vsub.f32 %v1753, %v1754
        %v1756 = vmul.f32 %v1746, %v1653
        %v1757 = vmul.f32 %v1745, %v1548
        %v1758 = vadd.f32 %v1756, %v1757
        %v1759 = vmul.f32 %v1745, %v1659
        %v1760 = vmul.f32 %v1746, %v1554
        %v1761 = vsub.f32 %v1759, %v1760
        %v1762 = vmul.f32 %v1746, %v1659
        %v1763 = vmul.f32 %v1745, %v1554
        %v1764 = vadd.f32 %v1762, %v1763
        %v1765 = vmul.f32 %v1745, %v1665
        %v1766 = vmul.f32 %v1746, %v1560
        %v1767 = vsub.f32 %v1765, %v1766
        %v1768 = vmul.f32 %v1746, %v1665
        %v1769 = vmul.f32 %v1745, %v1560
        %v1770 = vadd.f32 %v1768, %v1769
        %v1771 = vsub.f32 %v1698, %v1590
        %v1772 = vmul.f32 %v1701, 2.0
        %vm1773 = vcmp.ge.f32.partialorder %v1771, 0.0
        %v1774 = vsel %vm1773, 1.0, -1.0
        %v1775 = vand.u32 2147483647, %v1771
        %v1776 = vmul.f32 %v1771, %v1771
        %v1777 = vmul.f32 %v1772, %v1772
        %v1778 = vadd.f32 %v1776, %v1777
        %v1779 = vrsqrt.pop %v1778
        %v1780 = vmul.f32 %v1778, %v1779
        %vm1781 = vcmp.eq.f32.partialorder %v1778, inf
        %v1782 = vsel %vm1781, %v1778, %v1780
        %vm1783 = vcmp.eq.f32.partialorder %v1778, 0.0
        %v1784 = vand.u32 %v1778, 2147483648
        %v1785 = vsel %vm1783, %v1784, %v1782
        %v1786 = vadd.f32 %v1775, %v1785
        %v1787 = vadd.f32 %v1786, 1e-30
        %v1788 = vrcp.pop %v1787
        %v1789 = vmul.f32 %v1787, %v1788
        %v1790 = vsub.f32 2.0, %v1789
        %v1791 = vmul.f32 %v1788, %v1790
        %v1792 = vmul.f32 %v1772, %v1774
        %v1793 = vmul.f32 %v1792, %v1791
        %v1794 = vmul.f32 %v1793, %v1793
        %v1795 = vadd.f32 %v1794, 1.0
        %v1796 = vrsqrt.pop %v1795
        %v1797 = vmul.f32 %v1793, %v1796
        %v1798 = vmul.f32 %v1793, %v1701
        %v1799 = vsub.f32 %v1590, %v1798
        %v1800 = vadd.f32 %v1698, %v1798
        %v1801 = vmul.f32 %v1796, %v1602
        %v1802 = vmul.f32 %v1797, %v1707
        %v1803 = vsub.f32 %v1801, %v1802
        %v1804 = vmul.f32 %v1797, %v1602
        %v1805 = vmul.f32 %v1796, %v1707
        %v1806 = vadd.f32 %v1804, %v1805
        %v1807 = vmul.f32 %v1796, %v1608
        %v1808 = vmul.f32 %v1797, %v1713
        %v1809 = vsub.f32 %v1807, %v1808
        %v1810 = vmul.f32 %v1797, %v1608
        %v1811 = vmul.f32 %v1796, %v1713
        %v1812 = vadd.f32 %v1810, %v1811
        %v1813 = vmul.f32 %v1796, %v1614
        %v1814 = vmul.f32 %v1797, %v1719
        %v1815 = vsub.f32 %v1813, %v1814
        %v1816 = vmul.f32 %v1797, %v1614
        %v1817 = vmul.f32 %v1796, %v1719
        %v1818 = vadd.f32 %v1816, %v1817
        %v1819 = vsub.f32 %v1749, %v1644
        %v1820 = vmul.f32 %v1752, 2.0
        %vm1821 = vcmp.ge.f32.partialorder %v1819, 0.0
        %v1822 = vsel %vm1821, 1.0, -1.0
        %v1823 = vand.u32 2147483647, %v1819
        %v1824 = vmul.f32 %v1819, %v1819
        %v1825 = vmul.f32 %v1820, %v1820
        %v1826 = vadd.f32 %v1824, %v1825
        %v1827 = vrsqrt.pop %v1826
        %v1828 = vmul.f32 %v1826, %v1827
        %vm1829 = vcmp.eq.f32.partialorder %v1826, inf
        %v1830 = vsel %vm1829, %v1826, %v1828
        %vm1831 = vcmp.eq.f32.partialorder %v1826, 0.0
        %v1832 = vand.u32 %v1826, 2147483648
        %v1833 = vsel %vm1831, %v1832, %v1830
        %v1834 = vadd.f32 %v1823, %v1833
        %v1835 = vadd.f32 %v1834, 1e-30
        %v1836 = vrcp.pop %v1835
        %v1837 = vmul.f32 %v1835, %v1836
        %v1838 = vsub.f32 2.0, %v1837
        %v1839 = vmul.f32 %v1836, %v1838
        %v1840 = vmul.f32 %v1820, %v1822
        %v1841 = vmul.f32 %v1840, %v1839
        %v1842 = vmul.f32 %v1841, %v1841
        %v1843 = vadd.f32 %v1842, 1.0
        %v1844 = vrsqrt.pop %v1843
        %v1845 = vmul.f32 %v1841, %v1844
        %v1846 = vmul.f32 %v1841, %v1752
        %v1847 = vsub.f32 %v1644, %v1846
        %v1848 = vadd.f32 %v1749, %v1846
        %v1849 = vmul.f32 %v1844, %v1656
        %v1850 = vmul.f32 %v1845, %v1758
        %v1851 = vsub.f32 %v1849, %v1850
        %v1852 = vmul.f32 %v1845, %v1656
        %v1853 = vmul.f32 %v1844, %v1758
        %v1854 = vadd.f32 %v1852, %v1853
        %v1855 = vmul.f32 %v1844, %v1662
        %v1856 = vmul.f32 %v1845, %v1764
        %v1857 = vsub.f32 %v1855, %v1856
        %v1858 = vmul.f32 %v1845, %v1662
        %v1859 = vmul.f32 %v1844, %v1764
        %v1860 = vadd.f32 %v1858, %v1859
        %v1861 = vmul.f32 %v1844, %v1668
        %v1862 = vmul.f32 %v1845, %v1770
        %v1863 = vsub.f32 %v1861, %v1862
        %v1864 = vmul.f32 %v1845, %v1668
        %v1865 = vmul.f32 %v1844, %v1770
        %v1866 = vadd.f32 %v1864, %v1865
        %v1867 = vadd.f32 %v1697, %v1799
        %v1868 = vadd.f32 %v1867, %v1800
        %v1869 = vand.u32 2147483647, %v1868
        %v1870 = vmul.f32 %v1869, 1e-07
        %v1871 = vadd.f32 %v1870, 1e-37
        %v1872 = vmax.f32 %v1697, %v1871
        %v1873 = vlog2.pop %v1872
        %v1874 = vmul.f32 %v1873, 0.6931472
        %v1875 = vmax.f32 %v1799, %v1871
        %v1876 = vlog2.pop %v1875
        %v1877 = vmul.f32 %v1876, 0.6931472
        %v1878 = vmax.f32 %v1800, %v1871
        %v1879 = vlog2.pop %v1878
        %v1880 = vmul.f32 %v1879, 0.6931472
        %v1881 = vmul.f32 %v1704, %v1874
        %v1882 = vmul.f32 %v1803, %v1877
        %v1883 = vmul.f32 %v1806, %v1880
        %v1884 = vmul.f32 %v1710, %v1874
        %v1885 = vmul.f32 %v1809, %v1877
        %v1886 = vmul.f32 %v1812, %v1880
        %v1887 = vmul.f32 %v1716, %v1874
        %v1888 = vmul.f32 %v1815, %v1877
        %v1889 = vmul.f32 %v1818, %v1880
        %v1890 = vmul.f32 %v1881, %v1704
        %v1891 = vmul.f32 %v1882, %v1803
        %v1892 = vadd.f32 %v1890, %v1891
        %v1893 = vmul.f32 %v1883, %v1806
        %v1894 = vadd.f32 %v1892, %v1893
        %v1895 = vmul.f32 %v1881, %v1710
        %v1896 = vmul.f32 %v1882, %v1809
        %v1897 = vadd.f32 %v1895, %v1896
        %v1898 = vmul.f32 %v1883, %v1812
        %v1899 = vadd.f32 %v1897, %v1898
        %v1900 = vmul.f32 %v1881, %v1716
        %v1901 = vmul.f32 %v1882, %v1815
        %v1902 = vadd.f32 %v1900, %v1901
        %v1903 = vmul.f32 %v1883, %v1818
        %v1904 = vadd.f32 %v1902, %v1903
        %v1905 = vmul.f32 %v1884, %v1710
        %v1906 = vmul.f32 %v1885, %v1809
        %v1907 = vadd.f32 %v1905, %v1906
        %v1908 = vmul.f32 %v1886, %v1812
        %v1909 = vadd.f32 %v1907, %v1908
        %v1910 = vmul.f32 %v1884, %v1716
        %v1911 = vmul.f32 %v1885, %v1815
        %v1912 = vadd.f32 %v1910, %v1911
        %v1913 = vmul.f32 %v1886, %v1818
        %v1914 = vadd.f32 %v1912, %v1913
        %v1915 = vmul.f32 %v1887, %v1716
        %v1916 = vmul.f32 %v1888, %v1815
        %v1917 = vadd.f32 %v1915, %v1916
        %v1918 = vmul.f32 %v1889, %v1818
        %v1919 = vadd.f32 %v1917, %v1918
        %v1920 = vadd.f32 %v1748, %v1847
        %v1921 = vadd.f32 %v1920, %v1848
        %v1922 = vand.u32 2147483647, %v1921
        %v1923 = vmul.f32 %v1922, 1e-07
        %v1924 = vadd.f32 %v1923, 1e-37
        %v1925 = vmax.f32 %v1748, %v1924
        %v1926 = vlog2.pop %v1925
        %v1927 = vmul.f32 %v1926, 0.6931472
        %v1928 = vmax.f32 %v1847, %v1924
        %v1929 = vlog2.pop %v1928
        %v1930 = vmul.f32 %v1929, 0.6931472
        %v1931 = vmax.f32 %v1848, %v1924
        %v1932 = vlog2.pop %v1931
        %v1933 = vmul.f32 %v1932, 0.6931472
        %v1934 = vmul.f32 %v1755, %v1927
        %v1935 = vmul.f32 %v1851, %v1930
        %v1936 = vmul.f32 %v1854, %v1933
        %v1937 = vmul.f32 %v1761, %v1927
        %v1938 = vmul.f32 %v1857, %v1930
        %v1939 = vmul.f32 %v1860, %v1933
        %v1940 = vmul.f32 %v1767, %v1927
        %v1941 = vmul.f32 %v1863, %v1930
        %v1942 = vmul.f32 %v1866, %v1933
        %v1943 = vmul.f32 %v1934, %v1755
        %v1944 = vmul.f32 %v1935, %v1851
        %v1945 = vadd.f32 %v1943, %v1944
        %v1946 = vmul.f32 %v1936, %v1854
        %v1947 = vadd.f32 %v1945, %v1946
        %v1948 = vmul.f32 %v1934, %v1761
        %v1949 = vmul.f32 %v1935, %v1857
        %v1950 = vadd.f32 %v1948, %v1949
        %v1951 = vmul.f32 %v1936, %v1860
        %v1952 = vadd.f32 %v1950, %v1951
        %v1953 = vmul.f32 %v1934, %v1767
        %v1954 = vmul.f32 %v1935, %v1863
        %v1955 = vadd.f32 %v1953, %v1954
        %v1956 = vmul.f32 %v1936, %v1866
        %v1957 = vadd.f32 %v1955, %v1956
        %v1958 = vmul.f32 %v1937, %v1761
        %v1959 = vmul.f32 %v1938, %v1857
        %v1960 = vadd.f32 %v1958, %v1959
        %v1961 = vmul.f32 %v1939, %v1860
        %v1962 = vadd.f32 %v1960, %v1961
        %v1963 = vmul.f32 %v1937, %v1767
        %v1964 = vmul.f32 %v1938, %v1863
        %v1965 = vadd.f32 %v1963, %v1964
        %v1966 = vmul.f32 %v1939, %v1866
        %v1967 = vadd.f32 %v1965, %v1966
        %v1968 = vmul.f32 %v1940, %v1767
        %v1969 = vmul.f32 %v1941, %v1863
        %v1970 = vadd.f32 %v1968, %v1969
        %v1971 = vmul.f32 %v1942, %v1866
        %v1972 = vadd.f32 %v1970, %v1971
        %v1973 = vsub.f32 %v1894, %v1947
        %v1974 = vmul.f32 %v1973, %v1973
        %v1975 = vadd.f32 %v1974, 0.0
        %v1976 = vsub.f32 %v1899, %v1952
        %v1977 = vmul.f32 %v1976, %v1976
        %v1978 = vmul.f32 %v1977, 2.0
        %v1979 = vadd.f32 %v1975, %v1978
        %v1980 = vsub.f32 %v1904, %v1957
        %v1981 = vmul.f32 %v1980, %v1980
        %v1982 = vmul.f32 %v1981, 2.0
        %v1983 = vadd.f32 %v1979, %v1982
        %v1984 = vsub.f32 %v1909, %v1962
        %v1985 = vmul.f32 %v1984, %v1984
        %v1986 = vadd.f32 %v1983, %v1985
        %v1987 = vsub.f32 %v1914, %v1967
        %v1988 = vmul.f32 %v1987, %v1987
        %v1989 = vmul.f32 %v1988, 2.0
        %v1990 = vadd.f32 %v1986, %v1989
        %v1991 = vsub.f32 %v1919, %v1972
        %v1992 = vmul.f32 %v1991, %v1991
        %v1993 = vadd.f32 %v1990, %v1992
        %1994 = vst [vmem:[%s269] sm:$0xff] %v1993
        %p1995 = scmp.lt.s32.totalorder %s13, 1
        %s1996 = scalar_select %p1995, %s13, 1
        %s1997 = smul.addr %s1996, 8
        %s1998 = scalar_lea.vmem %s2, %s1997
        // Predicated region
        $region105: #{le_mse.1} parent=95 // pred_check
          %p1999 = pneg %p83
        $region106: #{le_mse.1} parent=95 // pred_check_branch
          %2001 = sbr.rel (%p1999) target = $region108
        $region107: #{le_mse.1} parent=95 // pred_region
          _
        $region108: #{le_mse.1} parent=95 // pred_fallthru
          _
      $region96: #{le_mse.1} parent=5 // pred_fallthru
        _
      %p2002 = scmp.le.s32.totalorder 2, %s8
      // Predicated region
      $region109: #{le_mse.1} parent=5 // pred_check
        %p2003 = pneg %p2002
      $region110: #{le_mse.1} parent=5 // pred_check_branch
        %2005 = sbr.rel (%p2003) target = $region112
      $region111: #{le_mse.1} parent=5 // pred_region
        %s2006 = ssub.s32 %s8, 2
        // Predicated region
        $region113: #{le_mse.1} parent=111 // pred_check
          %p2007 = pneg %p89
        $region114: #{le_mse.1} parent=111 // pred_check_branch
          %2009 = sbr.rel (%p2007) target = $region116
        $region115: #{le_mse.1} parent=111 // pred_region
          %p2010 = scmp.lt.s32.totalorder %s14, 1
          %s2011 = scalar_select %p2010, %s14, 1
          %s2012 = smul.addr %s2011, 8
          %s2013 = scalar_lea.vmem %s2, %s2012
        $region116: #{le_mse.1} parent=111 // pred_fallthru
          _
      $region112: #{le_mse.1} parent=5 // pred_fallthru
        _
    $region6: #{le_mse.1} parent=1 // loop_footer
      %s12 = sadd.s32 1, %s8
    $region7: #{le_mse.1} parent=1 // loop_footer_branch
      %7 = sbr.rel target = $region3
    $region8: #{le_mse.1} parent=1 // loop_exit
      _

</llo_original>
